<compile_context>
chip_gen: v7x
topology: tpu7x:2x2x1
jax: 0.10.0
libtpu: 0.0.40
codegen_flags: <defaults>
</compile_context>

<pallas_src>
import functools

import jax
import jax.numpy as jnp
from jax import lax
from jax.experimental import pallas as pl
from jax.experimental.pallas import tpu as pltpu

EPS = 1e-5                  # nn.BatchNorm2d default eps
LANES = 128                 # conv2 output channels padded to this (lane-dense)
SUBLANES_BF16 = 16          # bf16 packing multiple for contraction / y1 width


def _round_up(x, m):
    return (x + m - 1) // m * m


def _nbytes(shape, dtype):
    size = 1
    for s in shape:
        size *= int(s)
    return size * jnp.dtype(dtype).itemsize


def _vmem_limit(block_bytes, scratch_bytes=0):
    """Scoped-VMEM request derived from the actual (double-buffered) blocks,
    clamped to a range safe on v5e/v6e (128 MiB) and v7x (64 MiB per TC)."""
    need = 2 * sum(block_bytes) + scratch_bytes + (16 << 20)
    return int(min(max(need, 32 << 20), 48 << 20))


def _pick_batch_tile(n, m_img, target_rows=2048):
    """Images per grid step: ~target_rows output rows per step, >=2 grid steps
    when possible (so the BlockSpec pipeline overlaps DMA/compute), bt | n."""
    bt = max(1, min(n, target_rows // max(1, m_img)))
    if n >= 2:
        bt = min(bt, max(1, n // 2))
    while n % bt:
        bt -= 1
    return bt


# ---------------------------------------------------------------------------
# Stage 1: conv1 (3x3, stride via channel-packed phases) + BN1 sum / sumsq
# ---------------------------------------------------------------------------
def _conv1_stats_kernel(xph_ref, w_ref, y_ref, ysum_ref, ysq_ref, *,
                        stride, ho, wo, bt, cin):
    """xph_ref: (bt, hph, wph, s*s*cin) bf16  padded, phase-packed input
       w_ref  : (3, 3, cin, ck) bf16          Cout zero-padded to ck
       y_ref  : (bt, ho*wo, ck) bf16          pre-BN conv1 output tile
       ysum_ref, ysq_ref: (1, ck) f32         resident accumulators"""
    @pl.when(pl.program_id(0) == 0)
    def _init():
        ysum_ref[...] = jnp.zeros(ysum_ref.shape, ysum_ref.dtype)
        ysq_ref[...] = jnp.zeros(ysq_ref.shape, ysq_ref.dtype)

    m = bt * ho * wo
    acc = None
    for ki in range(3):
        for kj in range(3):
            ph = (ki % stride) * stride + (kj % stride)   # stride phase
            di, dj = ki // stride, kj // stride           # unit-stride offset
            slab = xph_ref[:, di:di + ho, dj:dj + wo,
                           ph * cin:(ph + 1) * cin]       # (bt, ho, wo, cin)
            tap = jnp.dot(slab.reshape(m, cin), w_ref[ki, kj],
                          preferred_element_type=jnp.float32)
            acc = tap if acc is None else acc + tap       # value accumulation

    y_ref[...] = acc.reshape(bt, ho * wo, acc.shape[-1]).astype(y_ref.dtype)
    ysum_ref[...] += jnp.sum(acc, axis=0, keepdims=True)
    ysq_ref[...] += jnp.sum(acc * acc, axis=0, keepdims=True)


def _conv1_stats(x_nhwc, w1, *, stride, ho, wo, bt):
    n, h, w, cin = x_nhwc.shape
    ck = w1.shape[-1]
    s2 = stride * stride
    m_img = ho * wo

    # Spatial zero-pad (padding=1); make padded H/W divisible by stride so the
    # stride phases have equal shapes (extra zero rows/cols are never read).
    pad_h = (-(h + 2)) % stride
    pad_w = (-(w + 2)) % stride
    xp = jnp.pad(x_nhwc.astype(jnp.bfloat16),
                 ((0, 0), (1, 1 + pad_h), (1, 1 + pad_w), (0, 0)))
    # Phases packed along channels -> every in-kernel tap slice is unit-stride.
    xph = jnp.concatenate(
        [xp[:, p::stride, q::stride, :]
         for p in range(stride) for q in range(stride)], axis=-1)
    _, hph, wph, _ = xph.shape

    blocks = [_nbytes((bt, hph, wph, s2 * cin), jnp.bfloat16),
              _nbytes(w1.shape, jnp.bfloat16),
              _nbytes((bt, m_img, ck), jnp.bfloat16),
              2 * _nbytes((1, ck), jnp.float32)]
    kernel = functools.partial(_conv1_stats_kernel, stride=stride, ho=ho, wo=wo,
                               bt=bt, cin=cin)
    return pl.pallas_call(
        kernel,
        out_shape=(jax.ShapeDtypeStruct((n, m_img, ck), jnp.bfloat16),
                   jax.ShapeDtypeStruct((1, ck), jnp.float32),
                   jax.ShapeDtypeStruct((1, ck), jnp.float32)),
        grid=(n // bt,),
        in_specs=[pl.BlockSpec((bt, hph, wph, s2 * cin), lambda i: (i, 0, 0, 0)),
                  pl.BlockSpec(w1.shape, lambda i: (0, 0, 0, 0))],
        out_specs=(pl.BlockSpec((bt, m_img, ck), lambda i: (i, 0, 0)),
                   pl.BlockSpec((1, ck), lambda i: (0, 0)),
                   pl.BlockSpec((1, ck), lambda i: (0, 0))),
        compiler_params=pltpu.CompilerParams(
            dimension_semantics=("arbitrary",),   # resident BN-stat accumulators
            vmem_limit_bytes=_vmem_limit(blocks)),
    )(xph, w1)


# ---------------------------------------------------------------------------
# Stage 2: fused BN1 affine + ReLU -> 3x3 conv2 (stride 1) + BN2 sum / sumsq
# ---------------------------------------------------------------------------
def _bn1relu_conv2_stats_kernel(y1_ref, sc1_ref, sh1_ref, w_ref,
                                y2_ref, ysum_ref, ysq_ref, xpad_ref, *,
                                ho, wo, bt, ck):
    """y1_ref : (bt, ho*wo, ck) bf16   sc1/sh1: (1, ck) f32
       w_ref  : (3, 3, ck, cp)  bf16
       y2_ref : (bt, ho*wo, cp) bf16   ysum/ysq: (1, cp) f32 resident
       xpad_ref: (bt, ho+2, wo+2, ck) bf16 scratch (zero halo)"""
    @pl.when(pl.program_id(0) == 0)
    def _init():
        ysum_ref[...] = jnp.zeros(ysum_ref.shape, ysum_ref.dtype)
        ysq_ref[...] = jnp.zeros(ysq_ref.shape, ysq_ref.dtype)

    m = bt * ho * wo
    # BN1 + ReLU fused here: the normalized activation never touches HBM.
    a = y1_ref[...].astype(jnp.float32) * sc1_ref[...].reshape(1, 1, ck) \
        + sh1_ref[...].reshape(1, 1, ck)
    a = jnp.maximum(a, 0.0).astype(jnp.bfloat16)

    # Zero-padded spatial halo in VMEM so every tap slab is a plain slice.
    xpad_ref[...] = jnp.zeros(xpad_ref.shape, xpad_ref.dtype)
    xpad_ref[:, 1:1 + ho, 1:1 + wo, :] = a.reshape(bt, ho, wo, ck)

    acc = None
    for ki in range(3):
        for kj in range(3):
            slab = xpad_ref[:, ki:ki + ho, kj:kj + wo, :]   # (bt, ho, wo, ck)
            tap = jnp.dot(slab.reshape(m, ck), w_ref[ki, kj],
                          preferred_element_type=jnp.float32)
            acc = tap if acc is None else acc + tap

    y2_ref[...] = acc.reshape(bt, ho * wo, acc.shape[-1]).astype(y2_ref.dtype)
    ysum_ref[...] += jnp.sum(acc, axis=0, keepdims=True)
    ysq_ref[...] += jnp.sum(acc * acc, axis=0, keepdims=True)


def _bn1relu_conv2_stats(y1, scale1, shift1, w2, *, ho, wo, bt):
    n, m_img, ck = y1.shape
    cp = w2.shape[-1]
    blocks = [_nbytes((bt, m_img, ck), jnp.bfloat16),
              2 * _nbytes((1, ck), jnp.float32),
              _nbytes(w2.shape, jnp.bfloat16),
              _nbytes((bt, m_img, cp), jnp.bfloat16),
              2 * _nbytes((1, cp), jnp.float32)]
    scratch = _nbytes((bt, ho + 2, wo + 2, ck), jnp.bfloat16)
    kernel = functools.partial(_bn1relu_conv2_stats_kernel, ho=ho, wo=wo,
                               bt=bt, ck=ck)
    return pl.pallas_call(
        kernel,
        out_shape=(jax.ShapeDtypeStruct((n, m_img, cp), jnp.bfloat16),
                   jax.ShapeDtypeStruct((1, cp), jnp.float32),
                   jax.ShapeDtypeStruct((1, cp), jnp.float32)),
        grid=(n // bt,),
        in_specs=[pl.BlockSpec((bt, m_img, ck), lambda i: (i, 0, 0)),
                  pl.BlockSpec((1, ck), lambda i: (0, 0)),
                  pl.BlockSpec((1, ck), lambda i: (0, 0)),
                  pl.BlockSpec(w2.shape, lambda i: (0, 0, 0, 0))],
        out_specs=(pl.BlockSpec((bt, m_img, cp), lambda i: (i, 0, 0)),
                   pl.BlockSpec((1, cp), lambda i: (0, 0)),
                   pl.BlockSpec((1, cp), lambda i: (0, 0))),
        scratch_shapes=[pltpu.VMEM((bt, ho + 2, wo + 2, ck), jnp.bfloat16)],
        compiler_params=pltpu.CompilerParams(
            dimension_semantics=("arbitrary",),
            vmem_limit_bytes=_vmem_limit(blocks, scratch)),
    )(y1, scale1, shift1, w2)


# ---------------------------------------------------------------------------
# Stage 3: BN2 affine + option-A shortcut add + ReLU (writes `planes` channels)
# ---------------------------------------------------------------------------
def _bn2_add_relu_kernel(y2_ref, sc2_ref, sh2_ref, res_ref, out_ref):
    co = out_ref.shape[-1]
    cp = y2_ref.shape[-1]
    out = y2_ref[...].astype(jnp.float32) * sc2_ref[...].reshape(1, 1, cp) \
        + sh2_ref[...].reshape(1, 1, cp)
    out = out[:, :, :co] + res_ref[...]
    out_ref[...] = jnp.maximum(out, 0.0).astype(out_ref.dtype)


def _bn2_add_relu(y2, scale2, shift2, res, *, bt):
    n, m_img, cp = y2.shape
    co = res.shape[-1]
    blocks = [_nbytes((bt, m_img, cp), jnp.bfloat16),
              2 * _nbytes((1, cp), jnp.float32),
              _nbytes((bt, m_img, co), jnp.float32),
              _nbytes((bt, m_img, co), jnp.float32)]
    return pl.pallas_call(
        _bn2_add_relu_kernel,
        out_shape=jax.ShapeDtypeStruct((n, m_img, co), jnp.float32),
        grid=(n // bt,),
        in_specs=[pl.BlockSpec((bt, m_img, cp), lambda i: (i, 0, 0)),
                  pl.BlockSpec((1, cp), lambda i: (0, 0)),
                  pl.BlockSpec((1, cp), lambda i: (0, 0)),
                  pl.BlockSpec((bt, m_img, co), lambda i: (i, 0, 0))],
        out_specs=pl.BlockSpec((bt, m_img, co), lambda i: (i, 0, 0)),
        compiler_params=pltpu.CompilerParams(
            dimension_semantics=("parallel",),    # independent tiles -> megacore
            vmem_limit_bytes=_vmem_limit(blocks)),
    )(y2, scale2, shift2, res)


# ---------------------------------------------------------------------------
# BN scale/shift (hoisted out of the per-tile kernels; tiny (1, C) math)
# ---------------------------------------------------------------------------
def _bn_scale_shift(ysum, ysq, gamma_p, beta_p, count):
    inv = jnp.float32(1.0 / count)
    mu = ysum * inv
    var = jnp.maximum(ysq * inv - mu * mu, 0.0)
    scale = gamma_p * lax.rsqrt(var + EPS)
    shift = beta_p - mu * scale
    return scale, shift


# ---------------------------------------------------------------------------
# BasicBlock forward (NCHW in / NCHW out, training-mode BatchNorm)
# ---------------------------------------------------------------------------
def basic_block_forward(x_nchw, params, *, in_planes, planes, stride):
    x = jnp.transpose(x_nchw, (0, 2, 3, 1)).astype(jnp.float32)    # -> NHWC
    n, h, w, _ = x.shape
    ho = (h - 1) // stride + 1
    wo = (w - 1) // stride + 1
    m_img = ho * wo
    count = n * m_img
    bt = _pick_batch_tile(n, m_img)

    ck = _round_up(planes, SUBLANES_BF16)   # conv1 out / conv2 contraction width
    cp = _round_up(planes, LANES)           # conv2 output lanes (lane-dense)

    # conv1 weight (3,3,Cin,planes): pad Cout -> ck only.
    w1 = jnp.pad(params["w1"], ((0, 0), (0, 0), (0, 0), (0, ck - planes))
                 ).astype(jnp.bfloat16)
    # conv2 weight: contraction dim -> ck (sublane multiple), Cout -> cp lanes.
    w2 = jnp.pad(params["w2"], ((0, 0), (0, 0), (0, ck - planes), (0, cp - planes))
                 ).astype(jnp.bfloat16)

    def pad_vec(v, width):
        return jnp.pad(v.astype(jnp.float32).reshape(1, -1),
                       ((0, 0), (0, width - planes)))

    g1, b1 = pad_vec(params["g1"], ck), pad_vec(params["b1"], ck)
    g2, b2 = pad_vec(params["g2"], cp), pad_vec(params["b2"], cp)

    # Stage 1: conv1 + BN1 batch statistics.
    y1, s1, q1 = _conv1_stats(x, w1, stride=stride, ho=ho, wo=wo, bt=bt)
    scale1, shift1 = _bn_scale_shift(s1, q1, g1, b1, count)

    # Stage 2: BN1 + ReLU fused into conv2 + BN2 batch statistics.
    y2, s2, q2 = _bn1relu_conv2_stats(y1, scale1, shift1, w2, ho=ho, wo=wo, bt=bt)
    scale2, shift2 = _bn_scale_shift(s2, q2, g2, b2, count)

    # Option-A shortcut at its real `planes` channels (no 128-lane residual).
    if stride != 1 or in_planes != planes:
        sc = x[:, ::2, ::2, :]
        sc = jnp.pad(sc, ((0, 0), (0, 0), (0, 0), (planes // 4, planes // 4)))
    else:
        sc = x
    res = sc.reshape(n, m_img, planes)
    # TODO(synk): do the ::2 slice + planes//4 channel shift inside the stage-3
    # kernel (needs lane-offset placement) to drop this small HBM intermediate.

    # Stage 3: BN2 affine + shortcut add + ReLU.
    out = _bn2_add_relu(y2, scale2, shift2, res, bt=bt)
    out = out.reshape(n, ho, wo, planes)
    return jnp.transpose(out, (0, 3, 1, 2))                         # -> NCHW


# ---------------------------------------------------------------------------
# Pure-JAX reference (same math, f32) for a sanity check
# ---------------------------------------------------------------------------
def reference_forward(x_nchw, params, *, in_planes, planes, stride):
    x = jnp.transpose(x_nchw, (0, 2, 3, 1)).astype(jnp.float32)

    def conv(inp, wt, s):
        return lax.conv_general_dilated(
            inp, wt, (s, s), ((1, 1), (1, 1)),
            dimension_numbers=("NHWC", "HWIO", "NHWC"))

    def bn(y, g, b):
        mu = jnp.mean(y, axis=(0, 1, 2), keepdims=True)
        var = jnp.mean((y - mu) ** 2, axis=(0, 1, 2), keepdims=True)
        return (y - mu) * lax.rsqrt(var + EPS) * g.reshape(1, 1, 1, -1) \
            + b.reshape(1, 1, 1, -1)

    out = jax.nn.relu(bn(conv(x, params["w1"], stride), params["g1"], params["b1"]))
    out = bn(conv(out, params["w2"], 1), params["g2"], params["b2"])
    if stride != 1 or in_planes != planes:
        sc = x[:, ::2, ::2, :]
        cpad = planes // 4
        sc = jnp.pad(sc, ((0, 0), (0, 0), (0, 0), (cpad, cpad)))
    else:
        sc = x
    out = jax.nn.relu(out + sc)
    return jnp.transpose(out, (0, 3, 1, 2))


# ---------------------------------------------------------------------------
if __name__ == "__main__":
    # BasicBlock(in_planes=4, planes=8, stride=2, option='A'), input (2,4,16,16)
    N, IN_PLANES, PLANES, STRIDE, H, W = 2, 4, 8, 2, 16, 16

    key = jax.random.PRNGKey(0)
    k1, k2, k3, k4, k5, k6, kx = jax.random.split(key, 7)

    params = {
        # conv weights in HWIO layout (3, 3, Cin, Cout)
        "w1": jax.random.normal(k1, (3, 3, IN_PLANES, PLANES), jnp.float32)
              * (1.0 / (3 * 3 * IN_PLANES) ** 0.5),
        "w2": jax.random.normal(k2, (3, 3, PLANES, PLANES), jnp.float32)
              * (1.0 / (3 * 3 * PLANES) ** 0.5),
        "g1": 1.0 + 0.1 * jax.random.normal(k3, (PLANES,), jnp.float32),
        "b1": 0.1 * jax.random.normal(k4, (PLANES,), jnp.float32),
        "g2": 1.0 + 0.1 * jax.random.normal(k5, (PLANES,), jnp.float32),
        "b2": 0.1 * jax.random.normal(k6, (PLANES,), jnp.float32),
    }
    x = jax.random.normal(kx, (N, IN_PLANES, H, W), jnp.float32)

    fwd = jax.jit(functools.partial(basic_block_forward, in_planes=IN_PLANES,
                                    planes=PLANES, stride=STRIDE))
    out = jax.block_until_ready(fwd(x, params))

    ref = reference_forward(x, params, in_planes=IN_PLANES, planes=PLANES,
                            stride=STRIDE)
    assert out.shape == (N, PLANES, H // STRIDE, W // STRIDE), out.shape
    assert jnp.allclose(out, ref, atol=5e-2, rtol=5e-2), \
        float(jnp.max(jnp.abs(out - ref)))

    print("KERNEL_OK")
</pallas_src>

<mosaic_0001>
module attributes {stable_mosaic.version = 11 : i64} {
  func.func @_conv1_stats_kernel(%arg0: i32, %arg1: memref<1x9x9x16xbf16, #tpu.memory_space<vmem>>, %arg2: memref<3x3x4x16xbf16, #tpu.memory_space<vmem>>, %arg3: memref<1x64x16xbf16, #tpu.memory_space<vmem>>, %arg4: memref<1x16xf32, #tpu.memory_space<vmem>>, %arg5: memref<1x16xf32, #tpu.memory_space<vmem>>) attributes {dimension_semantics = [#tpu.dimension_semantics<arbitrary>], iteration_bounds = array<i64: 2>, scalar_prefetch = 0 : i64, scratch_operands = 0 : i64, tpu.core_type = #tpu.core_type<tc>, window_params = [{transform_indices = @transform_0, window_bounds = array<i64: 1, 9, 9, 16>}, {pipeline_mode = #tpu.pipeline_mode<synchronous>, transform_indices = @transform_1, window_bounds = array<i64: 3, 3, 4, 16>}, {transform_indices = @transform_2, window_bounds = array<i64: 1, 64, 16>}, {pipeline_mode = #tpu.pipeline_mode<synchronous>, transform_indices = @transform_3, window_bounds = array<i64: 1, 16>}, {pipeline_mode = #tpu.pipeline_mode<synchronous>, transform_indices = @transform_4, window_bounds = array<i64: 1, 16>}]} {
    %c0_i32 = arith.constant 0 : i32
    %0 = arith.cmpi eq, %arg0, %c0_i32 : i32
    %1 = arith.extui %0 : i1 to i32
    %c0_i32_0 = arith.constant 0 : i32
    %2 = arith.cmpi ne, %1, %c0_i32_0 : i32
    scf.if %2 {
      %cst_88 = arith.constant 0.000000e+00 : f32
      %70 = vector.broadcast %cst_88 : f32 to vector<1x16xf32>
      %c0_89 = arith.constant 0 : index
      %c0_90 = arith.constant 0 : index
      %71 = vector.load %arg4[%c0_89, %c0_90] : memref<1x16xf32, #tpu.memory_space<vmem>>, vector<1x16xf32>
      tpu.vector_store %arg4[%c0_89, %c0_90], %70 {strides = array<i32>} : memref<1x16xf32, #tpu.memory_space<vmem>>, vector<1x16xf32>,
      %cst_91 = arith.constant 0.000000e+00 : f32
      %72 = vector.broadcast %cst_91 : f32 to vector<1x16xf32>
      %c0_92 = arith.constant 0 : index
      %c0_93 = arith.constant 0 : index
      %73 = vector.load %arg5[%c0_92, %c0_93] : memref<1x16xf32, #tpu.memory_space<vmem>>, vector<1x16xf32>
      tpu.vector_store %arg5[%c0_92, %c0_93], %72 {strides = array<i32>} : memref<1x16xf32, #tpu.memory_space<vmem>>, vector<1x16xf32>,
    } else {
    }
    %c0 = arith.constant 0 : index
    %c0_1 = arith.constant 0 : index
    %c0_2 = arith.constant 0 : index
    %c0_3 = arith.constant 0 : index
    %3 = vector.load %arg1[%c0, %c0_1, %c0_2, %c0_3] : memref<1x9x9x16xbf16, #tpu.memory_space<vmem>>, vector<1x8x8x4xbf16>
    %4 = vector.shape_cast %3 : vector<1x8x8x4xbf16> to vector<64x4xbf16>
    %c0_4 = arith.constant 0 : index
    %c0_5 = arith.constant 0 : index
    %c0_6 = arith.constant 0 : index
    %c0_7 = arith.constant 0 : index
    %5 = vector.load %arg2[%c0_4, %c0_5, %c0_6, %c0_7] : memref<3x3x4x16xbf16, #tpu.memory_space<vmem>>, vector<1x1x4x16xbf16>
    %6 = vector.shape_cast %5 : vector<1x1x4x16xbf16> to vector<4x16xbf16>
    %cst = arith.constant dense<0.000000e+00> : vector<64x16xf32>
    %7 = tpu.matmul %4, %6, %cst {dimension_numbers = #tpu.dot_dimension_numbers<[1], [0], [0], [1], [0, 0, 1, 1], [], []>} : vector<64x4xbf16>, vector<4x16xbf16>, vector<64x16xf32> -> vector<64x16xf32>
    %c0_8 = arith.constant 0 : index
    %c0_9 = arith.constant 0 : index
    %c0_10 = arith.constant 0 : index
    %c4 = arith.constant 4 : index
    %8 = vector.load %arg1[%c0_8, %c0_9, %c0_10, %c4] : memref<1x9x9x16xbf16, #tpu.memory_space<vmem>>, vector<1x8x8x4xbf16>
    %9 = vector.shape_cast %8 : vector<1x8x8x4xbf16> to vector<64x4xbf16>
    %c0_11 = arith.constant 0 : index
    %c1 = arith.constant 1 : index
    %c0_12 = arith.constant 0 : index
    %c0_13 = arith.constant 0 : index
    %10 = vector.load %arg2[%c0_11, %c1, %c0_12, %c0_13] : memref<3x3x4x16xbf16, #tpu.memory_space<vmem>>, vector<1x1x4x16xbf16>
    %11 = vector.shape_cast %10 : vector<1x1x4x16xbf16> to vector<4x16xbf16>
    %cst_14 = arith.constant dense<0.000000e+00> : vector<64x16xf32>
    %12 = tpu.matmul %9, %11, %cst_14 {dimension_numbers = #tpu.dot_dimension_numbers<[1], [0], [0], [1], [0, 0, 1, 1], [], []>} : vector<64x4xbf16>, vector<4x16xbf16>, vector<64x16xf32> -> vector<64x16xf32>
    %13 = arith.addf %7, %12 : vector<64x16xf32>
    %c0_15 = arith.constant 0 : index
    %c0_16 = arith.constant 0 : index
    %c1_17 = arith.constant 1 : index
    %c0_18 = arith.constant 0 : index
    %14 = vector.load %arg1[%c0_15, %c0_16, %c1_17, %c0_18] : memref<1x9x9x16xbf16, #tpu.memory_space<vmem>>, vector<1x8x8x4xbf16>
    %15 = vector.shape_cast %14 : vector<1x8x8x4xbf16> to vector<64x4xbf16>
    %c0_19 = arith.constant 0 : index
    %c2 = arith.constant 2 : index
    %c0_20 = arith.constant 0 : index
    %c0_21 = arith.constant 0 : index
    %16 = vector.load %arg2[%c0_19, %c2, %c0_20, %c0_21] : memref<3x3x4x16xbf16, #tpu.memory_space<vmem>>, vector<1x1x4x16xbf16>
    %17 = vector.shape_cast %16 : vector<1x1x4x16xbf16> to vector<4x16xbf16>
    %cst_22 = arith.constant dense<0.000000e+00> : vector<64x16xf32>
    %18 = tpu.matmul %15, %17, %cst_22 {dimension_numbers = #tpu.dot_dimension_numbers<[1], [0], [0], [1], [0, 0, 1, 1], [], []>} : vector<64x4xbf16>, vector<4x16xbf16>, vector<64x16xf32> -> vector<64x16xf32>
    %19 = arith.addf %13, %18 : vector<64x16xf32>
    %c0_23 = arith.constant 0 : index
    %c0_24 = arith.constant 0 : index
    %c0_25 = arith.constant 0 : index
    %c8 = arith.constant 8 : index
    %20 = vector.load %arg1[%c0_23, %c0_24, %c0_25, %c8] : memref<1x9x9x16xbf16, #tpu.memory_space<vmem>>, vector<1x8x8x4xbf16>
    %21 = vector.shape_cast %20 : vector<1x8x8x4xbf16> to vector<64x4xbf16>
    %c1_26 = arith.constant 1 : index
    %c0_27 = arith.constant 0 : index
    %c0_28 = arith.constant 0 : index
    %c0_29 = arith.constant 0 : index
    %22 = vector.load %arg2[%c1_26, %c0_27, %c0_28, %c0_29] : memref<3x3x4x16xbf16, #tpu.memory_space<vmem>>, vector<1x1x4x16xbf16>
    %23 = vector.shape_cast %22 : vector<1x1x4x16xbf16> to vector<4x16xbf16>
    %cst_30 = arith.constant dense<0.000000e+00> : vector<64x16xf32>
    %24 = tpu.matmul %21, %23, %cst_30 {dimension_numbers = #tpu.dot_dimension_numbers<[1], [0], [0], [1], [0, 0, 1, 1], [], []>} : vector<64x4xbf16>, vector<4x16xbf16>, vector<64x16xf32> -> vector<64x16xf32>
    %25 = arith.addf %19, %24 : vector<64x16xf32>
    %c0_31 = arith.constant 0 : index
    %c0_32 = arith.constant 0 : index
    %c0_33 = arith.constant 0 : index
    %c12 = arith.constant 12 : index
    %26 = vector.load %arg1[%c0_31, %c0_32, %c0_33, %c12] : memref<1x9x9x16xbf16, #tpu.memory_space<vmem>>, vector<1x8x8x4xbf16>
    %27 = vector.shape_cast %26 : vector<1x8x8x4xbf16> to vector<64x4xbf16>
    %c1_34 = arith.constant 1 : index
    %c1_35 = arith.constant 1 : index
    %c0_36 = arith.constant 0 : index
    %c0_37 = arith.constant 0 : index
    %28 = vector.load %arg2[%c1_34, %c1_35, %c0_36, %c0_37] : memref<3x3x4x16xbf16, #tpu.memory_space<vmem>>, vector<1x1x4x16xbf16>
    %29 = vector.shape_cast %28 : vector<1x1x4x16xbf16> to vector<4x16xbf16>
    %cst_38 = arith.constant dense<0.000000e+00> : vector<64x16xf32>
    %30 = tpu.matmul %27, %29, %cst_38 {dimension_numbers = #tpu.dot_dimension_numbers<[1], [0], [0], [1], [0, 0, 1, 1], [], []>} : vector<64x4xbf16>, vector<4x16xbf16>, vector<64x16xf32> -> vector<64x16xf32>
    %31 = arith.addf %25, %30 : vector<64x16xf32>
    %c0_39 = arith.constant 0 : index
    %c0_40 = arith.constant 0 : index
    %c1_41 = arith.constant 1 : index
    %c8_42 = arith.constant 8 : index
    %32 = vector.load %arg1[%c0_39, %c0_40, %c1_41, %c8_42] : memref<1x9x9x16xbf16, #tpu.memory_space<vmem>>, vector<1x8x8x4xbf16>
    %33 = vector.shape_cast %32 : vector<1x8x8x4xbf16> to vector<64x4xbf16>
    %c1_43 = arith.constant 1 : index
    %c2_44 = arith.constant 2 : index
    %c0_45 = arith.constant 0 : index
    %c0_46 = arith.constant 0 : index
    %34 = vector.load %arg2[%c1_43, %c2_44, %c0_45, %c0_46] : memref<3x3x4x16xbf16, #tpu.memory_space<vmem>>, vector<1x1x4x16xbf16>
    %35 = vector.shape_cast %34 : vector<1x1x4x16xbf16> to vector<4x16xbf16>
    %cst_47 = arith.constant dense<0.000000e+00> : vector<64x16xf32>
    %36 = tpu.matmul %33, %35, %cst_47 {dimension_numbers = #tpu.dot_dimension_numbers<[1], [0], [0], [1], [0, 0, 1, 1], [], []>} : vector<64x4xbf16>, vector<4x16xbf16>, vector<64x16xf32> -> vector<64x16xf32>
    %37 = arith.addf %31, %36 : vector<64x16xf32>
    %c0_48 = arith.constant 0 : index
    %c1_49 = arith.constant 1 : index
    %c0_50 = arith.constant 0 : index
    %c0_51 = arith.constant 0 : index
    %38 = vector.load %arg1[%c0_48, %c1_49, %c0_50, %c0_51] : memref<1x9x9x16xbf16, #tpu.memory_space<vmem>>, vector<1x8x8x4xbf16>
    %39 = vector.shape_cast %38 : vector<1x8x8x4xbf16> to vector<64x4xbf16>
    %c2_52 = arith.constant 2 : index
    %c0_53 = arith.constant 0 : index
    %c0_54 = arith.constant 0 : index
    %c0_55 = arith.constant 0 : index
    %40 = vector.load %arg2[%c2_52, %c0_53, %c0_54, %c0_55] : memref<3x3x4x16xbf16, #tpu.memory_space<vmem>>, vector<1x1x4x16xbf16>
    %41 = vector.shape_cast %40 : vector<1x1x4x16xbf16> to vector<4x16xbf16>
    %cst_56 = arith.constant dense<0.000000e+00> : vector<64x16xf32>
    %42 = tpu.matmul %39, %41, %cst_56 {dimension_numbers = #tpu.dot_dimension_numbers<[1], [0], [0], [1], [0, 0, 1, 1], [], []>} : vector<64x4xbf16>, vector<4x16xbf16>, vector<64x16xf32> -> vector<64x16xf32>
    %43 = arith.addf %37, %42 : vector<64x16xf32>
    %c0_57 = arith.constant 0 : index
    %c1_58 = arith.constant 1 : index
    %c0_59 = arith.constant 0 : index
    %c4_60 = arith.constant 4 : index
    %44 = vector.load %arg1[%c0_57, %c1_58, %c0_59, %c4_60] : memref<1x9x9x16xbf16, #tpu.memory_space<vmem>>, vector<1x8x8x4xbf16>
    %45 = vector.shape_cast %44 : vector<1x8x8x4xbf16> to vector<64x4xbf16>
    %c2_61 = arith.constant 2 : index
    %c1_62 = arith.constant 1 : index
    %c0_63 = arith.constant 0 : index
    %c0_64 = arith.constant 0 : index
    %46 = vector.load %arg2[%c2_61, %c1_62, %c0_63, %c0_64] : memref<3x3x4x16xbf16, #tpu.memory_space<vmem>>, vector<1x1x4x16xbf16>
    %47 = vector.shape_cast %46 : vector<1x1x4x16xbf16> to vector<4x16xbf16>
    %cst_65 = arith.constant dense<0.000000e+00> : vector<64x16xf32>
    %48 = tpu.matmul %45, %47, %cst_65 {dimension_numbers = #tpu.dot_dimension_numbers<[1], [0], [0], [1], [0, 0, 1, 1], [], []>} : vector<64x4xbf16>, vector<4x16xbf16>, vector<64x16xf32> -> vector<64x16xf32>
    %49 = arith.addf %43, %48 : vector<64x16xf32>
    %c0_66 = arith.constant 0 : index
    %c1_67 = arith.constant 1 : index
    %c1_68 = arith.constant 1 : index
    %c0_69 = arith.constant 0 : index
    %50 = vector.load %arg1[%c0_66, %c1_67, %c1_68, %c0_69] : memref<1x9x9x16xbf16, #tpu.memory_space<vmem>>, vector<1x8x8x4xbf16>
    %51 = vector.shape_cast %50 : vector<1x8x8x4xbf16> to vector<64x4xbf16>
    %c2_70 = arith.constant 2 : index
    %c2_71 = arith.constant 2 : index
    %c0_72 = arith.constant 0 : index
    %c0_73 = arith.constant 0 : index
    %52 = vector.load %arg2[%c2_70, %c2_71, %c0_72, %c0_73] : memref<3x3x4x16xbf16, #tpu.memory_space<vmem>>, vector<1x1x4x16xbf16>
    %53 = vector.shape_cast %52 : vector<1x1x4x16xbf16> to vector<4x16xbf16>
    %cst_74 = arith.constant dense<0.000000e+00> : vector<64x16xf32>
    %54 = tpu.matmul %51, %53, %cst_74 {dimension_numbers = #tpu.dot_dimension_numbers<[1], [0], [0], [1], [0, 0, 1, 1], [], []>} : vector<64x4xbf16>, vector<4x16xbf16>, vector<64x16xf32> -> vector<64x16xf32>
    %55 = arith.addf %49, %54 : vector<64x16xf32>
    %56 = vector.shape_cast %55 : vector<64x16xf32> to vector<1x64x16xf32>
    %57 = arith.truncf %56 : vector<1x64x16xf32> to vector<1x64x16xbf16>
    %c0_75 = arith.constant 0 : index
    %c0_76 = arith.constant 0 : index
    %c0_77 = arith.constant 0 : index
    %58 = vector.load %arg3[%c0_75, %c0_76, %c0_77] : memref<1x64x16xbf16, #tpu.memory_space<vmem>>, vector<1x64x16xbf16>
    tpu.vector_store %arg3[%c0_75, %c0_76, %c0_77], %57 {strides = array<i32>} : memref<1x64x16xbf16, #tpu.memory_space<vmem>>, vector<1x64x16xbf16>,
    %c0_78 = arith.constant 0 : index
    %c0_79 = arith.constant 0 : index
    %59 = vector.load %arg4[%c0_78, %c0_79] : memref<1x16xf32, #tpu.memory_space<vmem>>, vector<1x16xf32>
    %cst_80 = arith.constant dense<0.000000e+00> : vector<16xf32>
    %60 = vector.multi_reduction <add>, %55, %cst_80 [0] : vector<64x16xf32> to vector<16xf32>
    %61 = vector.shape_cast %60 : vector<16xf32> to vector<1x16xf32>
    %62 = arith.addf %59, %61 : vector<1x16xf32>
    %c0_81 = arith.constant 0 : index
    %c0_82 = arith.constant 0 : index
    %63 = vector.load %arg4[%c0_81, %c0_82] : memref<1x16xf32, #tpu.memory_space<vmem>>, vector<1x16xf32>
    tpu.vector_store %arg4[%c0_81, %c0_82], %62 {strides = array<i32>} : memref<1x16xf32, #tpu.memory_space<vmem>>, vector<1x16xf32>,
    %c0_83 = arith.constant 0 : index
    %c0_84 = arith.constant 0 : index
    %64 = vector.load %arg5[%c0_83, %c0_84] : memref<1x16xf32, #tpu.memory_space<vmem>>, vector<1x16xf32>
    %65 = arith.mulf %55, %55 : vector<64x16xf32>
    %cst_85 = arith.constant dense<0.000000e+00> : vector<16xf32>
    %66 = vector.multi_reduction <add>, %65, %cst_85 [0] : vector<64x16xf32> to vector<16xf32>
    %67 = vector.shape_cast %66 : vector<16xf32> to vector<1x16xf32>
    %68 = arith.addf %64, %67 : vector<1x16xf32>
    %c0_86 = arith.constant 0 : index
    %c0_87 = arith.constant 0 : index
    %69 = vector.load %arg5[%c0_86, %c0_87] : memref<1x16xf32, #tpu.memory_space<vmem>>, vector<1x16xf32>
    tpu.vector_store %arg5[%c0_86, %c0_87], %68 {strides = array<i32>} : memref<1x16xf32, #tpu.memory_space<vmem>>, vector<1x16xf32>,
    return
  }
  func.func @transform_0(%arg0: i32) -> (i32, i32, i32, i32) {
    %c0_i32 = arith.constant 0 : i32
    %c0_i32_0 = arith.constant 0 : i32
    %c0_i32_1 = arith.constant 0 : i32
    %c0_i32_2 = arith.constant 0 : i32
    return %arg0, %c0_i32, %c0_i32_0, %c0_i32_1 : i32, i32, i32, i32
  }
  func.func @transform_1(%arg0: i32) -> (i32, i32, i32, i32) {
    %c0_i32 = arith.constant 0 : i32
    %c0_i32_0 = arith.constant 0 : i32
    %c0_i32_1 = arith.constant 0 : i32
    %c0_i32_2 = arith.constant 0 : i32
    %c0_i32_3 = arith.constant 0 : i32
    return %c0_i32, %c0_i32_0, %c0_i32_1, %c0_i32_2 : i32, i32, i32, i32
  }
  func.func @transform_2(%arg0: i32) -> (i32, i32, i32) {
    %c0_i32 = arith.constant 0 : i32
    %c0_i32_0 = arith.constant 0 : i32
    %c0_i32_1 = arith.constant 0 : i32
    return %arg0, %c0_i32, %c0_i32_0 : i32, i32, i32
  }
  func.func @transform_3(%arg0: i32) -> (i32, i32) {
    %c0_i32 = arith.constant 0 : i32
    %c0_i32_0 = arith.constant 0 : i32
    %c0_i32_1 = arith.constant 0 : i32
    return %c0_i32, %c0_i32_0 : i32, i32
  }
  func.func @transform_4(%arg0: i32) -> (i32, i32) {
    %c0_i32 = arith.constant 0 : i32
    %c0_i32_0 = arith.constant 0 : i32
    %c0_i32_1 = arith.constant 0 : i32
    return %c0_i32, %c0_i32_0 : i32, i32
  }
}

module attributes {stable_mosaic.version = 11 : i64} {
  func.func @_bn1relu_conv2_stats_kernel(%arg0: i32, %arg1: memref<1x64x16xbf16, #tpu.memory_space<vmem>>, %arg2: memref<1x16xf32, #tpu.memory_space<vmem>>, %arg3: memref<1x16xf32, #tpu.memory_space<vmem>>, %arg4: memref<3x3x16x128xbf16, #tpu.memory_space<vmem>>, %arg5: memref<1x64x128xbf16, #tpu.memory_space<vmem>>, %arg6: memref<1x128xf32, #tpu.memory_space<vmem>>, %arg7: memref<1x128xf32, #tpu.memory_space<vmem>>, %arg8: memref<1x10x10x16xbf16, #tpu.memory_space<vmem>>) attributes {dimension_semantics = [#tpu.dimension_semantics<arbitrary>], iteration_bounds = array<i64: 2>, scalar_prefetch = 0 : i64, scratch_operands = 1 : i64, tpu.core_type = #tpu.core_type<tc>, window_params = [{transform_indices = @transform_0, window_bounds = array<i64: 1, 64, 16>}, {pipeline_mode = #tpu.pipeline_mode<synchronous>, transform_indices = @transform_1, window_bounds = array<i64: 1, 16>}, {pipeline_mode = #tpu.pipeline_mode<synchronous>, transform_indices = @transform_2, window_bounds = array<i64: 1, 16>}, {pipeline_mode = #tpu.pipeline_mode<synchronous>, transform_indices = @transform_3, window_bounds = array<i64: 3, 3, 16, 128>}, {transform_indices = @transform_4, window_bounds = array<i64: 1, 64, 128>}, {pipeline_mode = #tpu.pipeline_mode<synchronous>, transform_indices = @transform_5, window_bounds = array<i64: 1, 128>}, {pipeline_mode = #tpu.pipeline_mode<synchronous>, transform_indices = @transform_6, window_bounds = array<i64: 1, 128>}]} {
    %c0_i32 = arith.constant 0 : i32
    %0 = arith.cmpi eq, %arg0, %c0_i32 : i32
    %1 = arith.extui %0 : i1 to i32
    %c0_i32_0 = arith.constant 0 : i32
    %2 = arith.cmpi ne, %1, %c0_i32_0 : i32
    scf.if %2 {
      %cst_108 = arith.constant 0.000000e+00 : f32
      %87 = vector.broadcast %cst_108 : f32 to vector<1x128xf32>
      %c0_109 = arith.constant 0 : index
      %c0_110 = arith.constant 0 : index
      %88 = vector.load %arg6[%c0_109, %c0_110] : memref<1x128xf32, #tpu.memory_space<vmem>>, vector<1x128xf32>
      tpu.vector_store %arg6[%c0_109, %c0_110], %87 {strides = array<i32>} : memref<1x128xf32, #tpu.memory_space<vmem>>, vector<1x128xf32>,
      %cst_111 = arith.constant 0.000000e+00 : f32
      %89 = vector.broadcast %cst_111 : f32 to vector<1x128xf32>
      %c0_112 = arith.constant 0 : index
      %c0_113 = arith.constant 0 : index
      %90 = vector.load %arg7[%c0_112, %c0_113] : memref<1x128xf32, #tpu.memory_space<vmem>>, vector<1x128xf32>
      tpu.vector_store %arg7[%c0_112, %c0_113], %89 {strides = array<i32>} : memref<1x128xf32, #tpu.memory_space<vmem>>, vector<1x128xf32>,
    } else {
    }
    %c0 = arith.constant 0 : index
    %c0_1 = arith.constant 0 : index
    %c0_2 = arith.constant 0 : index
    %3 = vector.load %arg1[%c0, %c0_1, %c0_2] : memref<1x64x16xbf16, #tpu.memory_space<vmem>>, vector<1x64x16xbf16>
    %4 = arith.extf %3 : vector<1x64x16xbf16> to vector<1x64x16xf32>
    %c0_3 = arith.constant 0 : index
    %c0_4 = arith.constant 0 : index
    %5 = vector.load %arg2[%c0_3, %c0_4] : memref<1x16xf32, #tpu.memory_space<vmem>>, vector<1x16xf32>
    %6 = vector.shape_cast %5 : vector<1x16xf32> to vector<1x1x16xf32>
    %7 = vector.broadcast %6 : vector<1x1x16xf32> to vector<1x64x16xf32>
    %8 = arith.mulf %4, %7 : vector<1x64x16xf32>
    %c0_5 = arith.constant 0 : index
    %c0_6 = arith.constant 0 : index
    %9 = vector.load %arg3[%c0_5, %c0_6] : memref<1x16xf32, #tpu.memory_space<vmem>>, vector<1x16xf32>
    %10 = vector.shape_cast %9 : vector<1x16xf32> to vector<1x1x16xf32>
    %11 = vector.broadcast %10 : vector<1x1x16xf32> to vector<1x64x16xf32>
    %12 = arith.addf %8, %11 : vector<1x64x16xf32>
    %cst = arith.constant 0.000000e+00 : f32
    %13 = vector.broadcast %cst : f32 to vector<1x64x16xf32>
    %14 = arith.maximumf %12, %13 : vector<1x64x16xf32>
    %15 = arith.truncf %14 : vector<1x64x16xf32> to vector<1x64x16xbf16>
    %cst_7 = arith.constant 0.000000e+00 : bf16
    %16 = vector.broadcast %cst_7 : bf16 to vector<1x10x10x16xbf16>
    %c0_8 = arith.constant 0 : index
    %c0_9 = arith.constant 0 : index
    %c0_10 = arith.constant 0 : index
    %c0_11 = arith.constant 0 : index
    %17 = vector.load %arg8[%c0_8, %c0_9, %c0_10, %c0_11] : memref<1x10x10x16xbf16, #tpu.memory_space<vmem>>, vector<1x10x10x16xbf16>
    tpu.vector_store %arg8[%c0_8, %c0_9, %c0_10, %c0_11], %16 {strides = array<i32>} : memref<1x10x10x16xbf16, #tpu.memory_space<vmem>>, vector<1x10x10x16xbf16>,
    %18 = vector.shape_cast %15 : vector<1x64x16xbf16> to vector<1x8x8x16xbf16>
    %c0_12 = arith.constant 0 : index
    %c1 = arith.constant 1 : index
    %c1_13 = arith.constant 1 : index
    %c0_14 = arith.constant 0 : index
    %19 = vector.load %arg8[%c0_12, %c1, %c1_13, %c0_14] : memref<1x10x10x16xbf16, #tpu.memory_space<vmem>>, vector<1x8x8x16xbf16>
    tpu.vector_store %arg8[%c0_12, %c1, %c1_13, %c0_14], %18 {strides = array<i32>} : memref<1x10x10x16xbf16, #tpu.memory_space<vmem>>, vector<1x8x8x16xbf16>,
    %c0_15 = arith.constant 0 : index
    %c0_16 = arith.constant 0 : index
    %c0_17 = arith.constant 0 : index
    %c0_18 = arith.constant 0 : index
    %20 = vector.load %arg8[%c0_15, %c0_16, %c0_17, %c0_18] : memref<1x10x10x16xbf16, #tpu.memory_space<vmem>>, vector<1x8x8x16xbf16>
    %21 = vector.shape_cast %20 : vector<1x8x8x16xbf16> to vector<64x16xbf16>
    %c0_19 = arith.constant 0 : index
    %c0_20 = arith.constant 0 : index
    %c0_21 = arith.constant 0 : index
    %c0_22 = arith.constant 0 : index
    %22 = vector.load %arg4[%c0_19, %c0_20, %c0_21, %c0_22] : memref<3x3x16x128xbf16, #tpu.memory_space<vmem>>, vector<1x1x16x128xbf16>
    %23 = vector.shape_cast %22 : vector<1x1x16x128xbf16> to vector<16x128xbf16>
    %cst_23 = arith.constant dense<0.000000e+00> : vector<64x128xf32>
    %24 = tpu.matmul %21, %23, %cst_23 {dimension_numbers = #tpu.dot_dimension_numbers<[1], [0], [0], [1], [0, 0, 1, 1], [], []>} : vector<64x16xbf16>, vector<16x128xbf16>, vector<64x128xf32> -> vector<64x128xf32>
    %c0_24 = arith.constant 0 : index
    %c0_25 = arith.constant 0 : index
    %c1_26 = arith.constant 1 : index
    %c0_27 = arith.constant 0 : index
    %25 = vector.load %arg8[%c0_24, %c0_25, %c1_26, %c0_27] : memref<1x10x10x16xbf16, #tpu.memory_space<vmem>>, vector<1x8x8x16xbf16>
    %26 = vector.shape_cast %25 : vector<1x8x8x16xbf16> to vector<64x16xbf16>
    %c0_28 = arith.constant 0 : index
    %c1_29 = arith.constant 1 : index
    %c0_30 = arith.constant 0 : index
    %c0_31 = arith.constant 0 : index
    %27 = vector.load %arg4[%c0_28, %c1_29, %c0_30, %c0_31] : memref<3x3x16x128xbf16, #tpu.memory_space<vmem>>, vector<1x1x16x128xbf16>
    %28 = vector.shape_cast %27 : vector<1x1x16x128xbf16> to vector<16x128xbf16>
    %cst_32 = arith.constant dense<0.000000e+00> : vector<64x128xf32>
    %29 = tpu.matmul %26, %28, %cst_32 {dimension_numbers = #tpu.dot_dimension_numbers<[1], [0], [0], [1], [0, 0, 1, 1], [], []>} : vector<64x16xbf16>, vector<16x128xbf16>, vector<64x128xf32> -> vector<64x128xf32>
    %30 = arith.addf %24, %29 : vector<64x128xf32>
    %c0_33 = arith.constant 0 : index
    %c0_34 = arith.constant 0 : index
    %c2 = arith.constant 2 : index
    %c0_35 = arith.constant 0 : index
    %31 = vector.load %arg8[%c0_33, %c0_34, %c2, %c0_35] : memref<1x10x10x16xbf16, #tpu.memory_space<vmem>>, vector<1x8x8x16xbf16>
    %32 = vector.shape_cast %31 : vector<1x8x8x16xbf16> to vector<64x16xbf16>
    %c0_36 = arith.constant 0 : index
    %c2_37 = arith.constant 2 : index
    %c0_38 = arith.constant 0 : index
    %c0_39 = arith.constant 0 : index
    %33 = vector.load %arg4[%c0_36, %c2_37, %c0_38, %c0_39] : memref<3x3x16x128xbf16, #tpu.memory_space<vmem>>, vector<1x1x16x128xbf16>
    %34 = vector.shape_cast %33 : vector<1x1x16x128xbf16> to vector<16x128xbf16>
    %cst_40 = arith.constant dense<0.000000e+00> : vector<64x128xf32>
    %35 = tpu.matmul %32, %34, %cst_40 {dimension_numbers = #tpu.dot_dimension_numbers<[1], [0], [0], [1], [0, 0, 1, 1], [], []>} : vector<64x16xbf16>, vector<16x128xbf16>, vector<64x128xf32> -> vector<64x128xf32>
    %36 = arith.addf %30, %35 : vector<64x128xf32>
    %c0_41 = arith.constant 0 : index
    %c1_42 = arith.constant 1 : index
    %c0_43 = arith.constant 0 : index
    %c0_44 = arith.constant 0 : index
    %37 = vector.load %arg8[%c0_41, %c1_42, %c0_43, %c0_44] : memref<1x10x10x16xbf16, #tpu.memory_space<vmem>>, vector<1x8x8x16xbf16>
    %38 = vector.shape_cast %37 : vector<1x8x8x16xbf16> to vector<64x16xbf16>
    %c1_45 = arith.constant 1 : index
    %c0_46 = arith.constant 0 : index
    %c0_47 = arith.constant 0 : index
    %c0_48 = arith.constant 0 : index
    %39 = vector.load %arg4[%c1_45, %c0_46, %c0_47, %c0_48] : memref<3x3x16x128xbf16, #tpu.memory_space<vmem>>, vector<1x1x16x128xbf16>
    %40 = vector.shape_cast %39 : vector<1x1x16x128xbf16> to vector<16x128xbf16>
    %cst_49 = arith.constant dense<0.000000e+00> : vector<64x128xf32>
    %41 = tpu.matmul %38, %40, %cst_49 {dimension_numbers = #tpu.dot_dimension_numbers<[1], [0], [0], [1], [0, 0, 1, 1], [], []>} : vector<64x16xbf16>, vector<16x128xbf16>, vector<64x128xf32> -> vector<64x128xf32>
    %42 = arith.addf %36, %41 : vector<64x128xf32>
    %c0_50 = arith.constant 0 : index
    %c1_51 = arith.constant 1 : index
    %c1_52 = arith.constant 1 : index
    %c0_53 = arith.constant 0 : index
    %43 = vector.load %arg8[%c0_50, %c1_51, %c1_52, %c0_53] : memref<1x10x10x16xbf16, #tpu.memory_space<vmem>>, vector<1x8x8x16xbf16>
    %44 = vector.shape_cast %43 : vector<1x8x8x16xbf16> to vector<64x16xbf16>
    %c1_54 = arith.constant 1 : index
    %c1_55 = arith.constant 1 : index
    %c0_56 = arith.constant 0 : index
    %c0_57 = arith.constant 0 : index
    %45 = vector.load %arg4[%c1_54, %c1_55, %c0_56, %c0_57] : memref<3x3x16x128xbf16, #tpu.memory_space<vmem>>, vector<1x1x16x128xbf16>
    %46 = vector.shape_cast %45 : vector<1x1x16x128xbf16> to vector<16x128xbf16>
    %cst_58 = arith.constant dense<0.000000e+00> : vector<64x128xf32>
    %47 = tpu.matmul %44, %46, %cst_58 {dimension_numbers = #tpu.dot_dimension_numbers<[1], [0], [0], [1], [0, 0, 1, 1], [], []>} : vector<64x16xbf16>, vector<16x128xbf16>, vector<64x128xf32> -> vector<64x128xf32>
    %48 = arith.addf %42, %47 : vector<64x128xf32>
    %c0_59 = arith.constant 0 : index
    %c1_60 = arith.constant 1 : index
    %c2_61 = arith.constant 2 : index
    %c0_62 = arith.constant 0 : index
    %49 = vector.load %arg8[%c0_59, %c1_60, %c2_61, %c0_62] : memref<1x10x10x16xbf16, #tpu.memory_space<vmem>>, vector<1x8x8x16xbf16>
    %50 = vector.shape_cast %49 : vector<1x8x8x16xbf16> to vector<64x16xbf16>
    %c1_63 = arith.constant 1 : index
    %c2_64 = arith.constant 2 : index
    %c0_65 = arith.constant 0 : index
    %c0_66 = arith.constant 0 : index
    %51 = vector.load %arg4[%c1_63, %c2_64, %c0_65, %c0_66] : memref<3x3x16x128xbf16, #tpu.memory_space<vmem>>, vector<1x1x16x128xbf16>
    %52 = vector.shape_cast %51 : vector<1x1x16x128xbf16> to vector<16x128xbf16>
    %cst_67 = arith.constant dense<0.000000e+00> : vector<64x128xf32>
    %53 = tpu.matmul %50, %52, %cst_67 {dimension_numbers = #tpu.dot_dimension_numbers<[1], [0], [0], [1], [0, 0, 1, 1], [], []>} : vector<64x16xbf16>, vector<16x128xbf16>, vector<64x128xf32> -> vector<64x128xf32>
    %54 = arith.addf %48, %53 : vector<64x128xf32>
    %c0_68 = arith.constant 0 : index
    %c2_69 = arith.constant 2 : index
    %c0_70 = arith.constant 0 : index
    %c0_71 = arith.constant 0 : index
    %55 = vector.load %arg8[%c0_68, %c2_69, %c0_70, %c0_71] : memref<1x10x10x16xbf16, #tpu.memory_space<vmem>>, vector<1x8x8x16xbf16>
    %56 = vector.shape_cast %55 : vector<1x8x8x16xbf16> to vector<64x16xbf16>
    %c2_72 = arith.constant 2 : index
    %c0_73 = arith.constant 0 : index
    %c0_74 = arith.constant 0 : index
    %c0_75 = arith.constant 0 : index
    %57 = vector.load %arg4[%c2_72, %c0_73, %c0_74, %c0_75] : memref<3x3x16x128xbf16, #tpu.memory_space<vmem>>, vector<1x1x16x128xbf16>
    %58 = vector.shape_cast %57 : vector<1x1x16x128xbf16> to vector<16x128xbf16>
    %cst_76 = arith.constant dense<0.000000e+00> : vector<64x128xf32>
    %59 = tpu.matmul %56, %58, %cst_76 {dimension_numbers = #tpu.dot_dimension_numbers<[1], [0], [0], [1], [0, 0, 1, 1], [], []>} : vector<64x16xbf16>, vector<16x128xbf16>, vector<64x128xf32> -> vector<64x128xf32>
    %60 = arith.addf %54, %59 : vector<64x128xf32>
    %c0_77 = arith.constant 0 : index
    %c2_78 = arith.constant 2 : index
    %c1_79 = arith.constant 1 : index
    %c0_80 = arith.constant 0 : index
    %61 = vector.load %arg8[%c0_77, %c2_78, %c1_79, %c0_80] : memref<1x10x10x16xbf16, #tpu.memory_space<vmem>>, vector<1x8x8x16xbf16>
    %62 = vector.shape_cast %61 : vector<1x8x8x16xbf16> to vector<64x16xbf16>
    %c2_81 = arith.constant 2 : index
    %c1_82 = arith.constant 1 : index
    %c0_83 = arith.constant 0 : index
    %c0_84 = arith.constant 0 : index
    %63 = vector.load %arg4[%c2_81, %c1_82, %c0_83, %c0_84] : memref<3x3x16x128xbf16, #tpu.memory_space<vmem>>, vector<1x1x16x128xbf16>
    %64 = vector.shape_cast %63 : vector<1x1x16x128xbf16> to vector<16x128xbf16>
    %cst_85 = arith.constant dense<0.000000e+00> : vector<64x128xf32>
    %65 = tpu.matmul %62, %64, %cst_85 {dimension_numbers = #tpu.dot_dimension_numbers<[1], [0], [0], [1], [0, 0, 1, 1], [], []>} : vector<64x16xbf16>, vector<16x128xbf16>, vector<64x128xf32> -> vector<64x128xf32>
    %66 = arith.addf %60, %65 : vector<64x128xf32>
    %c0_86 = arith.constant 0 : index
    %c2_87 = arith.constant 2 : index
    %c2_88 = arith.constant 2 : index
    %c0_89 = arith.constant 0 : index
    %67 = vector.load %arg8[%c0_86, %c2_87, %c2_88, %c0_89] : memref<1x10x10x16xbf16, #tpu.memory_space<vmem>>, vector<1x8x8x16xbf16>
    %68 = vector.shape_cast %67 : vector<1x8x8x16xbf16> to vector<64x16xbf16>
    %c2_90 = arith.constant 2 : index
    %c2_91 = arith.constant 2 : index
    %c0_92 = arith.constant 0 : index
    %c0_93 = arith.constant 0 : index
    %69 = vector.load %arg4[%c2_90, %c2_91, %c0_92, %c0_93] : memref<3x3x16x128xbf16, #tpu.memory_space<vmem>>, vector<1x1x16x128xbf16>
    %70 = vector.shape_cast %69 : vector<1x1x16x128xbf16> to vector<16x128xbf16>
    %cst_94 = arith.constant dense<0.000000e+00> : vector<64x128xf32>
    %71 = tpu.matmul %68, %70, %cst_94 {dimension_numbers = #tpu.dot_dimension_numbers<[1], [0], [0], [1], [0, 0, 1, 1], [], []>} : vector<64x16xbf16>, vector<16x128xbf16>, vector<64x128xf32> -> vector<64x128xf32>
    %72 = arith.addf %66, %71 : vector<64x128xf32>
    %73 = vector.shape_cast %72 : vector<64x128xf32> to vector<1x64x128xf32>
    %74 = arith.truncf %73 : vector<1x64x128xf32> to vector<1x64x128xbf16>
    %c0_95 = arith.constant 0 : index
    %c0_96 = arith.constant 0 : index
    %c0_97 = arith.constant 0 : index
    %75 = vector.load %arg5[%c0_95, %c0_96, %c0_97] : memref<1x64x128xbf16, #tpu.memory_space<vmem>>, vector<1x64x128xbf16>
    tpu.vector_store %arg5[%c0_95, %c0_96, %c0_97], %74 {strides = array<i32>} : memref<1x64x128xbf16, #tpu.memory_space<vmem>>, vector<1x64x128xbf16>,
    %c0_98 = arith.constant 0 : index
    %c0_99 = arith.constant 0 : index
    %76 = vector.load %arg6[%c0_98, %c0_99] : memref<1x128xf32, #tpu.memory_space<vmem>>, vector<1x128xf32>
    %cst_100 = arith.constant dense<0.000000e+00> : vector<128xf32>
    %77 = vector.multi_reduction <add>, %72, %cst_100 [0] : vector<64x128xf32> to vector<128xf32>
    %78 = vector.shape_cast %77 : vector<128xf32> to vector<1x128xf32>
    %79 = arith.addf %76, %78 : vector<1x128xf32>
    %c0_101 = arith.constant 0 : index
    %c0_102 = arith.constant 0 : index
    %80 = vector.load %arg6[%c0_101, %c0_102] : memref<1x128xf32, #tpu.memory_space<vmem>>, vector<1x128xf32>
    tpu.vector_store %arg6[%c0_101, %c0_102], %79 {strides = array<i32>} : memref<1x128xf32, #tpu.memory_space<vmem>>, vector<1x128xf32>,
    %c0_103 = arith.constant 0 : index
    %c0_104 = arith.constant 0 : index
    %81 = vector.load %arg7[%c0_103, %c0_104] : memref<1x128xf32, #tpu.memory_space<vmem>>, vector<1x128xf32>
    %82 = arith.mulf %72, %72 : vector<64x128xf32>
    %cst_105 = arith.constant dense<0.000000e+00> : vector<128xf32>
    %83 = vector.multi_reduction <add>, %82, %cst_105 [0] : vector<64x128xf32> to vector<128xf32>
    %84 = vector.shape_cast %83 : vector<128xf32> to vector<1x128xf32>
    %85 = arith.addf %81, %84 : vector<1x128xf32>
    %c0_106 = arith.constant 0 : index
    %c0_107 = arith.constant 0 : index
    %86 = vector.load %arg7[%c0_106, %c0_107] : memref<1x128xf32, #tpu.memory_space<vmem>>, vector<1x128xf32>
    tpu.vector_store %arg7[%c0_106, %c0_107], %85 {strides = array<i32>} : memref<1x128xf32, #tpu.memory_space<vmem>>, vector<1x128xf32>,
    return
  }
  func.func @transform_0(%arg0: i32) -> (i32, i32, i32) {
    %c0_i32 = arith.constant 0 : i32
    %c0_i32_0 = arith.constant 0 : i32
    %c0_i32_1 = arith.constant 0 : i32
    return %arg0, %c0_i32, %c0_i32_0 : i32, i32, i32
  }
  func.func @transform_1(%arg0: i32) -> (i32, i32) {
    %c0_i32 = arith.constant 0 : i32
    %c0_i32_0 = arith.constant 0 : i32
    %c0_i32_1 = arith.constant 0 : i32
    return %c0_i32, %c0_i32_0 : i32, i32
  }
  func.func @transform_2(%arg0: i32) -> (i32, i32) {
    %c0_i32 = arith.constant 0 : i32
    %c0_i32_0 = arith.constant 0 : i32
    %c0_i32_1 = arith.constant 0 : i32
    return %c0_i32, %c0_i32_0 : i32, i32
  }
  func.func @transform_3(%arg0: i32) -> (i32, i32, i32, i32) {
    %c0_i32 = arith.constant 0 : i32
    %c0_i32_0 = arith.constant 0 : i32
    %c0_i32_1 = arith.constant 0 : i32
    %c0_i32_2 = arith.constant 0 : i32
    %c0_i32_3 = arith.constant 0 : i32
    return %c0_i32, %c0_i32_0, %c0_i32_1, %c0_i32_2 : i32, i32, i32, i32
  }
  func.func @transform_4(%arg0: i32) -> (i32, i32, i32) {
    %c0_i32 = arith.constant 0 : i32
    %c0_i32_0 = arith.constant 0 : i32
    %c0_i32_1 = arith.constant 0 : i32
    return %arg0, %c0_i32, %c0_i32_0 : i32, i32, i32
  }
  func.func @transform_5(%arg0: i32) -> (i32, i32) {
    %c0_i32 = arith.constant 0 : i32
    %c0_i32_0 = arith.constant 0 : i32
    %c0_i32_1 = arith.constant 0 : i32
    return %c0_i32, %c0_i32_0 : i32, i32
  }
  func.func @transform_6(%arg0: i32) -> (i32, i32) {
    %c0_i32 = arith.constant 0 : i32
    %c0_i32_0 = arith.constant 0 : i32
    %c0_i32_1 = arith.constant 0 : i32
    return %c0_i32, %c0_i32_0 : i32, i32
  }
}

module attributes {stable_mosaic.version = 11 : i64} {
  func.func @_bn2_add_relu_kernel(%arg0: i32, %arg1: memref<1x64x128xbf16, #tpu.memory_space<vmem>>, %arg2: memref<1x128xf32, #tpu.memory_space<vmem>>, %arg3: memref<1x128xf32, #tpu.memory_space<vmem>>, %arg4: memref<1x64x8xf32, #tpu.memory_space<vmem>>, %arg5: memref<1x64x8xf32, #tpu.memory_space<vmem>>) attributes {dimension_semantics = [#tpu.dimension_semantics<parallel>], iteration_bounds = array<i64: 2>, scalar_prefetch = 0 : i64, scratch_operands = 0 : i64, tpu.core_type = #tpu.core_type<tc>, window_params = [{transform_indices = @transform_0, window_bounds = array<i64: 1, 64, 128>}, {pipeline_mode = #tpu.pipeline_mode<synchronous>, transform_indices = @transform_1, window_bounds = array<i64: 1, 128>}, {pipeline_mode = #tpu.pipeline_mode<synchronous>, transform_indices = @transform_2, window_bounds = array<i64: 1, 128>}, {transform_indices = @transform_3, window_bounds = array<i64: 1, 64, 8>}, {transform_indices = @transform_4, window_bounds = array<i64: 1, 64, 8>}]} {
    %c0 = arith.constant 0 : index
    %c0_0 = arith.constant 0 : index
    %c0_1 = arith.constant 0 : index
    %0 = vector.load %arg1[%c0, %c0_0, %c0_1] : memref<1x64x128xbf16, #tpu.memory_space<vmem>>, vector<1x64x128xbf16>
    %1 = arith.extf %0 : vector<1x64x128xbf16> to vector<1x64x128xf32>
    %c0_2 = arith.constant 0 : index
    %c0_3 = arith.constant 0 : index
    %2 = vector.load %arg2[%c0_2, %c0_3] : memref<1x128xf32, #tpu.memory_space<vmem>>, vector<1x128xf32>
    %3 = vector.shape_cast %2 : vector<1x128xf32> to vector<1x1x128xf32>
    %4 = vector.broadcast %3 : vector<1x1x128xf32> to vector<1x64x128xf32>
    %5 = arith.mulf %1, %4 : vector<1x64x128xf32>
    %c0_4 = arith.constant 0 : index
    %c0_5 = arith.constant 0 : index
    %6 = vector.load %arg3[%c0_4, %c0_5] : memref<1x128xf32, #tpu.memory_space<vmem>>, vector<1x128xf32>
    %7 = vector.shape_cast %6 : vector<1x128xf32> to vector<1x1x128xf32>
    %8 = vector.broadcast %7 : vector<1x1x128xf32> to vector<1x64x128xf32>
    %9 = arith.addf %5, %8 : vector<1x64x128xf32>
    %10 = vector.extract_strided_slice %9 {offsets = [0, 0, 0], sizes = [1, 64, 8], strides = [1, 1, 1]} : vector<1x64x128xf32> to vector<1x64x8xf32>
    %c0_6 = arith.constant 0 : index
    %c0_7 = arith.constant 0 : index
    %c0_8 = arith.constant 0 : index
    %11 = vector.load %arg4[%c0_6, %c0_7, %c0_8] : memref<1x64x8xf32, #tpu.memory_space<vmem>>, vector<1x64x8xf32>
    %12 = arith.addf %10, %11 : vector<1x64x8xf32>
    %cst = arith.constant 0.000000e+00 : f32
    %13 = vector.broadcast %cst : f32 to vector<1x64x8xf32>
    %14 = arith.maximumf %12, %13 : vector<1x64x8xf32>
    %c0_9 = arith.constant 0 : index
    %c0_10 = arith.constant 0 : index
    %c0_11 = arith.constant 0 : index
    %15 = vector.load %arg5[%c0_9, %c0_10, %c0_11] : memref<1x64x8xf32, #tpu.memory_space<vmem>>, vector<1x64x8xf32>
    tpu.vector_store %arg5[%c0_9, %c0_10, %c0_11], %14 {strides = array<i32>} : memref<1x64x8xf32, #tpu.memory_space<vmem>>, vector<1x64x8xf32>,
    return
  }
  func.func @transform_0(%arg0: i32) -> (i32, i32, i32) {
    %c0_i32 = arith.constant 0 : i32
    %c0_i32_0 = arith.constant 0 : i32
    %c0_i32_1 = arith.constant 0 : i32
    return %arg0, %c0_i32, %c0_i32_0 : i32, i32, i32
  }
  func.func @transform_1(%arg0: i32) -> (i32, i32) {
    %c0_i32 = arith.constant 0 : i32
    %c0_i32_0 = arith.constant 0 : i32
    %c0_i32_1 = arith.constant 0 : i32
    return %c0_i32, %c0_i32_0 : i32, i32
  }
  func.func @transform_2(%arg0: i32) -> (i32, i32) {
    %c0_i32 = arith.constant 0 : i32
    %c0_i32_0 = arith.constant 0 : i32
    %c0_i32_1 = arith.constant 0 : i32
    return %c0_i32, %c0_i32_0 : i32, i32
  }
  func.func @transform_3(%arg0: i32) -> (i32, i32, i32) {
    %c0_i32 = arith.constant 0 : i32
    %c0_i32_0 = arith.constant 0 : i32
    %c0_i32_1 = arith.constant 0 : i32
    return %arg0, %c0_i32, %c0_i32_0 : i32, i32, i32
  }
  func.func @transform_4(%arg0: i32) -> (i32, i32, i32) {
    %c0_i32 = arith.constant 0 : i32
    %c0_i32_0 = arith.constant 0 : i32
    %c0_i32_1 = arith.constant 0 : i32
    return %arg0, %c0_i32, %c0_i32_0 : i32, i32, i32
  }
}

</mosaic_0001>

<llo_original>
// kernel: basic_block_forward.5
$region0: #{basic_block_forward.5}
  #allocation0 [shape = 'u32[]', space=smem, size = 0x4, offset = 0x4, fixed_abs, tag = 'smem constant byte address 0x4 - core index']
  #allocation1 [shape = 'u32[144,128]{1,0:T(1,128)}', space=vmem, size = 0x12000, scoped, tag = 'internal scratch']
  %s0 = inlined_call_operand.vmem [shape: bf16[2,64,128], index: 0, kind: input, shape index: {}]
  %s1 = inlined_call_operand.vmem [shape: f32[1,128], index: 1, kind: input, shape index: {}]
  %s2 = inlined_call_operand.vmem [shape: f32[1,128], index: 2, kind: input, shape index: {}]
  %s3 = inlined_call_operand.vmem [shape: f32[2,64,8], index: 3, kind: input, shape index: {}]
  %s4 = inlined_call_operand.vmem [shape: f32[2,64,8], index: 4, kind: output, shape index: {}]
  %s5 = sld [smem:[#allocation0]]
  $region49: #{basic_block_forward.5} parent=0
    _
  %s7 = ssub.s32 1, %s5
  %s8 = scalar_select 0, %s7, %s5
  loop: start=0, step=1, limit=4
  $region2: #{basic_block_forward.5} parent=0 // loop_pre_header
    _
  $region3: #{basic_block_forward.5} parent=0 // loop_header
    %s10 = sphi 0, %s14
    %p11 = scmp.ge.s32.totalorder %s10, 4
    %s20 = sphi 0, %s22
    %s23 = sphi 0, %s20
    %s24 = sphi 0, %s23
    %s40 = sphi 0, %s24
    %s44 = sphi 0, %s44
    %s46 = sphi 0, %s44
    %s47 = sphi 0, %s46
    %s61 = sphi 0, %s47
    %s65 = sphi 0, %s65
    %s67 = sphi 0, %s65
    %s68 = sphi 0, %s67
    %s82 = sphi 0, %s68
    %s88 = sphi 0, %s90
    %s91 = sphi 0, %s88
    %s92 = sphi 0, %s91
    %s108 = sphi 0, %s92
    %s114 = sphi 0, %s116
    %s117 = sphi 0, %s114
    %s118 = sphi 0, %s117
    %s134 = sphi 0, %s118
  $region4: #{basic_block_forward.5} parent=0 // loop_header_branch
    %13 = sbr.rel (%p11) target = $region8
  $region5: #{basic_block_forward.5} parent=0 // loop_body
    %s15 = ssub.s32 %s10, 1
    %s16 = ssub.s32 %s10, 2
    %s17 = sadd.s32 %s10, 1
    %s18 = ssub.s32 %s10, %s17
    %p19 = scmp.eq.s32.totalorder %s18, 0
    %s21 = sadd.s32 %s20, 1
    %s22 = scalar_select %p19, %s20, %s21
    %p25 = pneg %p19
    %p26 = scmp.eq.s32.totalorder %s10, 1
    %p27 = por %p25, %p26
    %p28 = scmp.ne.s32.totalorder %s20, %s23
    %p29 = scmp.eq.s32.totalorder %s10, 0
    %p30 = por %p28, %p29
    %p31 = scmp.ne.s32.totalorder %s20, %s23
    %p32 = scmp.eq.s32.totalorder %s15, 1
    %p33 = por %p31, %p32
    %p34 = scmp.ne.s32.totalorder %s23, %s24
    %p35 = scmp.eq.s32.totalorder %s15, 0
    %p36 = por %p34, %p35
    %p37 = scmp.ne.s32.totalorder %s23, %s24
    %p38 = scmp.eq.s32.totalorder %s16, 1
    %p39 = por %p37, %p38
    %p41 = scmp.ne.s32.totalorder %s24, %s40
    %p42 = scmp.eq.s32.totalorder %s16, 0
    %p43 = por %p41, %p42
    %s45 = sadd.s32 %s44, 1
    %p48 = scmp.eq.s32.totalorder %s10, 1
    %p49 = scmp.ne.s32.totalorder %s44, %s46
    %p50 = scmp.eq.s32.totalorder %s10, 0
    %p51 = por %p49, %p50
    %p52 = scmp.ne.s32.totalorder %s44, %s46
    %p53 = scmp.eq.s32.totalorder %s15, 1
    %p54 = por %p52, %p53
    %p55 = scmp.ne.s32.totalorder %s46, %s47
    %p56 = scmp.eq.s32.totalorder %s15, 0
    %p57 = por %p55, %p56
    %p58 = scmp.ne.s32.totalorder %s46, %s47
    %p59 = scmp.eq.s32.totalorder %s16, 1
    %p60 = por %p58, %p59
    %p62 = scmp.ne.s32.totalorder %s47, %s61
    %p63 = scmp.eq.s32.totalorder %s16, 0
    %p64 = por %p62, %p63
    %s66 = sadd.s32 %s65, 1
    %p69 = scmp.eq.s32.totalorder %s10, 1
    %p70 = scmp.ne.s32.totalorder %s65, %s67
    %p71 = scmp.eq.s32.totalorder %s10, 0
    %p72 = por %p70, %p71
    %p73 = scmp.ne.s32.totalorder %s65, %s67
    %p74 = scmp.eq.s32.totalorder %s15, 1
    %p75 = por %p73, %p74
    %p76 = scmp.ne.s32.totalorder %s67, %s68
    %p77 = scmp.eq.s32.totalorder %s15, 0
    %p78 = por %p76, %p77
    %p79 = scmp.ne.s32.totalorder %s67, %s68
    %p80 = scmp.eq.s32.totalorder %s16, 1
    %p81 = por %p79, %p80
    %p83 = scmp.ne.s32.totalorder %s68, %s82
    %p84 = scmp.eq.s32.totalorder %s16, 0
    %p85 = por %p83, %p84
    %s86 = ssub.s32 %s10, %s17
    %p87 = scmp.eq.s32.totalorder %s86, 0
    %s89 = sadd.s32 %s88, 1
    %s90 = scalar_select %p87, %s88, %s89
    %p93 = pneg %p87
    %p94 = scmp.eq.s32.totalorder %s10, 1
    %p95 = por %p93, %p94
    %p96 = scmp.ne.s32.totalorder %s88, %s91
    %p97 = scmp.eq.s32.totalorder %s10, 0
    %p98 = por %p96, %p97
    %p99 = scmp.ne.s32.totalorder %s88, %s91
    %p100 = scmp.eq.s32.totalorder %s15, 1
    %p101 = por %p99, %p100
    %p102 = scmp.ne.s32.totalorder %s91, %s92
    %p103 = scmp.eq.s32.totalorder %s15, 0
    %p104 = por %p102, %p103
    %p105 = scmp.ne.s32.totalorder %s91, %s92
    %p106 = scmp.eq.s32.totalorder %s16, 1
    %p107 = por %p105, %p106
    %p109 = scmp.ne.s32.totalorder %s92, %s108
    %p110 = scmp.eq.s32.totalorder %s16, 0
    %p111 = por %p109, %p110
    %s112 = ssub.s32 %s10, %s17
    %p113 = scmp.eq.s32.totalorder %s112, 0
    %s115 = sadd.s32 %s114, 1
    %s116 = scalar_select %p113, %s114, %s115
    %p119 = pneg %p113
    %p120 = scmp.eq.s32.totalorder %s10, 1
    %p121 = por %p119, %p120
    %p122 = scmp.ne.s32.totalorder %s114, %s117
    %p123 = scmp.eq.s32.totalorder %s10, 0
    %p124 = por %p122, %p123
    %p125 = scmp.ne.s32.totalorder %s114, %s117
    %p126 = scmp.eq.s32.totalorder %s15, 1
    %p127 = por %p125, %p126
    %p128 = scmp.ne.s32.totalorder %s117, %s118
    %p129 = scmp.eq.s32.totalorder %s15, 0
    %p130 = por %p128, %p129
    %p131 = scmp.ne.s32.totalorder %s117, %s118
    %p132 = scmp.eq.s32.totalorder %s16, 1
    %p133 = por %p131, %p132
    %p135 = scmp.ne.s32.totalorder %s118, %s134
    %p136 = scmp.eq.s32.totalorder %s16, 0
    %p137 = por %p135, %p136
    %p138 = scmp.le.s32.totalorder 1, %s10
    %p139 = scmp.lt.s32.totalorder %s10, 3
    %p140 = pnand %p138, %p139
    %p141 = pneg %p140
    // Predicated region
    $region9: #{basic_block_forward.5} parent=5 // pred_check
      _
    $region10: #{basic_block_forward.5} parent=5 // pred_check_branch
      %143 = sbr.rel (%p140) target = $region12
    $region11: #{basic_block_forward.5} parent=5 // pred_region
      %s144 = ssub.s32 %s10, 1
      // Predicated region
      $region13: #{basic_block_forward.5} parent=11 // pred_check
        %p145 = pneg %p57
      $region14: #{basic_block_forward.5} parent=11 // pred_check_branch
        %147 = sbr.rel (%p145) target = $region16
      $region15: #{basic_block_forward.5} parent=11 // pred_region
        _
      $region16: #{basic_block_forward.5} parent=11 // pred_fallthru
        _
      // Predicated region
      $region17: #{basic_block_forward.5} parent=11 // pred_check
        %p148 = pneg %p78
      $region18: #{basic_block_forward.5} parent=11 // pred_check_branch
        %150 = sbr.rel (%p148) target = $region20
      $region19: #{basic_block_forward.5} parent=11 // pred_region
        _
      $region20: #{basic_block_forward.5} parent=11 // pred_fallthru
        _
    $region12: #{basic_block_forward.5} parent=5 // pred_fallthru
      _
    %p151 = scmp.lt.s32.totalorder %s10, 2
    // Predicated region
    $region21: #{basic_block_forward.5} parent=5 // pred_check
      %p152 = pneg %p151
    $region22: #{basic_block_forward.5} parent=5 // pred_check_branch
      %154 = sbr.rel (%p152) target = $region24
    $region23: #{basic_block_forward.5} parent=5 // pred_region
      // Predicated region
      $region25: #{basic_block_forward.5} parent=23 // pred_check
        %p155 = pneg %p30
      $region26: #{basic_block_forward.5} parent=23 // pred_check_branch
        %157 = sbr.rel (%p155) target = $region28
      $region27: #{basic_block_forward.5} parent=23 // pred_region
        %p158 = scmp.lt.s32.totalorder %s10, 1
        %s159 = scalar_select %p158, %s10, 1
        %s160 = smul.addr %s159, 8
        %s161 = smul.addr %s160, 4
        %s162 = scalar_lea.vmem %s0, %s161
      $region28: #{basic_block_forward.5} parent=23 // pred_fallthru
        _
      // Predicated region
      $region29: #{basic_block_forward.5} parent=23 // pred_check
        %p163 = pneg %p98
      $region30: #{basic_block_forward.5} parent=23 // pred_check_branch
        %165 = sbr.rel (%p163) target = $region32
      $region31: #{basic_block_forward.5} parent=23 // pred_region
        %p166 = scmp.lt.s32.totalorder %s10, 1
        %s167 = scalar_select %p166, %s10, 1
        %s168 = smul.addr %s167, 8
        %s169 = smul.addr %s168, 8
        %s170 = scalar_lea.vmem %s3, %s169
      $region32: #{basic_block_forward.5} parent=23 // pred_fallthru
        _
    $region24: #{basic_block_forward.5} parent=5 // pred_fallthru
      _
    %p171 = scmp.le.s32.totalorder 1, %s10
    %p172 = scmp.lt.s32.totalorder %s10, 3
    %p173 = pnand %p171, %p172
    %p174 = pneg %p173
    // Predicated region
    $region33: #{basic_block_forward.5} parent=5 // pred_check
      _
    $region34: #{basic_block_forward.5} parent=5 // pred_check_branch
      %176 = sbr.rel (%p173) target = $region36
    $region35: #{basic_block_forward.5} parent=5 // pred_region
      %s177 = ssub.s32 %s10, 1
      %p178 = scmp.lt.s32.totalorder %s15, 1
      %s179 = scalar_select %p178, %s15, 1
      %s180 = smul.addr %s179, 8
      %s181 = smul.addr %s180, 4
      %s182 = scalar_lea.vmem %s0, %s181
      %p183 = pneg %p36
      %p184 = pneg %p33
      %p185 = pneg %p57
      %p186 = pneg %p54
      %p187 = pneg %p78
      %p188 = pneg %p75
      %p189 = scmp.lt.s32.totalorder %s15, 1
      %s190 = scalar_select %p189, %s15, 1
      %s191 = smul.addr %s190, 8
      %s192 = smul.addr %s191, 8
      %s193 = scalar_lea.vmem %s3, %s192
      %p194 = pneg %p104
      %p195 = pneg %p101
      %p196 = pneg %p130
      %p197 = pneg %p127
      %p198 = scmp.lt.s32.totalorder %s15, 1
      %s199 = scalar_select %p198, %s15, 1
      %s200 = smul.addr %s199, 8
      %s201 = smul.addr %s200, 8
      %s202 = scalar_lea.vmem %s4, %s201
      %p203 = scmp.lt.s32.totalorder %s15, 1
      %s204 = scalar_select %p203, %s15, 1
      %s205 = smul.addr %s204, 8
      %s206 = smul.addr %s205, 4
      %s207 = scalar_lea.vmem %s0, %s206
      %p208 = scmp.lt.s32.totalorder %s15, 1
      %s209 = scalar_select %p208, %s15, 1
      %s210 = smul.addr %s209, 8
      %s211 = smul.addr %s210, 8
      %s212 = scalar_lea.vmem %s3, %s211
      %p213 = scmp.lt.s32.totalorder %s15, 1
      %s214 = scalar_select %p213, %s15, 1
      %s215 = smul.addr %s214, 8
      %s216 = smul.addr %s215, 8
      %s217 = scalar_lea.vmem %s4, %s216
      %v218 = vld [vmem:[%s207] sm:$0xf]
      %v219 = vld [vmem:[%s207 + $0x4] sm:$0xf]
      %v220 = vld [vmem:[%s207 + $0x8] sm:$0xf]
      %v221 = vld [vmem:[%s207 + $0xc] sm:$0xf]
      %v222 = vld [vmem:[%s207 + $0x10] sm:$0xf]
      %v223 = vld [vmem:[%s207 + $0x14] sm:$0xf]
      %v224 = vld [vmem:[%s207 + $0x18] sm:$0xf]
      %v225 = vld [vmem:[%s207 + $0x1c] sm:$0xf]
      %v226 = vunpack.c.l.bf16 %v218
      %v227 = vunpack.c.l.bf16 %v219
      %v228 = vunpack.c.l.bf16 %v220
      %v229 = vunpack.c.l.bf16 %v221
      %v230 = vunpack.c.l.bf16 %v222
      %v231 = vunpack.c.l.bf16 %v223
      %v232 = vunpack.c.l.bf16 %v224
      %v233 = vunpack.c.l.bf16 %v225
      %v234 = vld [vmem:[%s1] sm:$0x1]
      %v236 = vlaneseq
      %v237 = vshrl.u32 %v236, 7
      %v238 = vsub.s32 0, %v237
      %v239 = vrot.slane %v234, %v238
      %v241 = vmul.f32 %v226, %v239
      %v242 = vmul.f32 %v227, %v239
      %v243 = vmul.f32 %v228, %v239
      %v244 = vmul.f32 %v229, %v239
      %v245 = vmul.f32 %v230, %v239
      %v246 = vmul.f32 %v231, %v239
      %v247 = vmul.f32 %v232, %v239
      %v248 = vmul.f32 %v233, %v239
      %v249 = vld [vmem:[%s2] sm:$0x1]
      %v251 = vlaneseq
      %v252 = vshrl.u32 %v251, 7
      %v253 = vsub.s32 0, %v252
      %v254 = vrot.slane %v249, %v253
      %v256 = vadd.f32 %v241, %v254
      %v257 = vadd.f32 %v242, %v254
      %v258 = vadd.f32 %v243, %v254
      %v259 = vadd.f32 %v244, %v254
      %v260 = vadd.f32 %v245, %v254
      %v261 = vadd.f32 %v246, %v254
      %v262 = vadd.f32 %v247, %v254
      %v263 = vadd.f32 %v248, %v254
      %v264 = vld [vmem:[%s212] sm:$0xff]
      %v265 = vld [vmem:[%s212 + $0x8] sm:$0xff]
      %v266 = vld [vmem:[%s212 + $0x10] sm:$0xff]
      %v267 = vld [vmem:[%s212 + $0x18] sm:$0xff]
      %v268 = vld [vmem:[%s212 + $0x20] sm:$0xff]
      %v269 = vld [vmem:[%s212 + $0x28] sm:$0xff]
      %v270 = vld [vmem:[%s212 + $0x30] sm:$0xff]
      %v271 = vld [vmem:[%s212 + $0x38] sm:$0xff]
      %v272 = vadd.f32 %v256, %v264
      %v273 = vadd.f32 %v257, %v265
      %v274 = vadd.f32 %v258, %v266
      %v275 = vadd.f32 %v259, %v267
      %v276 = vadd.f32 %v260, %v268
      %v277 = vadd.f32 %v261, %v269
      %v278 = vadd.f32 %v262, %v270
      %v279 = vadd.f32 %v263, %v271
      %v280 = vmax.f32 %v272, 0.0
      %v281 = vmax.f32 %v273, 0.0
      %v282 = vmax.f32 %v274, 0.0
      %v283 = vmax.f32 %v275, 0.0
      %v284 = vmax.f32 %v276, 0.0
      %v285 = vmax.f32 %v277, 0.0
      %v286 = vmax.f32 %v278, 0.0
      %v287 = vmax.f32 %v279, 0.0
      %vm288 = vcmask 64512
      %289 = vst.msk [vmem:[%s217] sm:$0xff] %vm288, %v280
      %290 = vst.msk [vmem:[%s217 + $0x8] sm:$0xff] %vm288, %v281
      %291 = vst.msk [vmem:[%s217 + $0x10] sm:$0xff] %vm288, %v282
      %292 = vst.msk [vmem:[%s217 + $0x18] sm:$0xff] %vm288, %v283
      %293 = vst.msk [vmem:[%s217 + $0x20] sm:$0xff] %vm288, %v284
      %294 = vst.msk [vmem:[%s217 + $0x28] sm:$0xff] %vm288, %v285
      %295 = vst.msk [vmem:[%s217 + $0x30] sm:$0xff] %vm288, %v286
      %296 = vst.msk [vmem:[%s217 + $0x38] sm:$0xff] %vm288, %v287
      %p297 = scmp.lt.s32.totalorder %s15, 1
      %s298 = scalar_select %p297, %s15, 1
      %s299 = smul.addr %s298, 8
      %s300 = smul.addr %s299, 8
      %s301 = scalar_lea.vmem %s4, %s300
      // Predicated region
      $region37: #{basic_block_forward.5} parent=35 // pred_check
        %p302 = pneg %p127
      $region38: #{basic_block_forward.5} parent=35 // pred_check_branch
        %304 = sbr.rel (%p302) target = $region40
      $region39: #{basic_block_forward.5} parent=35 // pred_region
        _
      $region40: #{basic_block_forward.5} parent=35 // pred_fallthru
        _
    $region36: #{basic_block_forward.5} parent=5 // pred_fallthru
      _
    %p305 = scmp.le.s32.totalorder 2, %s10
    // Predicated region
    $region41: #{basic_block_forward.5} parent=5 // pred_check
      %p306 = pneg %p305
    $region42: #{basic_block_forward.5} parent=5 // pred_check_branch
      %308 = sbr.rel (%p306) target = $region44
    $region43: #{basic_block_forward.5} parent=5 // pred_region
      %s309 = ssub.s32 %s10, 2
      // Predicated region
      $region45: #{basic_block_forward.5} parent=43 // pred_check
        %p310 = pneg %p133
      $region46: #{basic_block_forward.5} parent=43 // pred_check_branch
        %312 = sbr.rel (%p310) target = $region48
      $region47: #{basic_block_forward.5} parent=43 // pred_region
        %p313 = scmp.lt.s32.totalorder %s16, 1
        %s314 = scalar_select %p313, %s16, 1
        %s315 = smul.addr %s314, 8
        %s316 = smul.addr %s315, 8
        %s317 = scalar_lea.vmem %s4, %s316
      $region48: #{basic_block_forward.5} parent=43 // pred_fallthru
        _
    $region44: #{basic_block_forward.5} parent=5 // pred_fallthru
      _
  $region6: #{basic_block_forward.5} parent=0 // loop_footer
    %s14 = sadd.s32 1, %s10
  $region7: #{basic_block_forward.5} parent=0 // loop_footer_branch
    %9 = sbr.rel target = $region3
  $region8: #{basic_block_forward.5} parent=0 // loop_exit
    _

// kernel: basic_block_forward.3
$region0: #{basic_block_forward.3}
  #allocation0 [shape = 'u32[]', space=smem, size = 0x4, offset = 0x4, fixed_abs, tag = 'smem constant byte address 0x4 - core index']
  #allocation1 [shape = 'u32[144,128]{1,0:T(1,128)}', space=vmem, size = 0x12000, scoped, tag = 'internal scratch']
  %s0 = inlined_call_operand.vmem [shape: bf16[2,9,9,16], index: 0, kind: input, shape index: {}]
  %s1 = inlined_call_operand.vmem [shape: bf16[3,3,4,16], index: 1, kind: input, shape index: {}]
  %s2 = inlined_call_operand.vmem [shape: bf16[2,64,16], index: 2, kind: output, shape index: {0}]
  %s3 = inlined_call_operand.vmem [shape: f32[1,16], index: 3, kind: output, shape index: {1}]
  %s4 = inlined_call_operand.vmem [shape: f32[1,16], index: 4, kind: output, shape index: {2}]
  %5 = xla_tuple %s2, %s3, %s4
  %s6 = sld [smem:[#allocation0]]
  $region61: #{basic_block_forward.3} parent=0
    _
  %s8 = ssub.s32 1, %s6
  %s9 = scalar_select 0, %s8, %s6
  loop: start=0, step=1, limit=4
  $region2: #{basic_block_forward.3} parent=0 // loop_pre_header
    _
  $region3: #{basic_block_forward.3} parent=0 // loop_header
    %s11 = sphi 0, %s15
    %p12 = scmp.ge.s32.totalorder %s11, 4
    %s21 = sphi 0, %s23
    %s24 = sphi 0, %s21
    %s25 = sphi 0, %s24
    %s41 = sphi 0, %s25
    %s45 = sphi 0, %s45
    %s47 = sphi 0, %s45
    %s48 = sphi 0, %s47
    %s62 = sphi 0, %s48
    %s68 = sphi 0, %s70
    %s71 = sphi 0, %s68
    %s72 = sphi 0, %s71
    %s88 = sphi 0, %s72
    %s92 = sphi 0, %s92
    %s94 = sphi 0, %s92
    %s95 = sphi 0, %s94
    %s109 = sphi 0, %s95
    %s113 = sphi 0, %s113
    %s115 = sphi 0, %s113
    %s116 = sphi 0, %s115
    %s130 = sphi 0, %s116
  $region4: #{basic_block_forward.3} parent=0 // loop_header_branch
    %14 = sbr.rel (%p12) target = $region8
  $region5: #{basic_block_forward.3} parent=0 // loop_body
    %s16 = ssub.s32 %s11, 1
    %s17 = ssub.s32 %s11, 2
    %s18 = sadd.s32 %s11, 1
    %s19 = ssub.s32 %s11, %s18
    %p20 = scmp.eq.s32.totalorder %s19, 0
    %s22 = sadd.s32 %s21, 1
    %s23 = scalar_select %p20, %s21, %s22
    %p26 = pneg %p20
    %p27 = scmp.eq.s32.totalorder %s11, 1
    %p28 = por %p26, %p27
    %p29 = scmp.ne.s32.totalorder %s21, %s24
    %p30 = scmp.eq.s32.totalorder %s11, 0
    %p31 = por %p29, %p30
    %p32 = scmp.ne.s32.totalorder %s21, %s24
    %p33 = scmp.eq.s32.totalorder %s16, 1
    %p34 = por %p32, %p33
    %p35 = scmp.ne.s32.totalorder %s24, %s25
    %p36 = scmp.eq.s32.totalorder %s16, 0
    %p37 = por %p35, %p36
    %p38 = scmp.ne.s32.totalorder %s24, %s25
    %p39 = scmp.eq.s32.totalorder %s17, 1
    %p40 = por %p38, %p39
    %p42 = scmp.ne.s32.totalorder %s25, %s41
    %p43 = scmp.eq.s32.totalorder %s17, 0
    %p44 = por %p42, %p43
    %s46 = sadd.s32 %s45, 1
    %p49 = scmp.eq.s32.totalorder %s11, 1
    %p50 = scmp.ne.s32.totalorder %s45, %s47
    %p51 = scmp.eq.s32.totalorder %s11, 0
    %p52 = por %p50, %p51
    %p53 = scmp.ne.s32.totalorder %s45, %s47
    %p54 = scmp.eq.s32.totalorder %s16, 1
    %p55 = por %p53, %p54
    %p56 = scmp.ne.s32.totalorder %s47, %s48
    %p57 = scmp.eq.s32.totalorder %s16, 0
    %p58 = por %p56, %p57
    %p59 = scmp.ne.s32.totalorder %s47, %s48
    %p60 = scmp.eq.s32.totalorder %s17, 1
    %p61 = por %p59, %p60
    %p63 = scmp.ne.s32.totalorder %s48, %s62
    %p64 = scmp.eq.s32.totalorder %s17, 0
    %p65 = por %p63, %p64
    %s66 = ssub.s32 %s11, %s18
    %p67 = scmp.eq.s32.totalorder %s66, 0
    %s69 = sadd.s32 %s68, 1
    %s70 = scalar_select %p67, %s68, %s69
    %p73 = pneg %p67
    %p74 = scmp.eq.s32.totalorder %s11, 1
    %p75 = por %p73, %p74
    %p76 = scmp.ne.s32.totalorder %s68, %s71
    %p77 = scmp.eq.s32.totalorder %s11, 0
    %p78 = por %p76, %p77
    %p79 = scmp.ne.s32.totalorder %s68, %s71
    %p80 = scmp.eq.s32.totalorder %s16, 1
    %p81 = por %p79, %p80
    %p82 = scmp.ne.s32.totalorder %s71, %s72
    %p83 = scmp.eq.s32.totalorder %s16, 0
    %p84 = por %p82, %p83
    %p85 = scmp.ne.s32.totalorder %s71, %s72
    %p86 = scmp.eq.s32.totalorder %s17, 1
    %p87 = por %p85, %p86
    %p89 = scmp.ne.s32.totalorder %s72, %s88
    %p90 = scmp.eq.s32.totalorder %s17, 0
    %p91 = por %p89, %p90
    %s93 = sadd.s32 %s92, 1
    %p96 = scmp.eq.s32.totalorder %s11, 1
    %p97 = scmp.ne.s32.totalorder %s92, %s94
    %p98 = scmp.eq.s32.totalorder %s11, 0
    %p99 = por %p97, %p98
    %p100 = scmp.ne.s32.totalorder %s92, %s94
    %p101 = scmp.eq.s32.totalorder %s16, 1
    %p102 = por %p100, %p101
    %p103 = scmp.ne.s32.totalorder %s94, %s95
    %p104 = scmp.eq.s32.totalorder %s16, 0
    %p105 = por %p103, %p104
    %p106 = scmp.ne.s32.totalorder %s94, %s95
    %p107 = scmp.eq.s32.totalorder %s17, 1
    %p108 = por %p106, %p107
    %p110 = scmp.ne.s32.totalorder %s95, %s109
    %p111 = scmp.eq.s32.totalorder %s17, 0
    %p112 = por %p110, %p111
    %s114 = sadd.s32 %s113, 1
    %p117 = scmp.eq.s32.totalorder %s11, 1
    %p118 = scmp.ne.s32.totalorder %s113, %s115
    %p119 = scmp.eq.s32.totalorder %s11, 0
    %p120 = por %p118, %p119
    %p121 = scmp.ne.s32.totalorder %s113, %s115
    %p122 = scmp.eq.s32.totalorder %s16, 1
    %p123 = por %p121, %p122
    %p124 = scmp.ne.s32.totalorder %s115, %s116
    %p125 = scmp.eq.s32.totalorder %s16, 0
    %p126 = por %p124, %p125
    %p127 = scmp.ne.s32.totalorder %s115, %s116
    %p128 = scmp.eq.s32.totalorder %s17, 1
    %p129 = por %p127, %p128
    %p131 = scmp.ne.s32.totalorder %s116, %s130
    %p132 = scmp.eq.s32.totalorder %s17, 0
    %p133 = por %p131, %p132
    %p134 = scmp.le.s32.totalorder 1, %s11
    %p135 = scmp.lt.s32.totalorder %s11, 3
    %p136 = pnand %p134, %p135
    %p137 = pneg %p136
    // Predicated region
    $region9: #{basic_block_forward.3} parent=5 // pred_check
      _
    $region10: #{basic_block_forward.3} parent=5 // pred_check_branch
      %139 = sbr.rel (%p136) target = $region12
    $region11: #{basic_block_forward.3} parent=5 // pred_region
      %s140 = ssub.s32 %s11, 1
      // Predicated region
      $region13: #{basic_block_forward.3} parent=11 // pred_check
        %p141 = pneg %p58
      $region14: #{basic_block_forward.3} parent=11 // pred_check_branch
        %143 = sbr.rel (%p141) target = $region16
      $region15: #{basic_block_forward.3} parent=11 // pred_region
        _
      $region16: #{basic_block_forward.3} parent=11 // pred_fallthru
        _
    $region12: #{basic_block_forward.3} parent=5 // pred_fallthru
      _
    %p144 = scmp.lt.s32.totalorder %s11, 2
    // Predicated region
    $region17: #{basic_block_forward.3} parent=5 // pred_check
      %p145 = pneg %p144
    $region18: #{basic_block_forward.3} parent=5 // pred_check_branch
      %147 = sbr.rel (%p145) target = $region20
    $region19: #{basic_block_forward.3} parent=5 // pred_region
      // Predicated region
      $region21: #{basic_block_forward.3} parent=19 // pred_check
        %p148 = pneg %p31
      $region22: #{basic_block_forward.3} parent=19 // pred_check_branch
        %150 = sbr.rel (%p148) target = $region24
      $region23: #{basic_block_forward.3} parent=19 // pred_region
        %p151 = scmp.lt.s32.totalorder %s11, 1
        %s152 = scalar_select %p151, %s11, 1
        %s153 = smul.addr %s152, 18
        %s154 = smul.addr %s153, 4
        %s155 = scalar_lea.vmem %s0, %s154
      $region24: #{basic_block_forward.3} parent=19 // pred_fallthru
        _
    $region20: #{basic_block_forward.3} parent=5 // pred_fallthru
      _
    %p156 = scmp.le.s32.totalorder 1, %s11
    %p157 = scmp.lt.s32.totalorder %s11, 3
    %p158 = pnand %p156, %p157
    %p159 = pneg %p158
    // Predicated region
    $region25: #{basic_block_forward.3} parent=5 // pred_check
      _
    $region26: #{basic_block_forward.3} parent=5 // pred_check_branch
      %161 = sbr.rel (%p158) target = $region28
    $region27: #{basic_block_forward.3} parent=5 // pred_region
      %s162 = ssub.s32 %s11, 1
      %p163 = scmp.lt.s32.totalorder %s16, 1
      %s164 = scalar_select %p163, %s16, 1
      %s165 = smul.addr %s164, 18
      %s166 = smul.addr %s165, 4
      %s167 = scalar_lea.vmem %s0, %s166
      %p168 = pneg %p37
      %p169 = pneg %p34
      %p170 = pneg %p58
      %p171 = pneg %p55
      %p172 = pneg %p84
      %p173 = pneg %p81
      %p174 = scmp.lt.s32.totalorder %s16, 1
      %s175 = scalar_select %p174, %s16, 1
      %s176 = smul.addr %s175, 8
      %s177 = smul.addr %s176, 4
      %s178 = scalar_lea.vmem %s2, %s177
      %p179 = pneg %p105
      %p180 = pneg %p102
      %p181 = pneg %p126
      %p182 = pneg %p123
      %p183 = scmp.lt.s32.totalorder %s16, 1
      %s184 = scalar_select %p183, %s16, 1
      %s185 = smul.addr %s184, 18
      %s186 = smul.addr %s185, 4
      %s187 = scalar_lea.vmem %s0, %s186
      %p188 = scmp.lt.s32.totalorder %s16, 1
      %s189 = scalar_select %p188, %s16, 1
      %s190 = smul.addr %s189, 8
      %s191 = smul.addr %s190, 4
      %s192 = scalar_lea.vmem %s2, %s191
      %p194 = scmp.eq.s32.totalorder %s16, 0
      // Predicated region
      $region29: #{basic_block_forward.3} parent=27 // pred_check
        %p195 = pneg %p194
      $region30: #{basic_block_forward.3} parent=27 // pred_check_branch
        %197 = sbr.rel (%p195) target = $region32
      $region31: #{basic_block_forward.3} parent=27 // pred_region
        %vm198 = vcmask 122880
        %199 = vst.msk [vmem:[%s3] sm:$0x1] %vm198, 0.0
        %200 = vst.msk [vmem:[%s4] sm:$0x1] %vm198, 0.0
      $region32: #{basic_block_forward.3} parent=27 // pred_fallthru
        _
      %v201 = vld [vmem:[%s187] sm:$0xf]
      %v202 = vld [vmem:[%s187 + $0x8] sm:$0xf]
      %v203 = vld [vmem:[%s187 + $0x10] sm:$0xf]
      %v204 = vld [vmem:[%s187 + $0x18] sm:$0xf]
      %v205 = vld [vmem:[%s187 + $0x20] sm:$0xf]
      %v206 = vld [vmem:[%s187 + $0x28] sm:$0xf]
      %v207 = vld [vmem:[%s187 + $0x30] sm:$0xf]
      %v208 = vld [vmem:[%s187 + $0x38] sm:$0xf]
      %v209 = vld [vmem:[%s1] sm:$0x3]
      %s210 = scalar_lea.vmem %s1, 2
      %v211 = vld [vmem:[%s210] sm:$0x3]
      %v220 = vunpack.c.l.b16 %v201
      %v221 = vunpack.c.l.b16 %v202
      %v222 = vunpack.c.l.b16 %v203
      %v223 = vunpack.c.l.b16 %v204
      %v224 = vunpack.c.l.b16 %v205
      %v225 = vunpack.c.l.b16 %v206
      %v226 = vunpack.c.l.b16 %v207
      %v227 = vunpack.c.l.b16 %v208
      %v228 = vpack.c.b16 %v221, %v220
      %v229 = vpack.c.b16 %v223, %v222
      %v230 = vpack.c.b16 %v225, %v224
      %v231 = vpack.c.b16 %v227, %v226
      %232 = vrot.lane.b32.xlu0 %v228, 124
      %v233 = vpop.permute.xlu0 %232
      %234 = vrot.lane.b32.xlu0 %v229, 124
      %v235 = vpop.permute.xlu0 %234
      %236 = vrot.lane.b32.xlu0 %v230, 124
      %v237 = vpop.permute.xlu0 %236
      %238 = vrot.lane.b32.xlu0 %v231, 124
      %v239 = vpop.permute.xlu0 %238
      %vm240 = vcmask 31744
      %v242 = vsel %vm240, %v233, 0
      %v245 = vsel %vm240, %v235, 0
      %v248 = vsel %vm240, %v237, 0
      %v251 = vsel %vm240, %v239, 0
      %vm253 = vcmask 1041408
      %v255 = vsel %vm253, %v211, 0
      %257 = vmatprep.subr.bf16.mxu0 0
      %258 = vmatpush1.bf16.msra.mxu0 %v255
      %259 = vmatprep.subr.bf16.mxu0 0
      %260 = vmatpush1.bf16.msra.mxu0 0
      %261 = vmatprep.subr.bf16.mxu0 0
      %262 = vmatpush1.bf16.msra.mxu0 0
      %263 = vmatprep.subr.bf16.mxu0 0
      %264 = vmatpush1.bf16.msra.mxu0 0
      %265 = vmatprep.subr.bf16.mxu0 0
      %266 = vmatpush1.bf16.msra.mxu0 0
      %267 = vmatprep.subr.bf16.mxu0 0
      %268 = vmatpush1.bf16.msra.mxu0 0
      %269 = vmatprep.subr.bf16.mxu0 0
      %270 = vmatpush1.bf16.msra.mxu0 0
      %271 = vmatprep.subr.bf16.mxu0 0
      %272 = vmatpush1.bf16.msra.mxu0 0
      %273 = vmatprep.subr.bf16.mxu0 0
      %274 = vmatpush1.bf16.msra.mxu0 0
      %275 = vmatprep.subr.bf16.mxu0 0
      %276 = vmatpush1.bf16.msra.mxu0 0
      %277 = vmatprep.subr.bf16.mxu0 0
      %278 = vmatpush1.bf16.msra.mxu0 0
      %279 = vmatprep.subr.bf16.mxu0 0
      %280 = vmatpush1.bf16.msra.mxu0 0
      %281 = vmatprep.subr.bf16.mxu0 0
      %282 = vmatpush1.bf16.msra.mxu0 0
      %283 = vmatprep.subr.bf16.mxu0 0
      %284 = vmatpush1.bf16.msra.mxu0 0
      %285 = vmatprep.subr.bf16.mxu0 0
      %286 = vmatpush1.bf16.msra.mxu0 0
      %287 = vmatprep.subr.bf16.mxu0 0
      %288 = vmatpush1.bf16.msra.mxu0 0
      %289 = vmatprep.mubr.bf16.mxu0 0
      %290 = vmatmul.mubr.bf16.gmra.mrb[0].mxu0 %v242
      %v291 = vpop.f32.mrb[0].mxu0
      %v292 = vadd.f32 0.0, %v291
      %v293 = vpop.f32.mrb[0].mxu0
      %v294 = vpop.f32.mrb[0].mxu0
      %v295 = vadd.f32 0.0, %v294
      %v296 = vpop.f32.mrb[0].mxu0
      %297 = vmatprep.mubr.bf16.mxu0 0
      %298 = vmatmul.mubr.bf16.gmra.mrb[0].mxu0 %v245
      %v299 = vpop.f32.mrb[0].mxu0
      %v300 = vadd.f32 0.0, %v299
      %v301 = vpop.f32.mrb[0].mxu0
      %v302 = vpop.f32.mrb[0].mxu0
      %v303 = vadd.f32 0.0, %v302
      %v304 = vpop.f32.mrb[0].mxu0
      %305 = vmatprep.mubr.bf16.mxu0 0
      %306 = vmatmul.mubr.bf16.gmra.mrb[0].mxu0 %v248
      %v307 = vpop.f32.mrb[0].mxu0
      %v308 = vadd.f32 0.0, %v307
      %v309 = vpop.f32.mrb[0].mxu0
      %v310 = vpop.f32.mrb[0].mxu0
      %v311 = vadd.f32 0.0, %v310
      %v312 = vpop.f32.mrb[0].mxu0
      %313 = vmatprep.mubr.bf16.mxu0 0
      %314 = vmatmul.mubr.bf16.gmra.mrb[0].mxu0 %v251
      %v315 = vpop.f32.mrb[0].mxu0
      %v316 = vadd.f32 0.0, %v315
      %v317 = vpop.f32.mrb[0].mxu0
      %v318 = vpop.f32.mrb[0].mxu0
      %v319 = vadd.f32 0.0, %v318
      %v320 = vpop.f32.mrb[0].mxu0
      %321 = vdwg.mxu0
      %v323 = vsel %vm240, %v228, 0
      %v326 = vsel %vm240, %v229, 0
      %v329 = vsel %vm240, %v230, 0
      %v332 = vsel %vm240, %v231, 0
      %v335 = vsel %vm253, %v209, 0
      %337 = vmatprep.subr.bf16.mxu0 0
      %338 = vmatpush1.bf16.msra.mxu0 %v335
      %339 = vmatprep.subr.bf16.mxu0 0
      %340 = vmatpush1.bf16.msra.mxu0 0
      %341 = vmatprep.subr.bf16.mxu0 0
      %342 = vmatpush1.bf16.msra.mxu0 0
      %343 = vmatprep.subr.bf16.mxu0 0
      %344 = vmatpush1.bf16.msra.mxu0 0
      %345 = vmatprep.subr.bf16.mxu0 0
      %346 = vmatpush1.bf16.msra.mxu0 0
      %347 = vmatprep.subr.bf16.mxu0 0
      %348 = vmatpush1.bf16.msra.mxu0 0
      %349 = vmatprep.subr.bf16.mxu0 0
      %350 = vmatpush1.bf16.msra.mxu0 0
      %351 = vmatprep.subr.bf16.mxu0 0
      %352 = vmatpush1.bf16.msra.mxu0 0
      %353 = vmatprep.subr.bf16.mxu0 0
      %354 = vmatpush1.bf16.msra.mxu0 0
      %355 = vmatprep.subr.bf16.mxu0 0
      %356 = vmatpush1.bf16.msra.mxu0 0
      %357 = vmatprep.subr.bf16.mxu0 0
      %358 = vmatpush1.bf16.msra.mxu0 0
      %359 = vmatprep.subr.bf16.mxu0 0
      %360 = vmatpush1.bf16.msra.mxu0 0
      %361 = vmatprep.subr.bf16.mxu0 0
      %362 = vmatpush1.bf16.msra.mxu0 0
      %363 = vmatprep.subr.bf16.mxu0 0
      %364 = vmatpush1.bf16.msra.mxu0 0
      %365 = vmatprep.subr.bf16.mxu0 0
      %366 = vmatpush1.bf16.msra.mxu0 0
      %367 = vmatprep.subr.bf16.mxu0 0
      %368 = vmatpush1.bf16.msra.mxu0 0
      %369 = vmatprep.mubr.bf16.mxu0 0
      %370 = vmatmul.mubr.bf16.gmra.mrb[0].mxu0 %v323
      %v371 = vpop.f32.mrb[0].mxu0
      %v372 = vadd.f32 %v292, %v371
      %v373 = vpop.f32.mrb[0].mxu0
      %v374 = vpop.f32.mrb[0].mxu0
      %v375 = vadd.f32 %v295, %v374
      %v376 = vpop.f32.mrb[0].mxu0
      %377 = vmatprep.mubr.bf16.mxu0 0
      %378 = vmatmul.mubr.bf16.gmra.mrb[0].mxu0 %v326
      %v379 = vpop.f32.mrb[0].mxu0
      %v380 = vadd.f32 %v300, %v379
      %v381 = vpop.f32.mrb[0].mxu0
      %v382 = vpop.f32.mrb[0].mxu0
      %v383 = vadd.f32 %v303, %v382
      %v384 = vpop.f32.mrb[0].mxu0
      %385 = vmatprep.mubr.bf16.mxu0 0
      %386 = vmatmul.mubr.bf16.gmra.mrb[0].mxu0 %v329
      %v387 = vpop.f32.mrb[0].mxu0
      %v388 = vadd.f32 %v308, %v387
      %v389 = vpop.f32.mrb[0].mxu0
      %v390 = vpop.f32.mrb[0].mxu0
      %v391 = vadd.f32 %v311, %v390
      %v392 = vpop.f32.mrb[0].mxu0
      %393 = vmatprep.mubr.bf16.mxu0 0
      %394 = vmatmul.mubr.bf16.gmra.mrb[0].mxu0 %v332
      %v395 = vpop.f32.mrb[0].mxu0
      %v396 = vadd.f32 %v316, %v395
      %v397 = vpop.f32.mrb[0].mxu0
      %v398 = vpop.f32.mrb[0].mxu0
      %v399 = vadd.f32 %v319, %v398
      %v400 = vpop.f32.mrb[0].mxu0
      %401 = vdwg.mxu0
      %v402 = vld [vmem:[%s187] sm:$0xf]
      %v403 = vld [vmem:[%s187 + $0x4] sm:$0x1]
      %v404 = vld [vmem:[%s187 + $0x8] sm:$0xf]
      %v405 = vld [vmem:[%s187 + $0xc] sm:$0x1]
      %v406 = vld [vmem:[%s187 + $0x10] sm:$0xf]
      %v407 = vld [vmem:[%s187 + $0x14] sm:$0x1]
      %v408 = vld [vmem:[%s187 + $0x18] sm:$0xf]
      %v409 = vld [vmem:[%s187 + $0x1c] sm:$0x1]
      %v410 = vld [vmem:[%s187 + $0x20] sm:$0xf]
      %v411 = vld [vmem:[%s187 + $0x24] sm:$0x1]
      %v412 = vld [vmem:[%s187 + $0x28] sm:$0xf]
      %v413 = vld [vmem:[%s187 + $0x2c] sm:$0x1]
      %v414 = vld [vmem:[%s187 + $0x30] sm:$0xf]
      %v415 = vld [vmem:[%s187 + $0x34] sm:$0x1]
      %v416 = vld [vmem:[%s187 + $0x38] sm:$0xf]
      %v417 = vld [vmem:[%s187 + $0x3c] sm:$0x1]
      %vm418 = vsmask.f32 3328
      %vm419 = vsmask.f32 7440
      %vm420 = vmor %vm418, %vm419
      %v422 = vshrl.u32 %v402, 16
      %v424 = vrot.slane %v422, 4
      %v425 = vshll.u32 %v402, 16
      %v427 = vrot.slane %v425, 5
      %v428 = vor.u32 %v424, %v427
      %v429 = vrot.slane %v428, 4
      %v431 = vshll.u32 %v403, 16
      %v433 = vrot.slane %v431, 5
      %v434 = vsel %vm420, %v429, %v433
      %v436 = vshrl.u32 %v404, 16
      %v438 = vrot.slane %v436, 4
      %v439 = vshll.u32 %v404, 16
      %v441 = vrot.slane %v439, 5
      %v442 = vor.u32 %v438, %v441
      %v443 = vrot.slane %v442, 4
      %v445 = vshll.u32 %v405, 16
      %v447 = vrot.slane %v445, 5
      %v448 = vsel %vm420, %v443, %v447
      %v450 = vshrl.u32 %v406, 16
      %v452 = vrot.slane %v450, 4
      %v453 = vshll.u32 %v406, 16
      %v455 = vrot.slane %v453, 5
      %v456 = vor.u32 %v452, %v455
      %v457 = vrot.slane %v456, 4
      %v459 = vshll.u32 %v407, 16
      %v461 = vrot.slane %v459, 5
      %v462 = vsel %vm420, %v457, %v461
      %v464 = vshrl.u32 %v408, 16
      %v466 = vrot.slane %v464, 4
      %v467 = vshll.u32 %v408, 16
      %v469 = vrot.slane %v467, 5
      %v470 = vor.u32 %v466, %v469
      %v471 = vrot.slane %v470, 4
      %v473 = vshll.u32 %v409, 16
      %v475 = vrot.slane %v473, 5
      %v476 = vsel %vm420, %v471, %v475
      %v478 = vshrl.u32 %v410, 16
      %v480 = vrot.slane %v478, 4
      %v481 = vshll.u32 %v410, 16
      %v483 = vrot.slane %v481, 5
      %v484 = vor.u32 %v480, %v483
      %v485 = vrot.slane %v484, 4
      %v487 = vshll.u32 %v411, 16
      %v489 = vrot.slane %v487, 5
      %v490 = vsel %vm420, %v485, %v489
      %v492 = vshrl.u32 %v412, 16
      %v494 = vrot.slane %v492, 4
      %v495 = vshll.u32 %v412, 16
      %v497 = vrot.slane %v495, 5
      %v498 = vor.u32 %v494, %v497
      %v499 = vrot.slane %v498, 4
      %v501 = vshll.u32 %v413, 16
      %v503 = vrot.slane %v501, 5
      %v504 = vsel %vm420, %v499, %v503
      %v506 = vshrl.u32 %v414, 16
      %v508 = vrot.slane %v506, 4
      %v509 = vshll.u32 %v414, 16
      %v511 = vrot.slane %v509, 5
      %v512 = vor.u32 %v508, %v511
      %v513 = vrot.slane %v512, 4
      %v515 = vshll.u32 %v415, 16
      %v517 = vrot.slane %v515, 5
      %v518 = vsel %vm420, %v513, %v517
      %v520 = vshrl.u32 %v416, 16
      %v522 = vrot.slane %v520, 4
      %v523 = vshll.u32 %v416, 16
      %v525 = vrot.slane %v523, 5
      %v526 = vor.u32 %v522, %v525
      %v527 = vrot.slane %v526, 4
      %v529 = vshll.u32 %v417, 16
      %v531 = vrot.slane %v529, 5
      %v532 = vsel %vm420, %v527, %v531
      %s533 = scalar_lea.vmem %s1, 4
      %v534 = vld [vmem:[%s533] sm:$0x3]
      %v535 = vunpack.c.l.b16 %v434
      %v536 = vunpack.c.l.b16 %v448
      %v537 = vunpack.c.l.b16 %v462
      %v538 = vunpack.c.l.b16 %v476
      %v539 = vunpack.c.l.b16 %v490
      %v540 = vunpack.c.l.b16 %v504
      %v541 = vunpack.c.l.b16 %v518
      %v542 = vunpack.c.l.b16 %v532
      %v543 = vpack.c.b16 %v536, %v535
      %v544 = vpack.c.b16 %v538, %v537
      %v545 = vpack.c.b16 %v540, %v539
      %v546 = vpack.c.b16 %v542, %v541
      %v548 = vsel %vm240, %v543, 0
      %v551 = vsel %vm240, %v544, 0
      %v554 = vsel %vm240, %v545, 0
      %v557 = vsel %vm240, %v546, 0
      %v560 = vsel %vm253, %v534, 0
      %562 = vmatprep.subr.bf16.mxu0 0
      %563 = vmatpush1.bf16.msra.mxu0 %v560
      %564 = vmatprep.subr.bf16.mxu0 0
      %565 = vmatpush1.bf16.msra.mxu0 0
      %566 = vmatprep.subr.bf16.mxu0 0
      %567 = vmatpush1.bf16.msra.mxu0 0
      %568 = vmatprep.subr.bf16.mxu0 0
      %569 = vmatpush1.bf16.msra.mxu0 0
      %570 = vmatprep.subr.bf16.mxu0 0
      %571 = vmatpush1.bf16.msra.mxu0 0
      %572 = vmatprep.subr.bf16.mxu0 0
      %573 = vmatpush1.bf16.msra.mxu0 0
      %574 = vmatprep.subr.bf16.mxu0 0
      %575 = vmatpush1.bf16.msra.mxu0 0
      %576 = vmatprep.subr.bf16.mxu0 0
      %577 = vmatpush1.bf16.msra.mxu0 0
      %578 = vmatprep.subr.bf16.mxu0 0
      %579 = vmatpush1.bf16.msra.mxu0 0
      %580 = vmatprep.subr.bf16.mxu0 0
      %581 = vmatpush1.bf16.msra.mxu0 0
      %582 = vmatprep.subr.bf16.mxu0 0
      %583 = vmatpush1.bf16.msra.mxu0 0
      %584 = vmatprep.subr.bf16.mxu0 0
      %585 = vmatpush1.bf16.msra.mxu0 0
      %586 = vmatprep.subr.bf16.mxu0 0
      %587 = vmatpush1.bf16.msra.mxu0 0
      %588 = vmatprep.subr.bf16.mxu0 0
      %589 = vmatpush1.bf16.msra.mxu0 0
      %590 = vmatprep.subr.bf16.mxu0 0
      %591 = vmatpush1.bf16.msra.mxu0 0
      %592 = vmatprep.subr.bf16.mxu0 0
      %593 = vmatpush1.bf16.msra.mxu0 0
      %594 = vmatprep.mubr.bf16.mxu0 0
      %595 = vmatmul.mubr.bf16.gmra.mrb[0].mxu0 %v548
      %v596 = vpop.f32.mrb[0].mxu0
      %v597 = vadd.f32 0.0, %v596
      %v598 = vpop.f32.mrb[0].mxu0
      %v599 = vpop.f32.mrb[0].mxu0
      %v600 = vadd.f32 0.0, %v599
      %v601 = vpop.f32.mrb[0].mxu0
      %602 = vmatprep.mubr.bf16.mxu0 0
      %603 = vmatmul.mubr.bf16.gmra.mrb[0].mxu0 %v551
      %v604 = vpop.f32.mrb[0].mxu0
      %v605 = vadd.f32 0.0, %v604
      %v606 = vpop.f32.mrb[0].mxu0
      %v607 = vpop.f32.mrb[0].mxu0
      %v608 = vadd.f32 0.0, %v607
      %v609 = vpop.f32.mrb[0].mxu0
      %610 = vmatprep.mubr.bf16.mxu0 0
      %611 = vmatmul.mubr.bf16.gmra.mrb[0].mxu0 %v554
      %v612 = vpop.f32.mrb[0].mxu0
      %v613 = vadd.f32 0.0, %v612
      %v614 = vpop.f32.mrb[0].mxu0
      %v615 = vpop.f32.mrb[0].mxu0
      %v616 = vadd.f32 0.0, %v615
      %v617 = vpop.f32.mrb[0].mxu0
      %618 = vmatprep.mubr.bf16.mxu0 0
      %619 = vmatmul.mubr.bf16.gmra.mrb[0].mxu0 %v557
      %v620 = vpop.f32.mrb[0].mxu0
      %v621 = vadd.f32 0.0, %v620
      %v622 = vpop.f32.mrb[0].mxu0
      %v623 = vpop.f32.mrb[0].mxu0
      %v624 = vadd.f32 0.0, %v623
      %v625 = vpop.f32.mrb[0].mxu0
      %626 = vdwg.mxu0
      %v627 = vadd.f32 %v372, %v597
      %v628 = vadd.f32 %v375, %v600
      %v629 = vadd.f32 %v380, %v605
      %v630 = vadd.f32 %v383, %v608
      %v631 = vadd.f32 %v388, %v613
      %v632 = vadd.f32 %v391, %v616
      %v633 = vadd.f32 %v396, %v621
      %v634 = vadd.f32 %v399, %v624
      %s635 = scalar_lea.vmem %s1, 6
      %v636 = vld [vmem:[%s635] sm:$0x3]
      %637 = vrot.lane.b32.xlu0 %v228, 120
      %v638 = vpop.permute.xlu0 %637
      %639 = vrot.lane.b32.xlu0 %v229, 120
      %v640 = vpop.permute.xlu0 %639
      %641 = vrot.lane.b32.xlu0 %v230, 120
      %v642 = vpop.permute.xlu0 %641
      %643 = vrot.lane.b32.xlu0 %v231, 120
      %v644 = vpop.permute.xlu0 %643
      %v646 = vsel %vm240, %v638, 0
      %v649 = vsel %vm240, %v640, 0
      %v652 = vsel %vm240, %v642, 0
      %v655 = vsel %vm240, %v644, 0
      %v658 = vsel %vm253, %v636, 0
      %660 = vmatprep.subr.bf16.mxu0 0
      %661 = vmatpush1.bf16.msra.mxu0 %v658
      %662 = vmatprep.subr.bf16.mxu0 0
      %663 = vmatpush1.bf16.msra.mxu0 0
      %664 = vmatprep.subr.bf16.mxu0 0
      %665 = vmatpush1.bf16.msra.mxu0 0
      %666 = vmatprep.subr.bf16.mxu0 0
      %667 = vmatpush1.bf16.msra.mxu0 0
      %668 = vmatprep.subr.bf16.mxu0 0
      %669 = vmatpush1.bf16.msra.mxu0 0
      %670 = vmatprep.subr.bf16.mxu0 0
      %671 = vmatpush1.bf16.msra.mxu0 0
      %672 = vmatprep.subr.bf16.mxu0 0
      %673 = vmatpush1.bf16.msra.mxu0 0
      %674 = vmatprep.subr.bf16.mxu0 0
      %675 = vmatpush1.bf16.msra.mxu0 0
      %676 = vmatprep.subr.bf16.mxu0 0
      %677 = vmatpush1.bf16.msra.mxu0 0
      %678 = vmatprep.subr.bf16.mxu0 0
      %679 = vmatpush1.bf16.msra.mxu0 0
      %680 = vmatprep.subr.bf16.mxu0 0
      %681 = vmatpush1.bf16.msra.mxu0 0
      %682 = vmatprep.subr.bf16.mxu0 0
      %683 = vmatpush1.bf16.msra.mxu0 0
      %684 = vmatprep.subr.bf16.mxu0 0
      %685 = vmatpush1.bf16.msra.mxu0 0
      %686 = vmatprep.subr.bf16.mxu0 0
      %687 = vmatpush1.bf16.msra.mxu0 0
      %688 = vmatprep.subr.bf16.mxu0 0
      %689 = vmatpush1.bf16.msra.mxu0 0
      %690 = vmatprep.subr.bf16.mxu0 0
      %691 = vmatpush1.bf16.msra.mxu0 0
      %692 = vmatprep.mubr.bf16.mxu0 0
      %693 = vmatmul.mubr.bf16.gmra.mrb[0].mxu0 %v646
      %v694 = vpop.f32.mrb[0].mxu0
      %v695 = vadd.f32 0.0, %v694
      %v696 = vpop.f32.mrb[0].mxu0
      %v697 = vpop.f32.mrb[0].mxu0
      %v698 = vadd.f32 0.0, %v697
      %v699 = vpop.f32.mrb[0].mxu0
      %700 = vmatprep.mubr.bf16.mxu0 0
      %701 = vmatmul.mubr.bf16.gmra.mrb[0].mxu0 %v649
      %v702 = vpop.f32.mrb[0].mxu0
      %v703 = vadd.f32 0.0, %v702
      %v704 = vpop.f32.mrb[0].mxu0
      %v705 = vpop.f32.mrb[0].mxu0
      %v706 = vadd.f32 0.0, %v705
      %v707 = vpop.f32.mrb[0].mxu0
      %708 = vmatprep.mubr.bf16.mxu0 0
      %709 = vmatmul.mubr.bf16.gmra.mrb[0].mxu0 %v652
      %v710 = vpop.f32.mrb[0].mxu0
      %v711 = vadd.f32 0.0, %v710
      %v712 = vpop.f32.mrb[0].mxu0
      %v713 = vpop.f32.mrb[0].mxu0
      %v714 = vadd.f32 0.0, %v713
      %v715 = vpop.f32.mrb[0].mxu0
      %716 = vmatprep.mubr.bf16.mxu0 0
      %717 = vmatmul.mubr.bf16.gmra.mrb[0].mxu0 %v655
      %v718 = vpop.f32.mrb[0].mxu0
      %v719 = vadd.f32 0.0, %v718
      %v720 = vpop.f32.mrb[0].mxu0
      %v721 = vpop.f32.mrb[0].mxu0
      %v722 = vadd.f32 0.0, %v721
      %v723 = vpop.f32.mrb[0].mxu0
      %724 = vdwg.mxu0
      %v725 = vadd.f32 %v627, %v695
      %v726 = vadd.f32 %v628, %v698
      %v727 = vadd.f32 %v629, %v703
      %v728 = vadd.f32 %v630, %v706
      %v729 = vadd.f32 %v631, %v711
      %v730 = vadd.f32 %v632, %v714
      %v731 = vadd.f32 %v633, %v719
      %v732 = vadd.f32 %v634, %v722
      %s733 = scalar_lea.vmem %s1, 8
      %v734 = vld [vmem:[%s733] sm:$0x3]
      %735 = vrot.lane.b32.xlu0 %v228, 116
      %v736 = vpop.permute.xlu0 %735
      %737 = vrot.lane.b32.xlu0 %v229, 116
      %v738 = vpop.permute.xlu0 %737
      %739 = vrot.lane.b32.xlu0 %v230, 116
      %v740 = vpop.permute.xlu0 %739
      %741 = vrot.lane.b32.xlu0 %v231, 116
      %v742 = vpop.permute.xlu0 %741
      %v744 = vsel %vm240, %v736, 0
      %v747 = vsel %vm240, %v738, 0
      %v750 = vsel %vm240, %v740, 0
      %v753 = vsel %vm240, %v742, 0
      %v756 = vsel %vm253, %v734, 0
      %758 = vmatprep.subr.bf16.mxu0 0
      %759 = vmatpush1.bf16.msra.mxu0 %v756
      %760 = vmatprep.subr.bf16.mxu0 0
      %761 = vmatpush1.bf16.msra.mxu0 0
      %762 = vmatprep.subr.bf16.mxu0 0
      %763 = vmatpush1.bf16.msra.mxu0 0
      %764 = vmatprep.subr.bf16.mxu0 0
      %765 = vmatpush1.bf16.msra.mxu0 0
      %766 = vmatprep.subr.bf16.mxu0 0
      %767 = vmatpush1.bf16.msra.mxu0 0
      %768 = vmatprep.subr.bf16.mxu0 0
      %769 = vmatpush1.bf16.msra.mxu0 0
      %770 = vmatprep.subr.bf16.mxu0 0
      %771 = vmatpush1.bf16.msra.mxu0 0
      %772 = vmatprep.subr.bf16.mxu0 0
      %773 = vmatpush1.bf16.msra.mxu0 0
      %774 = vmatprep.subr.bf16.mxu0 0
      %775 = vmatpush1.bf16.msra.mxu0 0
      %776 = vmatprep.subr.bf16.mxu0 0
      %777 = vmatpush1.bf16.msra.mxu0 0
      %778 = vmatprep.subr.bf16.mxu0 0
      %779 = vmatpush1.bf16.msra.mxu0 0
      %780 = vmatprep.subr.bf16.mxu0 0
      %781 = vmatpush1.bf16.msra.mxu0 0
      %782 = vmatprep.subr.bf16.mxu0 0
      %783 = vmatpush1.bf16.msra.mxu0 0
      %784 = vmatprep.subr.bf16.mxu0 0
      %785 = vmatpush1.bf16.msra.mxu0 0
      %786 = vmatprep.subr.bf16.mxu0 0
      %787 = vmatpush1.bf16.msra.mxu0 0
      %788 = vmatprep.subr.bf16.mxu0 0
      %789 = vmatpush1.bf16.msra.mxu0 0
      %790 = vmatprep.mubr.bf16.mxu0 0
      %791 = vmatmul.mubr.bf16.gmra.mrb[0].mxu0 %v744
      %v792 = vpop.f32.mrb[0].mxu0
      %v793 = vadd.f32 0.0, %v792
      %v794 = vpop.f32.mrb[0].mxu0
      %v795 = vpop.f32.mrb[0].mxu0
      %v796 = vadd.f32 0.0, %v795
      %v797 = vpop.f32.mrb[0].mxu0
      %798 = vmatprep.mubr.bf16.mxu0 0
      %799 = vmatmul.mubr.bf16.gmra.mrb[0].mxu0 %v747
      %v800 = vpop.f32.mrb[0].mxu0
      %v801 = vadd.f32 0.0, %v800
      %v802 = vpop.f32.mrb[0].mxu0
      %v803 = vpop.f32.mrb[0].mxu0
      %v804 = vadd.f32 0.0, %v803
      %v805 = vpop.f32.mrb[0].mxu0
      %806 = vmatprep.mubr.bf16.mxu0 0
      %807 = vmatmul.mubr.bf16.gmra.mrb[0].mxu0 %v750
      %v808 = vpop.f32.mrb[0].mxu0
      %v809 = vadd.f32 0.0, %v808
      %v810 = vpop.f32.mrb[0].mxu0
      %v811 = vpop.f32.mrb[0].mxu0
      %v812 = vadd.f32 0.0, %v811
      %v813 = vpop.f32.mrb[0].mxu0
      %814 = vmatprep.mubr.bf16.mxu0 0
      %815 = vmatmul.mubr.bf16.gmra.mrb[0].mxu0 %v753
      %v816 = vpop.f32.mrb[0].mxu0
      %v817 = vadd.f32 0.0, %v816
      %v818 = vpop.f32.mrb[0].mxu0
      %v819 = vpop.f32.mrb[0].mxu0
      %v820 = vadd.f32 0.0, %v819
      %v821 = vpop.f32.mrb[0].mxu0
      %822 = vdwg.mxu0
      %v823 = vadd.f32 %v725, %v793
      %v824 = vadd.f32 %v726, %v796
      %v825 = vadd.f32 %v727, %v801
      %v826 = vadd.f32 %v728, %v804
      %v827 = vadd.f32 %v729, %v809
      %v828 = vadd.f32 %v730, %v812
      %v829 = vadd.f32 %v731, %v817
      %v830 = vadd.f32 %v732, %v820
      %s831 = scalar_lea.vmem %s1, 10
      %v832 = vld [vmem:[%s831] sm:$0x3]
      %833 = vrot.lane.b32.xlu0 %v543, 120
      %v834 = vpop.permute.xlu0 %833
      %835 = vrot.lane.b32.xlu0 %v544, 120
      %v836 = vpop.permute.xlu0 %835
      %837 = vrot.lane.b32.xlu0 %v545, 120
      %v838 = vpop.permute.xlu0 %837
      %839 = vrot.lane.b32.xlu0 %v546, 120
      %v840 = vpop.permute.xlu0 %839
      %v842 = vsel %vm240, %v834, 0
      %v845 = vsel %vm240, %v836, 0
      %v848 = vsel %vm240, %v838, 0
      %v851 = vsel %vm240, %v840, 0
      %v854 = vsel %vm253, %v832, 0
      %856 = vmatprep.subr.bf16.mxu0 0
      %857 = vmatpush1.bf16.msra.mxu0 %v854
      %858 = vmatprep.subr.bf16.mxu0 0
      %859 = vmatpush1.bf16.msra.mxu0 0
      %860 = vmatprep.subr.bf16.mxu0 0
      %861 = vmatpush1.bf16.msra.mxu0 0
      %862 = vmatprep.subr.bf16.mxu0 0
      %863 = vmatpush1.bf16.msra.mxu0 0
      %864 = vmatprep.subr.bf16.mxu0 0
      %865 = vmatpush1.bf16.msra.mxu0 0
      %866 = vmatprep.subr.bf16.mxu0 0
      %867 = vmatpush1.bf16.msra.mxu0 0
      %868 = vmatprep.subr.bf16.mxu0 0
      %869 = vmatpush1.bf16.msra.mxu0 0
      %870 = vmatprep.subr.bf16.mxu0 0
      %871 = vmatpush1.bf16.msra.mxu0 0
      %872 = vmatprep.subr.bf16.mxu0 0
      %873 = vmatpush1.bf16.msra.mxu0 0
      %874 = vmatprep.subr.bf16.mxu0 0
      %875 = vmatpush1.bf16.msra.mxu0 0
      %876 = vmatprep.subr.bf16.mxu0 0
      %877 = vmatpush1.bf16.msra.mxu0 0
      %878 = vmatprep.subr.bf16.mxu0 0
      %879 = vmatpush1.bf16.msra.mxu0 0
      %880 = vmatprep.subr.bf16.mxu0 0
      %881 = vmatpush1.bf16.msra.mxu0 0
      %882 = vmatprep.subr.bf16.mxu0 0
      %883 = vmatpush1.bf16.msra.mxu0 0
      %884 = vmatprep.subr.bf16.mxu0 0
      %885 = vmatpush1.bf16.msra.mxu0 0
      %886 = vmatprep.subr.bf16.mxu0 0
      %887 = vmatpush1.bf16.msra.mxu0 0
      %888 = vmatprep.mubr.bf16.mxu0 0
      %889 = vmatmul.mubr.bf16.gmra.mrb[0].mxu0 %v842
      %v890 = vpop.f32.mrb[0].mxu0
      %v891 = vadd.f32 0.0, %v890
      %v892 = vpop.f32.mrb[0].mxu0
      %v893 = vpop.f32.mrb[0].mxu0
      %v894 = vadd.f32 0.0, %v893
      %v895 = vpop.f32.mrb[0].mxu0
      %896 = vmatprep.mubr.bf16.mxu0 0
      %897 = vmatmul.mubr.bf16.gmra.mrb[0].mxu0 %v845
      %v898 = vpop.f32.mrb[0].mxu0
      %v899 = vadd.f32 0.0, %v898
      %v900 = vpop.f32.mrb[0].mxu0
      %v901 = vpop.f32.mrb[0].mxu0
      %v902 = vadd.f32 0.0, %v901
      %v903 = vpop.f32.mrb[0].mxu0
      %904 = vmatprep.mubr.bf16.mxu0 0
      %905 = vmatmul.mubr.bf16.gmra.mrb[0].mxu0 %v848
      %v906 = vpop.f32.mrb[0].mxu0
      %v907 = vadd.f32 0.0, %v906
      %v908 = vpop.f32.mrb[0].mxu0
      %v909 = vpop.f32.mrb[0].mxu0
      %v910 = vadd.f32 0.0, %v909
      %v911 = vpop.f32.mrb[0].mxu0
      %912 = vmatprep.mubr.bf16.mxu0 0
      %913 = vmatmul.mubr.bf16.gmra.mrb[0].mxu0 %v851
      %v914 = vpop.f32.mrb[0].mxu0
      %v915 = vadd.f32 0.0, %v914
      %v916 = vpop.f32.mrb[0].mxu0
      %v917 = vpop.f32.mrb[0].mxu0
      %v918 = vadd.f32 0.0, %v917
      %v919 = vpop.f32.mrb[0].mxu0
      %920 = vdwg.mxu0
      %v921 = vadd.f32 %v823, %v891
      %v922 = vadd.f32 %v824, %v894
      %v923 = vadd.f32 %v825, %v899
      %v924 = vadd.f32 %v826, %v902
      %v925 = vadd.f32 %v827, %v907
      %v926 = vadd.f32 %v828, %v910
      %v927 = vadd.f32 %v829, %v915
      %v928 = vadd.f32 %v830, %v918
      %s929 = scalar_lea.vmem %s187, 8
      %v930 = vld [vmem:[%s929] sm:$0xf]
      %v931 = vld [vmem:[%s929 + $0x8] sm:$0xf]
      %v932 = vld [vmem:[%s929 + $0x10] sm:$0xf]
      %v933 = vld [vmem:[%s929 + $0x18] sm:$0xf]
      %v934 = vld [vmem:[%s929 + $0x20] sm:$0xf]
      %v935 = vld [vmem:[%s929 + $0x28] sm:$0xf]
      %v936 = vld [vmem:[%s929 + $0x30] sm:$0xf]
      %v937 = vld [vmem:[%s929 + $0x38] sm:$0xf]
      %s938 = scalar_lea.vmem %s1, 12
      %v939 = vld [vmem:[%s938] sm:$0x3]
      %v948 = vunpack.c.l.b16 %v930
      %v949 = vunpack.c.l.b16 %v931
      %v950 = vunpack.c.l.b16 %v932
      %v951 = vunpack.c.l.b16 %v933
      %v952 = vunpack.c.l.b16 %v934
      %v953 = vunpack.c.l.b16 %v935
      %v954 = vunpack.c.l.b16 %v936
      %v955 = vunpack.c.l.b16 %v937
      %v956 = vpack.c.b16 %v949, %v948
      %v957 = vpack.c.b16 %v951, %v950
      %v958 = vpack.c.b16 %v953, %v952
      %v959 = vpack.c.b16 %v955, %v954
      %v961 = vsel %vm240, %v956, 0
      %v964 = vsel %vm240, %v957, 0
      %v967 = vsel %vm240, %v958, 0
      %v970 = vsel %vm240, %v959, 0
      %v973 = vsel %vm253, %v939, 0
      %975 = vmatprep.subr.bf16.mxu0 0
      %976 = vmatpush1.bf16.msra.mxu0 %v973
      %977 = vmatprep.subr.bf16.mxu0 0
      %978 = vmatpush1.bf16.msra.mxu0 0
      %979 = vmatprep.subr.bf16.mxu0 0
      %980 = vmatpush1.bf16.msra.mxu0 0
      %981 = vmatprep.subr.bf16.mxu0 0
      %982 = vmatpush1.bf16.msra.mxu0 0
      %983 = vmatprep.subr.bf16.mxu0 0
      %984 = vmatpush1.bf16.msra.mxu0 0
      %985 = vmatprep.subr.bf16.mxu0 0
      %986 = vmatpush1.bf16.msra.mxu0 0
      %987 = vmatprep.subr.bf16.mxu0 0
      %988 = vmatpush1.bf16.msra.mxu0 0
      %989 = vmatprep.subr.bf16.mxu0 0
      %990 = vmatpush1.bf16.msra.mxu0 0
      %991 = vmatprep.subr.bf16.mxu0 0
      %992 = vmatpush1.bf16.msra.mxu0 0
      %993 = vmatprep.subr.bf16.mxu0 0
      %994 = vmatpush1.bf16.msra.mxu0 0
      %995 = vmatprep.subr.bf16.mxu0 0
      %996 = vmatpush1.bf16.msra.mxu0 0
      %997 = vmatprep.subr.bf16.mxu0 0
      %998 = vmatpush1.bf16.msra.mxu0 0
      %999 = vmatprep.subr.bf16.mxu0 0
      %1000 = vmatpush1.bf16.msra.mxu0 0
      %1001 = vmatprep.subr.bf16.mxu0 0
      %1002 = vmatpush1.bf16.msra.mxu0 0
      %1003 = vmatprep.subr.bf16.mxu0 0
      %1004 = vmatpush1.bf16.msra.mxu0 0
      %1005 = vmatprep.subr.bf16.mxu0 0
      %1006 = vmatpush1.bf16.msra.mxu0 0
      %1007 = vmatprep.mubr.bf16.mxu0 0
      %1008 = vmatmul.mubr.bf16.gmra.mrb[0].mxu0 %v961
      %v1009 = vpop.f32.mrb[0].mxu0
      %v1010 = vadd.f32 0.0, %v1009
      %v1011 = vpop.f32.mrb[0].mxu0
      %v1012 = vpop.f32.mrb[0].mxu0
      %v1013 = vadd.f32 0.0, %v1012
      %v1014 = vpop.f32.mrb[0].mxu0
      %1015 = vmatprep.mubr.bf16.mxu0 0
      %1016 = vmatmul.mubr.bf16.gmra.mrb[0].mxu0 %v964
      %v1017 = vpop.f32.mrb[0].mxu0
      %v1018 = vadd.f32 0.0, %v1017
      %v1019 = vpop.f32.mrb[0].mxu0
      %v1020 = vpop.f32.mrb[0].mxu0
      %v1021 = vadd.f32 0.0, %v1020
      %v1022 = vpop.f32.mrb[0].mxu0
      %1023 = vmatprep.mubr.bf16.mxu0 0
      %1024 = vmatmul.mubr.bf16.gmra.mrb[0].mxu0 %v967
      %v1025 = vpop.f32.mrb[0].mxu0
      %v1026 = vadd.f32 0.0, %v1025
      %v1027 = vpop.f32.mrb[0].mxu0
      %v1028 = vpop.f32.mrb[0].mxu0
      %v1029 = vadd.f32 0.0, %v1028
      %v1030 = vpop.f32.mrb[0].mxu0
      %1031 = vmatprep.mubr.bf16.mxu0 0
      %1032 = vmatmul.mubr.bf16.gmra.mrb[0].mxu0 %v970
      %v1033 = vpop.f32.mrb[0].mxu0
      %v1034 = vadd.f32 0.0, %v1033
      %v1035 = vpop.f32.mrb[0].mxu0
      %v1036 = vpop.f32.mrb[0].mxu0
      %v1037 = vadd.f32 0.0, %v1036
      %v1038 = vpop.f32.mrb[0].mxu0
      %1039 = vdwg.mxu0
      %v1040 = vadd.f32 %v921, %v1010
      %v1041 = vadd.f32 %v922, %v1013
      %v1042 = vadd.f32 %v923, %v1018
      %v1043 = vadd.f32 %v924, %v1021
      %v1044 = vadd.f32 %v925, %v1026
      %v1045 = vadd.f32 %v926, %v1029
      %v1046 = vadd.f32 %v927, %v1034
      %v1047 = vadd.f32 %v928, %v1037
      %s1048 = scalar_lea.vmem %s1, 14
      %v1049 = vld [vmem:[%s1048] sm:$0x3]
      %1050 = vrot.lane.b32.xlu0 %v956, 124
      %v1051 = vpop.permute.xlu0 %1050
      %1052 = vrot.lane.b32.xlu0 %v957, 124
      %v1053 = vpop.permute.xlu0 %1052
      %1054 = vrot.lane.b32.xlu0 %v958, 124
      %v1055 = vpop.permute.xlu0 %1054
      %1056 = vrot.lane.b32.xlu0 %v959, 124
      %v1057 = vpop.permute.xlu0 %1056
      %v1059 = vsel %vm240, %v1051, 0
      %v1062 = vsel %vm240, %v1053, 0
      %v1065 = vsel %vm240, %v1055, 0
      %v1068 = vsel %vm240, %v1057, 0
      %v1071 = vsel %vm253, %v1049, 0
      %1073 = vmatprep.subr.bf16.mxu0 0
      %1074 = vmatpush1.bf16.msra.mxu0 %v1071
      %1075 = vmatprep.subr.bf16.mxu0 0
      %1076 = vmatpush1.bf16.msra.mxu0 0
      %1077 = vmatprep.subr.bf16.mxu0 0
      %1078 = vmatpush1.bf16.msra.mxu0 0
      %1079 = vmatprep.subr.bf16.mxu0 0
      %1080 = vmatpush1.bf16.msra.mxu0 0
      %1081 = vmatprep.subr.bf16.mxu0 0
      %1082 = vmatpush1.bf16.msra.mxu0 0
      %1083 = vmatprep.subr.bf16.mxu0 0
      %1084 = vmatpush1.bf16.msra.mxu0 0
      %1085 = vmatprep.subr.bf16.mxu0 0
      %1086 = vmatpush1.bf16.msra.mxu0 0
      %1087 = vmatprep.subr.bf16.mxu0 0
      %1088 = vmatpush1.bf16.msra.mxu0 0
      %1089 = vmatprep.subr.bf16.mxu0 0
      %1090 = vmatpush1.bf16.msra.mxu0 0
      %1091 = vmatprep.subr.bf16.mxu0 0
      %1092 = vmatpush1.bf16.msra.mxu0 0
      %1093 = vmatprep.subr.bf16.mxu0 0
      %1094 = vmatpush1.bf16.msra.mxu0 0
      %1095 = vmatprep.subr.bf16.mxu0 0
      %1096 = vmatpush1.bf16.msra.mxu0 0
      %1097 = vmatprep.subr.bf16.mxu0 0
      %1098 = vmatpush1.bf16.msra.mxu0 0
      %1099 = vmatprep.subr.bf16.mxu0 0
      %1100 = vmatpush1.bf16.msra.mxu0 0
      %1101 = vmatprep.subr.bf16.mxu0 0
      %1102 = vmatpush1.bf16.msra.mxu0 0
      %1103 = vmatprep.subr.bf16.mxu0 0
      %1104 = vmatpush1.bf16.msra.mxu0 0
      %1105 = vmatprep.mubr.bf16.mxu0 0
      %1106 = vmatmul.mubr.bf16.gmra.mrb[0].mxu0 %v1059
      %v1107 = vpop.f32.mrb[0].mxu0
      %v1108 = vadd.f32 0.0, %v1107
      %v1109 = vpop.f32.mrb[0].mxu0
      %v1110 = vpop.f32.mrb[0].mxu0
      %v1111 = vadd.f32 0.0, %v1110
      %v1112 = vpop.f32.mrb[0].mxu0
      %1113 = vmatprep.mubr.bf16.mxu0 0
      %1114 = vmatmul.mubr.bf16.gmra.mrb[0].mxu0 %v1062
      %v1115 = vpop.f32.mrb[0].mxu0
      %v1116 = vadd.f32 0.0, %v1115
      %v1117 = vpop.f32.mrb[0].mxu0
      %v1118 = vpop.f32.mrb[0].mxu0
      %v1119 = vadd.f32 0.0, %v1118
      %v1120 = vpop.f32.mrb[0].mxu0
      %1121 = vmatprep.mubr.bf16.mxu0 0
      %1122 = vmatmul.mubr.bf16.gmra.mrb[0].mxu0 %v1065
      %v1123 = vpop.f32.mrb[0].mxu0
      %v1124 = vadd.f32 0.0, %v1123
      %v1125 = vpop.f32.mrb[0].mxu0
      %v1126 = vpop.f32.mrb[0].mxu0
      %v1127 = vadd.f32 0.0, %v1126
      %v1128 = vpop.f32.mrb[0].mxu0
      %1129 = vmatprep.mubr.bf16.mxu0 0
      %1130 = vmatmul.mubr.bf16.gmra.mrb[0].mxu0 %v1068
      %v1131 = vpop.f32.mrb[0].mxu0
      %v1132 = vadd.f32 0.0, %v1131
      %v1133 = vpop.f32.mrb[0].mxu0
      %v1134 = vpop.f32.mrb[0].mxu0
      %v1135 = vadd.f32 0.0, %v1134
      %v1136 = vpop.f32.mrb[0].mxu0
      %1137 = vdwg.mxu0
      %v1138 = vadd.f32 %v1040, %v1108
      %v1139 = vadd.f32 %v1041, %v1111
      %v1140 = vadd.f32 %v1042, %v1116
      %v1141 = vadd.f32 %v1043, %v1119
      %v1142 = vadd.f32 %v1044, %v1124
      %v1143 = vadd.f32 %v1045, %v1127
      %v1144 = vadd.f32 %v1046, %v1132
      %v1145 = vadd.f32 %v1047, %v1135
      %v1146 = vld [vmem:[%s929] sm:$0xf]
      %v1147 = vld [vmem:[%s929 + $0x4] sm:$0x1]
      %v1148 = vld [vmem:[%s929 + $0x8] sm:$0xf]
      %v1149 = vld [vmem:[%s929 + $0xc] sm:$0x1]
      %v1150 = vld [vmem:[%s929 + $0x10] sm:$0xf]
      %v1151 = vld [vmem:[%s929 + $0x14] sm:$0x1]
      %v1152 = vld [vmem:[%s929 + $0x18] sm:$0xf]
      %v1153 = vld [vmem:[%s929 + $0x1c] sm:$0x1]
      %v1154 = vld [vmem:[%s929 + $0x20] sm:$0xf]
      %v1155 = vld [vmem:[%s929 + $0x24] sm:$0x1]
      %v1156 = vld [vmem:[%s929 + $0x28] sm:$0xf]
      %v1157 = vld [vmem:[%s929 + $0x2c] sm:$0x1]
      %v1158 = vld [vmem:[%s929 + $0x30] sm:$0xf]
      %v1159 = vld [vmem:[%s929 + $0x34] sm:$0x1]
      %v1160 = vld [vmem:[%s929 + $0x38] sm:$0xf]
      %v1161 = vld [vmem:[%s929 + $0x3c] sm:$0x1]
      %v1163 = vshrl.u32 %v1146, 16
      %v1165 = vrot.slane %v1163, 4
      %v1166 = vshll.u32 %v1146, 16
      %v1168 = vrot.slane %v1166, 5
      %v1169 = vor.u32 %v1165, %v1168
      %v1170 = vrot.slane %v1169, 4
      %v1172 = vshll.u32 %v1147, 16
      %v1174 = vrot.slane %v1172, 5
      %v1175 = vsel %vm420, %v1170, %v1174
      %v1177 = vshrl.u32 %v1148, 16
      %v1179 = vrot.slane %v1177, 4
      %v1180 = vshll.u32 %v1148, 16
      %v1182 = vrot.slane %v1180, 5
      %v1183 = vor.u32 %v1179, %v1182
      %v1184 = vrot.slane %v1183, 4
      %v1186 = vshll.u32 %v1149, 16
      %v1188 = vrot.slane %v1186, 5
      %v1189 = vsel %vm420, %v1184, %v1188
      %v1191 = vshrl.u32 %v1150, 16
      %v1193 = vrot.slane %v1191, 4
      %v1194 = vshll.u32 %v1150, 16
      %v1196 = vrot.slane %v1194, 5
      %v1197 = vor.u32 %v1193, %v1196
      %v1198 = vrot.slane %v1197, 4
      %v1200 = vshll.u32 %v1151, 16
      %v1202 = vrot.slane %v1200, 5
      %v1203 = vsel %vm420, %v1198, %v1202
      %v1205 = vshrl.u32 %v1152, 16
      %v1207 = vrot.slane %v1205, 4
      %v1208 = vshll.u32 %v1152, 16
      %v1210 = vrot.slane %v1208, 5
      %v1211 = vor.u32 %v1207, %v1210
      %v1212 = vrot.slane %v1211, 4
      %v1214 = vshll.u32 %v1153, 16
      %v1216 = vrot.slane %v1214, 5
      %v1217 = vsel %vm420, %v1212, %v1216
      %v1219 = vshrl.u32 %v1154, 16
      %v1221 = vrot.slane %v1219, 4
      %v1222 = vshll.u32 %v1154, 16
      %v1224 = vrot.slane %v1222, 5
      %v1225 = vor.u32 %v1221, %v1224
      %v1226 = vrot.slane %v1225, 4
      %v1228 = vshll.u32 %v1155, 16
      %v1230 = vrot.slane %v1228, 5
      %v1231 = vsel %vm420, %v1226, %v1230
      %v1233 = vshrl.u32 %v1156, 16
      %v1235 = vrot.slane %v1233, 4
      %v1236 = vshll.u32 %v1156, 16
      %v1238 = vrot.slane %v1236, 5
      %v1239 = vor.u32 %v1235, %v1238
      %v1240 = vrot.slane %v1239, 4
      %v1242 = vshll.u32 %v1157, 16
      %v1244 = vrot.slane %v1242, 5
      %v1245 = vsel %vm420, %v1240, %v1244
      %v1247 = vshrl.u32 %v1158, 16
      %v1249 = vrot.slane %v1247, 4
      %v1250 = vshll.u32 %v1158, 16
      %v1252 = vrot.slane %v1250, 5
      %v1253 = vor.u32 %v1249, %v1252
      %v1254 = vrot.slane %v1253, 4
      %v1256 = vshll.u32 %v1159, 16
      %v1258 = vrot.slane %v1256, 5
      %v1259 = vsel %vm420, %v1254, %v1258
      %v1261 = vshrl.u32 %v1160, 16
      %v1263 = vrot.slane %v1261, 4
      %v1264 = vshll.u32 %v1160, 16
      %v1266 = vrot.slane %v1264, 5
      %v1267 = vor.u32 %v1263, %v1266
      %v1268 = vrot.slane %v1267, 4
      %v1270 = vshll.u32 %v1161, 16
      %v1272 = vrot.slane %v1270, 5
      %v1273 = vsel %vm420, %v1268, %v1272
      %s1274 = scalar_lea.vmem %s1, 16
      %v1275 = vld [vmem:[%s1274] sm:$0x3]
      %v1276 = vunpack.c.l.b16 %v1175
      %v1277 = vunpack.c.l.b16 %v1189
      %v1278 = vunpack.c.l.b16 %v1203
      %v1279 = vunpack.c.l.b16 %v1217
      %v1280 = vunpack.c.l.b16 %v1231
      %v1281 = vunpack.c.l.b16 %v1245
      %v1282 = vunpack.c.l.b16 %v1259
      %v1283 = vunpack.c.l.b16 %v1273
      %v1284 = vpack.c.b16 %v1277, %v1276
      %v1285 = vpack.c.b16 %v1279, %v1278
      %v1286 = vpack.c.b16 %v1281, %v1280
      %v1287 = vpack.c.b16 %v1283, %v1282
      %v1289 = vsel %vm240, %v1284, 0
      %v1292 = vsel %vm240, %v1285, 0
      %v1295 = vsel %vm240, %v1286, 0
      %v1298 = vsel %vm240, %v1287, 0
      %v1301 = vsel %vm253, %v1275, 0
      %1303 = vmatprep.subr.bf16.mxu0 0
      %1304 = vmatpush1.bf16.msra.mxu0 %v1301
      %1305 = vmatprep.subr.bf16.mxu0 0
      %1306 = vmatpush1.bf16.msra.mxu0 0
      %1307 = vmatprep.subr.bf16.mxu0 0
      %1308 = vmatpush1.bf16.msra.mxu0 0
      %1309 = vmatprep.subr.bf16.mxu0 0
      %1310 = vmatpush1.bf16.msra.mxu0 0
      %1311 = vmatprep.subr.bf16.mxu0 0
      %1312 = vmatpush1.bf16.msra.mxu0 0
      %1313 = vmatprep.subr.bf16.mxu0 0
      %1314 = vmatpush1.bf16.msra.mxu0 0
      %1315 = vmatprep.subr.bf16.mxu0 0
      %1316 = vmatpush1.bf16.msra.mxu0 0
      %1317 = vmatprep.subr.bf16.mxu0 0
      %1318 = vmatpush1.bf16.msra.mxu0 0
      %1319 = vmatprep.subr.bf16.mxu0 0
      %1320 = vmatpush1.bf16.msra.mxu0 0
      %1321 = vmatprep.subr.bf16.mxu0 0
      %1322 = vmatpush1.bf16.msra.mxu0 0
      %1323 = vmatprep.subr.bf16.mxu0 0
      %1324 = vmatpush1.bf16.msra.mxu0 0
      %1325 = vmatprep.subr.bf16.mxu0 0
      %1326 = vmatpush1.bf16.msra.mxu0 0
      %1327 = vmatprep.subr.bf16.mxu0 0
      %1328 = vmatpush1.bf16.msra.mxu0 0
      %1329 = vmatprep.subr.bf16.mxu0 0
      %1330 = vmatpush1.bf16.msra.mxu0 0
      %1331 = vmatprep.subr.bf16.mxu0 0
      %1332 = vmatpush1.bf16.msra.mxu0 0
      %1333 = vmatprep.subr.bf16.mxu0 0
      %1334 = vmatpush1.bf16.msra.mxu0 0
      %1335 = vmatprep.mubr.bf16.mxu0 0
      %1336 = vmatmul.mubr.bf16.gmra.mrb[0].mxu0 %v1289
      %v1337 = vpop.f32.mrb[0].mxu0
      %v1338 = vadd.f32 0.0, %v1337
      %v1339 = vpop.f32.mrb[0].mxu0
      %v1340 = vpop.f32.mrb[0].mxu0
      %v1341 = vadd.f32 0.0, %v1340
      %v1342 = vpop.f32.mrb[0].mxu0
      %1343 = vmatprep.mubr.bf16.mxu0 0
      %1344 = vmatmul.mubr.bf16.gmra.mrb[0].mxu0 %v1292
      %v1345 = vpop.f32.mrb[0].mxu0
      %v1346 = vadd.f32 0.0, %v1345
      %v1347 = vpop.f32.mrb[0].mxu0
      %v1348 = vpop.f32.mrb[0].mxu0
      %v1349 = vadd.f32 0.0, %v1348
      %v1350 = vpop.f32.mrb[0].mxu0
      %1351 = vmatprep.mubr.bf16.mxu0 0
      %1352 = vmatmul.mubr.bf16.gmra.mrb[0].mxu0 %v1295
      %v1353 = vpop.f32.mrb[0].mxu0
      %v1354 = vadd.f32 0.0, %v1353
      %v1355 = vpop.f32.mrb[0].mxu0
      %v1356 = vpop.f32.mrb[0].mxu0
      %v1357 = vadd.f32 0.0, %v1356
      %v1358 = vpop.f32.mrb[0].mxu0
      %1359 = vmatprep.mubr.bf16.mxu0 0
      %1360 = vmatmul.mubr.bf16.gmra.mrb[0].mxu0 %v1298
      %v1361 = vpop.f32.mrb[0].mxu0
      %v1362 = vadd.f32 0.0, %v1361
      %v1363 = vpop.f32.mrb[0].mxu0
      %v1364 = vpop.f32.mrb[0].mxu0
      %v1365 = vadd.f32 0.0, %v1364
      %v1366 = vpop.f32.mrb[0].mxu0
      %1367 = vdwg.mxu0
      %v1368 = vadd.f32 %v1138, %v1338
      %v1369 = vadd.f32 %v1139, %v1341
      %v1370 = vadd.f32 %v1140, %v1346
      %v1371 = vadd.f32 %v1141, %v1349
      %v1372 = vadd.f32 %v1142, %v1354
      %v1373 = vadd.f32 %v1143, %v1357
      %v1374 = vadd.f32 %v1144, %v1362
      %v1375 = vadd.f32 %v1145, %v1365
      %v1376 = vpack.c.bf16 %v1369, %v1368
      %v1377 = vpack.c.bf16 %v1371, %v1370
      %v1378 = vpack.c.bf16 %v1373, %v1372
      %v1379 = vpack.c.bf16 %v1375, %v1374
      %v1384 = vunpack.c.l.b16 %v1376
      %v1385 = vunpack.c.h.b16 %v1376
      %v1386 = vunpack.c.l.b16 %v1377
      %v1387 = vunpack.c.h.b16 %v1377
      %v1388 = vunpack.c.l.b16 %v1378
      %v1389 = vunpack.c.h.b16 %v1378
      %v1390 = vunpack.c.l.b16 %v1379
      %v1391 = vunpack.c.h.b16 %v1379
      %v1392 = vpack.c.b16 %v1384, %v1384
      %v1393 = vpack.c.b16 %v1385, %v1385
      %v1394 = vpack.c.b16 %v1386, %v1386
      %v1395 = vpack.c.b16 %v1387, %v1387
      %v1396 = vpack.c.b16 %v1388, %v1388
      %v1397 = vpack.c.b16 %v1389, %v1389
      %v1398 = vpack.c.b16 %v1390, %v1390
      %v1399 = vpack.c.b16 %v1391, %v1391
      %vm1408 = vcmask 125952
      %1409 = vst.msk [vmem:[%s192] sm:$0xf] %vm1408, %v1392
      %1410 = vst.msk [vmem:[%s192 + $0x4] sm:$0xf] %vm1408, %v1393
      %1411 = vst.msk [vmem:[%s192 + $0x8] sm:$0xf] %vm1408, %v1394
      %1412 = vst.msk [vmem:[%s192 + $0xc] sm:$0xf] %vm1408, %v1395
      %1413 = vst.msk [vmem:[%s192 + $0x10] sm:$0xf] %vm1408, %v1396
      %1414 = vst.msk [vmem:[%s192 + $0x14] sm:$0xf] %vm1408, %v1397
      %1415 = vst.msk [vmem:[%s192 + $0x18] sm:$0xf] %vm1408, %v1398
      %1416 = vst.msk [vmem:[%s192 + $0x1c] sm:$0xf] %vm1408, %v1399
      %v1417 = vld [vmem:[%s3] sm:$0x1]
      %vm1418 = vcmask 130048
      %v1419 = vsel %vm1418, %v1368, 0.0
      %v1420 = vsel %vm1418, %v1369, 0.0
      %v1421 = vadd.f32 %v1419, %v1420
      %v1422 = vsel %vm1418, %v1370, 0.0
      %v1423 = vadd.f32 %v1421, %v1422
      %v1424 = vsel %vm1418, %v1371, 0.0
      %v1425 = vadd.f32 %v1423, %v1424
      %v1426 = vsel %vm1418, %v1372, 0.0
      %v1427 = vadd.f32 %v1425, %v1426
      %v1428 = vsel %vm1418, %v1373, 0.0
      %v1429 = vadd.f32 %v1427, %v1428
      %v1430 = vsel %vm1418, %v1374, 0.0
      %v1431 = vadd.f32 %v1429, %v1430
      %v1432 = vsel %vm1418, %v1375, 0.0
      %v1433 = vadd.f32 %v1431, %v1432
      %v1434 = vrot.slane %v1433, 4
      %v1435 = vadd.f32 %v1433, %v1434
      %v1436 = vrot.slane %v1435, 2
      %v1437 = vadd.f32 %v1435, %v1436
      %v1438 = vrot.slane %v1437, 1
      %v1439 = vadd.f32 %v1437, %v1438
      %v1440 = vadd.f32 %v1417, %v1439
      %vm1441 = vcmask 122880
      %1442 = vst.msk [vmem:[%s3] sm:$0x1] %vm1441, %v1440
      %v1443 = vld [vmem:[%s4] sm:$0x1]
      %v1444 = vmul.f32 %v1368, %v1368
      %v1445 = vmul.f32 %v1369, %v1369
      %v1446 = vmul.f32 %v1370, %v1370
      %v1447 = vmul.f32 %v1371, %v1371
      %v1448 = vmul.f32 %v1372, %v1372
      %v1449 = vmul.f32 %v1373, %v1373
      %v1450 = vmul.f32 %v1374, %v1374
      %v1451 = vmul.f32 %v1375, %v1375
      %v1452 = vsel %vm1418, %v1444, 0.0
      %v1453 = vsel %vm1418, %v1445, 0.0
      %v1454 = vadd.f32 %v1452, %v1453
      %v1455 = vsel %vm1418, %v1446, 0.0
      %v1456 = vadd.f32 %v1454, %v1455
      %v1457 = vsel %vm1418, %v1447, 0.0
      %v1458 = vadd.f32 %v1456, %v1457
      %v1459 = vsel %vm1418, %v1448, 0.0
      %v1460 = vadd.f32 %v1458, %v1459
      %v1461 = vsel %vm1418, %v1449, 0.0
      %v1462 = vadd.f32 %v1460, %v1461
      %v1463 = vsel %vm1418, %v1450, 0.0
      %v1464 = vadd.f32 %v1462, %v1463
      %v1465 = vsel %vm1418, %v1451, 0.0
      %v1466 = vadd.f32 %v1464, %v1465
      %v1467 = vrot.slane %v1466, 4
      %v1468 = vadd.f32 %v1466, %v1467
      %v1469 = vrot.slane %v1468, 2
      %v1470 = vadd.f32 %v1468, %v1469
      %v1471 = vrot.slane %v1470, 1
      %v1472 = vadd.f32 %v1470, %v1471
      %v1473 = vadd.f32 %v1443, %v1472
      %1474 = vst.msk [vmem:[%s4] sm:$0x1] %vm1441, %v1473
      %p1475 = scmp.lt.s32.totalorder %s16, 1
      %s1476 = scalar_select %p1475, %s16, 1
      %s1477 = smul.addr %s1476, 8
      %s1478 = smul.addr %s1477, 4
      %s1479 = scalar_lea.vmem %s2, %s1478
      // Predicated region
      $region33: #{basic_block_forward.3} parent=27 // pred_check
        %p1480 = pneg %p81
      $region34: #{basic_block_forward.3} parent=27 // pred_check_branch
        %1482 = sbr.rel (%p1480) target = $region36
      $region35: #{basic_block_forward.3} parent=27 // pred_region
        _
      $region36: #{basic_block_forward.3} parent=27 // pred_fallthru
        _
      // Predicated region
      $region37: #{basic_block_forward.3} parent=27 // pred_check
        %p1483 = pneg %p102
      $region38: #{basic_block_forward.3} parent=27 // pred_check_branch
        %1485 = sbr.rel (%p1483) target = $region40
      $region39: #{basic_block_forward.3} parent=27 // pred_region
        _
      $region40: #{basic_block_forward.3} parent=27 // pred_fallthru
        _
      // Predicated region
      $region41: #{basic_block_forward.3} parent=27 // pred_check
        %p1486 = pneg %p123
      $region42: #{basic_block_forward.3} parent=27 // pred_check_branch
        %1488 = sbr.rel (%p1486) target = $region44
      $region43: #{basic_block_forward.3} parent=27 // pred_region
        _
      $region44: #{basic_block_forward.3} parent=27 // pred_fallthru
        _
      // Predicated region
      $region45: #{basic_block_forward.3} parent=27 // pred_check
        %p1489 = pneg %p102
      $region46: #{basic_block_forward.3} parent=27 // pred_check_branch
        %1491 = sbr.rel (%p1489) target = $region48
      $region47: #{basic_block_forward.3} parent=27 // pred_region
        _
      $region48: #{basic_block_forward.3} parent=27 // pred_fallthru
        _
      // Predicated region
      $region49: #{basic_block_forward.3} parent=27 // pred_check
        %p1492 = pneg %p123
      $region50: #{basic_block_forward.3} parent=27 // pred_check_branch
        %1494 = sbr.rel (%p1492) target = $region52
      $region51: #{basic_block_forward.3} parent=27 // pred_region
        _
      $region52: #{basic_block_forward.3} parent=27 // pred_fallthru
        _
    $region28: #{basic_block_forward.3} parent=5 // pred_fallthru
      _
    %p1495 = scmp.le.s32.totalorder 2, %s11
    // Predicated region
    $region53: #{basic_block_forward.3} parent=5 // pred_check
      %p1496 = pneg %p1495
    $region54: #{basic_block_forward.3} parent=5 // pred_check_branch
      %1498 = sbr.rel (%p1496) target = $region56
    $region55: #{basic_block_forward.3} parent=5 // pred_region
      %s1499 = ssub.s32 %s11, 2
      // Predicated region
      $region57: #{basic_block_forward.3} parent=55 // pred_check
        %p1500 = pneg %p87
      $region58: #{basic_block_forward.3} parent=55 // pred_check_branch
        %1502 = sbr.rel (%p1500) target = $region60
      $region59: #{basic_block_forward.3} parent=55 // pred_region
        %p1503 = scmp.lt.s32.totalorder %s17, 1
        %s1504 = scalar_select %p1503, %s17, 1
        %s1505 = smul.addr %s1504, 8
        %s1506 = smul.addr %s1505, 4
        %s1507 = scalar_lea.vmem %s2, %s1506
      $region60: #{basic_block_forward.3} parent=55 // pred_fallthru
        _
    $region56: #{basic_block_forward.3} parent=5 // pred_fallthru
      _
  $region6: #{basic_block_forward.3} parent=0 // loop_footer
    %s15 = sadd.s32 1, %s11
  $region7: #{basic_block_forward.3} parent=0 // loop_footer_branch
    %10 = sbr.rel target = $region3
  $region8: #{basic_block_forward.3} parent=0 // loop_exit
    _

// kernel: basic_block_forward.4
$region0: #{basic_block_forward.4}
  #allocation0 [shape = 'u32[]', space=smem, size = 0x4, offset = 0x4, fixed_abs, tag = 'smem constant byte address 0x4 - core index']
  #allocation1 [shape = 'u32[144,128]{1,0:T(1,128)}', space=vmem, size = 0x12000, scoped, tag = 'internal scratch']
  #allocation2 [shape = 'bf16[1,10,10,16]{3,2,1,0:T(8,128)(2,1)}', space=vmem, size = 0xa000, scoped, tag = 'scratch operand']
  %s0 = inlined_call_operand.vmem [shape: bf16[2,64,16], index: 0, kind: input, shape index: {}]
  %s1 = inlined_call_operand.vmem [shape: f32[1,16], index: 1, kind: input, shape index: {}]
  %s2 = inlined_call_operand.vmem [shape: f32[1,16], index: 2, kind: input, shape index: {}]
  %s3 = inlined_call_operand.vmem [shape: bf16[3,3,16,128], index: 3, kind: input, shape index: {}]
  %s4 = inlined_call_operand.vmem [shape: bf16[2,64,128], index: 4, kind: output, shape index: {0}]
  %s5 = inlined_call_operand.vmem [shape: f32[1,128], index: 5, kind: output, shape index: {1}]
  %s6 = inlined_call_operand.vmem [shape: f32[1,128], index: 6, kind: output, shape index: {2}]
  %7 = xla_tuple %s4, %s5, %s6
  %s8 = sld [smem:[#allocation0]]
  $region69: #{basic_block_forward.4} parent=0
    _
  %s10 = ssub.s32 1, %s8
  %s11 = scalar_select 0, %s10, %s8
  loop: start=0, step=1, limit=4
  $region2: #{basic_block_forward.4} parent=0 // loop_pre_header
    _
  $region3: #{basic_block_forward.4} parent=0 // loop_header
    %s13 = sphi 0, %s17
    %p14 = scmp.ge.s32.totalorder %s13, 4
    %s23 = sphi 0, %s25
    %s26 = sphi 0, %s23
    %s27 = sphi 0, %s26
    %s43 = sphi 0, %s27
    %s47 = sphi 0, %s47
    %s49 = sphi 0, %s47
    %s50 = sphi 0, %s49
    %s64 = sphi 0, %s50
    %s68 = sphi 0, %s68
    %s70 = sphi 0, %s68
    %s71 = sphi 0, %s70
    %s85 = sphi 0, %s71
    %s89 = sphi 0, %s89
    %s91 = sphi 0, %s89
    %s92 = sphi 0, %s91
    %s106 = sphi 0, %s92
    %s112 = sphi 0, %s114
    %s115 = sphi 0, %s112
    %s116 = sphi 0, %s115
    %s132 = sphi 0, %s116
    %s136 = sphi 0, %s136
    %s138 = sphi 0, %s136
    %s139 = sphi 0, %s138
    %s153 = sphi 0, %s139
    %s157 = sphi 0, %s157
    %s159 = sphi 0, %s157
    %s160 = sphi 0, %s159
    %s174 = sphi 0, %s160
  $region4: #{basic_block_forward.4} parent=0 // loop_header_branch
    %16 = sbr.rel (%p14) target = $region8
  $region5: #{basic_block_forward.4} parent=0 // loop_body
    %s18 = ssub.s32 %s13, 1
    %s19 = ssub.s32 %s13, 2
    %s20 = sadd.s32 %s13, 1
    %s21 = ssub.s32 %s13, %s20
    %p22 = scmp.eq.s32.totalorder %s21, 0
    %s24 = sadd.s32 %s23, 1
    %s25 = scalar_select %p22, %s23, %s24
    %p28 = pneg %p22
    %p29 = scmp.eq.s32.totalorder %s13, 1
    %p30 = por %p28, %p29
    %p31 = scmp.ne.s32.totalorder %s23, %s26
    %p32 = scmp.eq.s32.totalorder %s13, 0
    %p33 = por %p31, %p32
    %p34 = scmp.ne.s32.totalorder %s23, %s26
    %p35 = scmp.eq.s32.totalorder %s18, 1
    %p36 = por %p34, %p35
    %p37 = scmp.ne.s32.totalorder %s26, %s27
    %p38 = scmp.eq.s32.totalorder %s18, 0
    %p39 = por %p37, %p38
    %p40 = scmp.ne.s32.totalorder %s26, %s27
    %p41 = scmp.eq.s32.totalorder %s19, 1
    %p42 = por %p40, %p41
    %p44 = scmp.ne.s32.totalorder %s27, %s43
    %p45 = scmp.eq.s32.totalorder %s19, 0
    %p46 = por %p44, %p45
    %s48 = sadd.s32 %s47, 1
    %p51 = scmp.eq.s32.totalorder %s13, 1
    %p52 = scmp.ne.s32.totalorder %s47, %s49
    %p53 = scmp.eq.s32.totalorder %s13, 0
    %p54 = por %p52, %p53
    %p55 = scmp.ne.s32.totalorder %s47, %s49
    %p56 = scmp.eq.s32.totalorder %s18, 1
    %p57 = por %p55, %p56
    %p58 = scmp.ne.s32.totalorder %s49, %s50
    %p59 = scmp.eq.s32.totalorder %s18, 0
    %p60 = por %p58, %p59
    %p61 = scmp.ne.s32.totalorder %s49, %s50
    %p62 = scmp.eq.s32.totalorder %s19, 1
    %p63 = por %p61, %p62
    %p65 = scmp.ne.s32.totalorder %s50, %s64
    %p66 = scmp.eq.s32.totalorder %s19, 0
    %p67 = por %p65, %p66
    %s69 = sadd.s32 %s68, 1
    %p72 = scmp.eq.s32.totalorder %s13, 1
    %p73 = scmp.ne.s32.totalorder %s68, %s70
    %p74 = scmp.eq.s32.totalorder %s13, 0
    %p75 = por %p73, %p74
    %p76 = scmp.ne.s32.totalorder %s68, %s70
    %p77 = scmp.eq.s32.totalorder %s18, 1
    %p78 = por %p76, %p77
    %p79 = scmp.ne.s32.totalorder %s70, %s71
    %p80 = scmp.eq.s32.totalorder %s18, 0
    %p81 = por %p79, %p80
    %p82 = scmp.ne.s32.totalorder %s70, %s71
    %p83 = scmp.eq.s32.totalorder %s19, 1
    %p84 = por %p82, %p83
    %p86 = scmp.ne.s32.totalorder %s71, %s85
    %p87 = scmp.eq.s32.totalorder %s19, 0
    %p88 = por %p86, %p87
    %s90 = sadd.s32 %s89, 1
    %p93 = scmp.eq.s32.totalorder %s13, 1
    %p94 = scmp.ne.s32.totalorder %s89, %s91
    %p95 = scmp.eq.s32.totalorder %s13, 0
    %p96 = por %p94, %p95
    %p97 = scmp.ne.s32.totalorder %s89, %s91
    %p98 = scmp.eq.s32.totalorder %s18, 1
    %p99 = por %p97, %p98
    %p100 = scmp.ne.s32.totalorder %s91, %s92
    %p101 = scmp.eq.s32.totalorder %s18, 0
    %p102 = por %p100, %p101
    %p103 = scmp.ne.s32.totalorder %s91, %s92
    %p104 = scmp.eq.s32.totalorder %s19, 1
    %p105 = por %p103, %p104
    %p107 = scmp.ne.s32.totalorder %s92, %s106
    %p108 = scmp.eq.s32.totalorder %s19, 0
    %p109 = por %p107, %p108
    %s110 = ssub.s32 %s13, %s20
    %p111 = scmp.eq.s32.totalorder %s110, 0
    %s113 = sadd.s32 %s112, 1
    %s114 = scalar_select %p111, %s112, %s113
    %p117 = pneg %p111
    %p118 = scmp.eq.s32.totalorder %s13, 1
    %p119 = por %p117, %p118
    %p120 = scmp.ne.s32.totalorder %s112, %s115
    %p121 = scmp.eq.s32.totalorder %s13, 0
    %p122 = por %p120, %p121
    %p123 = scmp.ne.s32.totalorder %s112, %s115
    %p124 = scmp.eq.s32.totalorder %s18, 1
    %p125 = por %p123, %p124
    %p126 = scmp.ne.s32.totalorder %s115, %s116
    %p127 = scmp.eq.s32.totalorder %s18, 0
    %p128 = por %p126, %p127
    %p129 = scmp.ne.s32.totalorder %s115, %s116
    %p130 = scmp.eq.s32.totalorder %s19, 1
    %p131 = por %p129, %p130
    %p133 = scmp.ne.s32.totalorder %s116, %s132
    %p134 = scmp.eq.s32.totalorder %s19, 0
    %p135 = por %p133, %p134
    %s137 = sadd.s32 %s136, 1
    %p140 = scmp.eq.s32.totalorder %s13, 1
    %p141 = scmp.ne.s32.totalorder %s136, %s138
    %p142 = scmp.eq.s32.totalorder %s13, 0
    %p143 = por %p141, %p142
    %p144 = scmp.ne.s32.totalorder %s136, %s138
    %p145 = scmp.eq.s32.totalorder %s18, 1
    %p146 = por %p144, %p145
    %p147 = scmp.ne.s32.totalorder %s138, %s139
    %p148 = scmp.eq.s32.totalorder %s18, 0
    %p149 = por %p147, %p148
    %p150 = scmp.ne.s32.totalorder %s138, %s139
    %p151 = scmp.eq.s32.totalorder %s19, 1
    %p152 = por %p150, %p151
    %p154 = scmp.ne.s32.totalorder %s139, %s153
    %p155 = scmp.eq.s32.totalorder %s19, 0
    %p156 = por %p154, %p155
    %s158 = sadd.s32 %s157, 1
    %p161 = scmp.eq.s32.totalorder %s13, 1
    %p162 = scmp.ne.s32.totalorder %s157, %s159
    %p163 = scmp.eq.s32.totalorder %s13, 0
    %p164 = por %p162, %p163
    %p165 = scmp.ne.s32.totalorder %s157, %s159
    %p166 = scmp.eq.s32.totalorder %s18, 1
    %p167 = por %p165, %p166
    %p168 = scmp.ne.s32.totalorder %s159, %s160
    %p169 = scmp.eq.s32.totalorder %s18, 0
    %p170 = por %p168, %p169
    %p171 = scmp.ne.s32.totalorder %s159, %s160
    %p172 = scmp.eq.s32.totalorder %s19, 1
    %p173 = por %p171, %p172
    %p175 = scmp.ne.s32.totalorder %s160, %s174
    %p176 = scmp.eq.s32.totalorder %s19, 0
    %p177 = por %p175, %p176
    %p178 = scmp.le.s32.totalorder 1, %s13
    %p179 = scmp.lt.s32.totalorder %s13, 3
    %p180 = pnand %p178, %p179
    %p181 = pneg %p180
    // Predicated region
    $region9: #{basic_block_forward.4} parent=5 // pred_check
      _
    $region10: #{basic_block_forward.4} parent=5 // pred_check_branch
      %183 = sbr.rel (%p180) target = $region12
    $region11: #{basic_block_forward.4} parent=5 // pred_region
      %s184 = ssub.s32 %s13, 1
      // Predicated region
      $region13: #{basic_block_forward.4} parent=11 // pred_check
        %p185 = pneg %p60
      $region14: #{basic_block_forward.4} parent=11 // pred_check_branch
        %187 = sbr.rel (%p185) target = $region16
      $region15: #{basic_block_forward.4} parent=11 // pred_region
        _
      $region16: #{basic_block_forward.4} parent=11 // pred_fallthru
        _
      // Predicated region
      $region17: #{basic_block_forward.4} parent=11 // pred_check
        %p188 = pneg %p81
      $region18: #{basic_block_forward.4} parent=11 // pred_check_branch
        %190 = sbr.rel (%p188) target = $region20
      $region19: #{basic_block_forward.4} parent=11 // pred_region
        _
      $region20: #{basic_block_forward.4} parent=11 // pred_fallthru
        _
      // Predicated region
      $region21: #{basic_block_forward.4} parent=11 // pred_check
        %p191 = pneg %p102
      $region22: #{basic_block_forward.4} parent=11 // pred_check_branch
        %193 = sbr.rel (%p191) target = $region24
      $region23: #{basic_block_forward.4} parent=11 // pred_region
        _
      $region24: #{basic_block_forward.4} parent=11 // pred_fallthru
        _
    $region12: #{basic_block_forward.4} parent=5 // pred_fallthru
      _
    %p194 = scmp.lt.s32.totalorder %s13, 2
    // Predicated region
    $region25: #{basic_block_forward.4} parent=5 // pred_check
      %p195 = pneg %p194
    $region26: #{basic_block_forward.4} parent=5 // pred_check_branch
      %197 = sbr.rel (%p195) target = $region28
    $region27: #{basic_block_forward.4} parent=5 // pred_region
      // Predicated region
      $region29: #{basic_block_forward.4} parent=27 // pred_check
        %p198 = pneg %p33
      $region30: #{basic_block_forward.4} parent=27 // pred_check_branch
        %200 = sbr.rel (%p198) target = $region32
      $region31: #{basic_block_forward.4} parent=27 // pred_region
        %p201 = scmp.lt.s32.totalorder %s13, 1
        %s202 = scalar_select %p201, %s13, 1
        %s203 = smul.addr %s202, 8
        %s204 = smul.addr %s203, 4
        %s205 = scalar_lea.vmem %s0, %s204
      $region32: #{basic_block_forward.4} parent=27 // pred_fallthru
        _
    $region28: #{basic_block_forward.4} parent=5 // pred_fallthru
      _
    %p206 = scmp.le.s32.totalorder 1, %s13
    %p207 = scmp.lt.s32.totalorder %s13, 3
    %p208 = pnand %p206, %p207
    %p209 = pneg %p208
    // Predicated region
    $region33: #{basic_block_forward.4} parent=5 // pred_check
      _
    $region34: #{basic_block_forward.4} parent=5 // pred_check_branch
      %211 = sbr.rel (%p208) target = $region36
    $region35: #{basic_block_forward.4} parent=5 // pred_region
      %s212 = ssub.s32 %s13, 1
      %p213 = scmp.lt.s32.totalorder %s18, 1
      %s214 = scalar_select %p213, %s18, 1
      %s215 = smul.addr %s214, 8
      %s216 = smul.addr %s215, 4
      %s217 = scalar_lea.vmem %s0, %s216
      %p218 = pneg %p39
      %p219 = pneg %p36
      %p220 = pneg %p60
      %p221 = pneg %p57
      %p222 = pneg %p81
      %p223 = pneg %p78
      %p224 = pneg %p102
      %p225 = pneg %p99
      %p226 = pneg %p128
      %p227 = pneg %p125
      %p228 = scmp.lt.s32.totalorder %s18, 1
      %s229 = scalar_select %p228, %s18, 1
      %s230 = smul.addr %s229, 8
      %s231 = smul.addr %s230, 4
      %s232 = scalar_lea.vmem %s4, %s231
      %p233 = pneg %p149
      %p234 = pneg %p146
      %p235 = pneg %p170
      %p236 = pneg %p167
      %p237 = scmp.lt.s32.totalorder %s18, 1
      %s238 = scalar_select %p237, %s18, 1
      %s239 = smul.addr %s238, 8
      %s240 = smul.addr %s239, 4
      %s241 = scalar_lea.vmem %s0, %s240
      %p242 = scmp.lt.s32.totalorder %s18, 1
      %s243 = scalar_select %p242, %s18, 1
      %s244 = smul.addr %s243, 8
      %s245 = smul.addr %s244, 4
      %s246 = scalar_lea.vmem %s4, %s245
      %p248 = scmp.eq.s32.totalorder %s18, 0
      // Predicated region
      $region37: #{basic_block_forward.4} parent=35 // pred_check
        %p249 = pneg %p248
      $region38: #{basic_block_forward.4} parent=35 // pred_check_branch
        %251 = sbr.rel (%p249) target = $region40
      $region39: #{basic_block_forward.4} parent=35 // pred_region
        %252 = vst [vmem:[%s5] sm:$0x1] 0.0
        %253 = vst [vmem:[%s6] sm:$0x1] 0.0
      $region40: #{basic_block_forward.4} parent=35 // pred_fallthru
        _
      %v254 = vld [vmem:[%s241] sm:$0xf]
      %v255 = vld [vmem:[%s241 + $0x4] sm:$0xf]
      %v256 = vld [vmem:[%s241 + $0x8] sm:$0xf]
      %v257 = vld [vmem:[%s241 + $0xc] sm:$0xf]
      %v258 = vld [vmem:[%s241 + $0x10] sm:$0xf]
      %v259 = vld [vmem:[%s241 + $0x14] sm:$0xf]
      %v260 = vld [vmem:[%s241 + $0x18] sm:$0xf]
      %v261 = vld [vmem:[%s241 + $0x1c] sm:$0xf]
      %v262 = vunpack.c.l.bf16 %v254
      %v263 = vunpack.c.l.bf16 %v255
      %v264 = vunpack.c.l.bf16 %v256
      %v265 = vunpack.c.l.bf16 %v257
      %v266 = vunpack.c.l.bf16 %v258
      %v267 = vunpack.c.l.bf16 %v259
      %v268 = vunpack.c.l.bf16 %v260
      %v269 = vunpack.c.l.bf16 %v261
      %v270 = vld [vmem:[%s1] sm:$0x1]
      %v272 = vlaneseq
      %v273 = vshrl.u32 %v272, 7
      %v274 = vsub.s32 0, %v273
      %v275 = vrot.slane %v270, %v274
      %v277 = vmul.f32 %v262, %v275
      %v278 = vmul.f32 %v263, %v275
      %v279 = vmul.f32 %v264, %v275
      %v280 = vmul.f32 %v265, %v275
      %v281 = vmul.f32 %v266, %v275
      %v282 = vmul.f32 %v267, %v275
      %v283 = vmul.f32 %v268, %v275
      %v284 = vmul.f32 %v269, %v275
      %v285 = vld [vmem:[%s2] sm:$0x1]
      %v287 = vlaneseq
      %v288 = vshrl.u32 %v287, 7
      %v289 = vsub.s32 0, %v288
      %v290 = vrot.slane %v285, %v289
      %v292 = vadd.f32 %v277, %v290
      %v293 = vadd.f32 %v278, %v290
      %v294 = vadd.f32 %v279, %v290
      %v295 = vadd.f32 %v280, %v290
      %v296 = vadd.f32 %v281, %v290
      %v297 = vadd.f32 %v282, %v290
      %v298 = vadd.f32 %v283, %v290
      %v299 = vadd.f32 %v284, %v290
      %v300 = vmax.f32 %v292, 0.0
      %v301 = vmax.f32 %v293, 0.0
      %v302 = vmax.f32 %v294, 0.0
      %v303 = vmax.f32 %v295, 0.0
      %v304 = vmax.f32 %v296, 0.0
      %v305 = vmax.f32 %v297, 0.0
      %v306 = vmax.f32 %v298, 0.0
      %v307 = vmax.f32 %v299, 0.0
      %v308 = vpack.c.bf16 %v301, %v300
      %v309 = vpack.c.bf16 %v303, %v302
      %v310 = vpack.c.bf16 %v305, %v304
      %v311 = vpack.c.bf16 %v307, %v306
      %vm312 = vcmask 125952
      %313 = vst.msk [vmem:[#allocation2] sm:$0xf] %vm312, 0
      %vm314 = vcmask 122880
      %315 = vst.msk [vmem:[#allocation2 + $0x4] sm:$0x1] %vm314, 0
      %316 = vst.msk [vmem:[#allocation2 + $0x8] sm:$0xf] %vm312, 0
      %317 = vst.msk [vmem:[#allocation2 + $0xc] sm:$0x1] %vm314, 0
      %318 = vst.msk [vmem:[#allocation2 + $0x10] sm:$0xf] %vm312, 0
      %319 = vst.msk [vmem:[#allocation2 + $0x14] sm:$0x1] %vm314, 0
      %320 = vst.msk [vmem:[#allocation2 + $0x18] sm:$0xf] %vm312, 0
      %321 = vst.msk [vmem:[#allocation2 + $0x1c] sm:$0x1] %vm314, 0
      %322 = vst.msk [vmem:[#allocation2 + $0x20] sm:$0xf] %vm312, 0
      %323 = vst.msk [vmem:[#allocation2 + $0x24] sm:$0x1] %vm314, 0
      %324 = vst.msk [vmem:[#allocation2 + $0x28] sm:$0xf] %vm312, 0
      %325 = vst.msk [vmem:[#allocation2 + $0x2c] sm:$0x1] %vm314, 0
      %326 = vst.msk [vmem:[#allocation2 + $0x30] sm:$0xf] %vm312, 0
      %327 = vst.msk [vmem:[#allocation2 + $0x34] sm:$0x1] %vm314, 0
      %328 = vst.msk [vmem:[#allocation2 + $0x38] sm:$0xf] %vm312, 0
      %329 = vst.msk [vmem:[#allocation2 + $0x3c] sm:$0x1] %vm314, 0
      %330 = vst.msk [vmem:[#allocation2 + $0x40] sm:$0xf] %vm312, 0
      %331 = vst.msk [vmem:[#allocation2 + $0x44] sm:$0x1] %vm314, 0
      %332 = vst.msk [vmem:[#allocation2 + $0x48] sm:$0xf] %vm312, 0
      %333 = vst.msk [vmem:[#allocation2 + $0x4c] sm:$0x1] %vm314, 0
      %v338 = vunpack.c.l.b16 %v308
      %v339 = vunpack.c.h.b16 %v308
      %v340 = vunpack.c.l.b16 %v309
      %v341 = vunpack.c.h.b16 %v309
      %v342 = vunpack.c.l.b16 %v310
      %v343 = vunpack.c.h.b16 %v310
      %v344 = vunpack.c.l.b16 %v311
      %v345 = vunpack.c.h.b16 %v311
      %v346 = vpack.c.b16 %v338, %v338
      %v347 = vpack.c.b16 %v339, %v339
      %v348 = vpack.c.b16 %v340, %v340
      %v349 = vpack.c.b16 %v341, %v341
      %v350 = vpack.c.b16 %v342, %v342
      %v351 = vpack.c.b16 %v343, %v343
      %v352 = vpack.c.b16 %v344, %v344
      %v353 = vpack.c.b16 %v345, %v345
      %v355 = vshrl.u32 %v346, 16
      %v357 = vrot.slane %v355, 7
      %v358 = vshll.u32 %v346, 16
      %v360 = vor.u32 %v357, %v358
      %v361 = vrot.slane %v357, 4
      %v363 = vshrl.u32 %v347, 16
      %v365 = vrot.slane %v363, 7
      %v366 = vshll.u32 %v347, 16
      %v368 = vor.u32 %v365, %v366
      %v369 = vrot.slane %v365, 4
      %v371 = vshrl.u32 %v348, 16
      %v373 = vrot.slane %v371, 7
      %v374 = vshll.u32 %v348, 16
      %v376 = vor.u32 %v373, %v374
      %v377 = vrot.slane %v373, 4
      %v379 = vshrl.u32 %v349, 16
      %v381 = vrot.slane %v379, 7
      %v382 = vshll.u32 %v349, 16
      %v384 = vor.u32 %v381, %v382
      %v385 = vrot.slane %v381, 4
      %v387 = vshrl.u32 %v350, 16
      %v389 = vrot.slane %v387, 7
      %v390 = vshll.u32 %v350, 16
      %v392 = vor.u32 %v389, %v390
      %v393 = vrot.slane %v389, 4
      %v395 = vshrl.u32 %v351, 16
      %v397 = vrot.slane %v395, 7
      %v398 = vshll.u32 %v351, 16
      %v400 = vor.u32 %v397, %v398
      %v401 = vrot.slane %v397, 4
      %v403 = vshrl.u32 %v352, 16
      %v405 = vrot.slane %v403, 7
      %v406 = vshll.u32 %v352, 16
      %v408 = vor.u32 %v405, %v406
      %v409 = vrot.slane %v405, 4
      %v411 = vshrl.u32 %v353, 16
      %v413 = vrot.slane %v411, 7
      %v414 = vshll.u32 %v353, 16
      %v416 = vor.u32 %v413, %v414
      %v417 = vrot.slane %v413, 4
      %s434 = scalar_lea.vmem [#allocation2], 8
      %vm435 = vcmask 125952
      %vm436 = vsmask.f32 7938
      %vm437 = vmand %vm435, %vm436
      %v438 = vld [vmem:[%s434] sm:$0xf]
      %v439 = vsel %vm437, %v360, %v438
      %440 = vst [vmem:[%s434] sm:$0xf] %v439
      %vm441 = vcmask 122880
      %vm442 = vsmask.f32 256
      %vm443 = vmand %vm441, %vm442
      %v444 = vld [vmem:[%s434 + $0x4] sm:$0x1]
      %v445 = vsel %vm443, %v361, %v444
      %446 = vst [vmem:[%s434 + $0x4] sm:$0x1] %v445
      %v447 = vld [vmem:[%s434 + $0x8] sm:$0xf]
      %v448 = vsel %vm437, %v368, %v447
      %449 = vst [vmem:[%s434 + $0x8] sm:$0xf] %v448
      %v450 = vld [vmem:[%s434 + $0xc] sm:$0x1]
      %v451 = vsel %vm443, %v369, %v450
      %452 = vst [vmem:[%s434 + $0xc] sm:$0x1] %v451
      %v453 = vld [vmem:[%s434 + $0x10] sm:$0xf]
      %v454 = vsel %vm437, %v376, %v453
      %455 = vst [vmem:[%s434 + $0x10] sm:$0xf] %v454
      %v456 = vld [vmem:[%s434 + $0x14] sm:$0x1]
      %v457 = vsel %vm443, %v377, %v456
      %458 = vst [vmem:[%s434 + $0x14] sm:$0x1] %v457
      %v459 = vld [vmem:[%s434 + $0x18] sm:$0xf]
      %v460 = vsel %vm437, %v384, %v459
      %461 = vst [vmem:[%s434 + $0x18] sm:$0xf] %v460
      %v462 = vld [vmem:[%s434 + $0x1c] sm:$0x1]
      %v463 = vsel %vm443, %v385, %v462
      %464 = vst [vmem:[%s434 + $0x1c] sm:$0x1] %v463
      %v465 = vld [vmem:[%s434 + $0x20] sm:$0xf]
      %v466 = vsel %vm437, %v392, %v465
      %467 = vst [vmem:[%s434 + $0x20] sm:$0xf] %v466
      %v468 = vld [vmem:[%s434 + $0x24] sm:$0x1]
      %v469 = vsel %vm443, %v393, %v468
      %470 = vst [vmem:[%s434 + $0x24] sm:$0x1] %v469
      %v471 = vld [vmem:[%s434 + $0x28] sm:$0xf]
      %v472 = vsel %vm437, %v400, %v471
      %473 = vst [vmem:[%s434 + $0x28] sm:$0xf] %v472
      %v474 = vld [vmem:[%s434 + $0x2c] sm:$0x1]
      %v475 = vsel %vm443, %v401, %v474
      %476 = vst [vmem:[%s434 + $0x2c] sm:$0x1] %v475
      %v477 = vld [vmem:[%s434 + $0x30] sm:$0xf]
      %v478 = vsel %vm437, %v408, %v477
      %479 = vst [vmem:[%s434 + $0x30] sm:$0xf] %v478
      %v480 = vld [vmem:[%s434 + $0x34] sm:$0x1]
      %v481 = vsel %vm443, %v409, %v480
      %482 = vst [vmem:[%s434 + $0x34] sm:$0x1] %v481
      %v483 = vld [vmem:[%s434 + $0x38] sm:$0xf]
      %v484 = vsel %vm437, %v416, %v483
      %485 = vst [vmem:[%s434 + $0x38] sm:$0xf] %v484
      %v486 = vld [vmem:[%s434 + $0x3c] sm:$0x1]
      %v487 = vsel %vm443, %v417, %v486
      %488 = vst [vmem:[%s434 + $0x3c] sm:$0x1] %v487
      %v489 = vld [vmem:[#allocation2] sm:$0xf]
      %v490 = vld [vmem:[#allocation2 + $0x8] sm:$0xf]
      %v491 = vld [vmem:[#allocation2 + $0x10] sm:$0xf]
      %v492 = vld [vmem:[#allocation2 + $0x18] sm:$0xf]
      %v493 = vld [vmem:[#allocation2 + $0x20] sm:$0xf]
      %v494 = vld [vmem:[#allocation2 + $0x28] sm:$0xf]
      %v495 = vld [vmem:[#allocation2 + $0x30] sm:$0xf]
      %v496 = vld [vmem:[#allocation2 + $0x38] sm:$0xf]
      %v497 = vld [vmem:[%s3] sm:$0xf]
      %v498 = vld [vmem:[%s3 + $0x4] sm:$0xf]
      %v499 = vld [vmem:[#allocation2 + $0x4] sm:$0x1]
      %v500 = vld [vmem:[#allocation2 + $0xc] sm:$0x1]
      %v501 = vld [vmem:[#allocation2 + $0x14] sm:$0x1]
      %v502 = vld [vmem:[#allocation2 + $0x1c] sm:$0x1]
      %v503 = vld [vmem:[#allocation2 + $0x24] sm:$0x1]
      %v504 = vld [vmem:[#allocation2 + $0x2c] sm:$0x1]
      %v505 = vld [vmem:[#allocation2 + $0x34] sm:$0x1]
      %v506 = vld [vmem:[#allocation2 + $0x3c] sm:$0x1]
      %vm507 = vsmask.f32 3328
      %vm508 = vsmask.f32 7440
      %vm509 = vmor %vm507, %vm508
      %v511 = vshrl.u32 %v489, 16
      %v513 = vrot.slane %v511, 4
      %v514 = vshll.u32 %v489, 16
      %v516 = vrot.slane %v514, 5
      %v517 = vor.u32 %v513, %v516
      %v518 = vrot.slane %v517, 4
      %v520 = vshll.u32 %v499, 16
      %v522 = vrot.slane %v520, 5
      %v523 = vsel %vm509, %v518, %v522
      %v525 = vshrl.u32 %v490, 16
      %v527 = vrot.slane %v525, 4
      %v528 = vshll.u32 %v490, 16
      %v530 = vrot.slane %v528, 5
      %v531 = vor.u32 %v527, %v530
      %v532 = vrot.slane %v531, 4
      %v534 = vshll.u32 %v500, 16
      %v536 = vrot.slane %v534, 5
      %v537 = vsel %vm509, %v532, %v536
      %v539 = vshrl.u32 %v491, 16
      %v541 = vrot.slane %v539, 4
      %v542 = vshll.u32 %v491, 16
      %v544 = vrot.slane %v542, 5
      %v545 = vor.u32 %v541, %v544
      %v546 = vrot.slane %v545, 4
      %v548 = vshll.u32 %v501, 16
      %v550 = vrot.slane %v548, 5
      %v551 = vsel %vm509, %v546, %v550
      %v553 = vshrl.u32 %v492, 16
      %v555 = vrot.slane %v553, 4
      %v556 = vshll.u32 %v492, 16
      %v558 = vrot.slane %v556, 5
      %v559 = vor.u32 %v555, %v558
      %v560 = vrot.slane %v559, 4
      %v562 = vshll.u32 %v502, 16
      %v564 = vrot.slane %v562, 5
      %v565 = vsel %vm509, %v560, %v564
      %v567 = vshrl.u32 %v493, 16
      %v569 = vrot.slane %v567, 4
      %v570 = vshll.u32 %v493, 16
      %v572 = vrot.slane %v570, 5
      %v573 = vor.u32 %v569, %v572
      %v574 = vrot.slane %v573, 4
      %v576 = vshll.u32 %v503, 16
      %v578 = vrot.slane %v576, 5
      %v579 = vsel %vm509, %v574, %v578
      %v581 = vshrl.u32 %v494, 16
      %v583 = vrot.slane %v581, 4
      %v584 = vshll.u32 %v494, 16
      %v586 = vrot.slane %v584, 5
      %v587 = vor.u32 %v583, %v586
      %v588 = vrot.slane %v587, 4
      %v590 = vshll.u32 %v504, 16
      %v592 = vrot.slane %v590, 5
      %v593 = vsel %vm509, %v588, %v592
      %v595 = vshrl.u32 %v495, 16
      %v597 = vrot.slane %v595, 4
      %v598 = vshll.u32 %v495, 16
      %v600 = vrot.slane %v598, 5
      %v601 = vor.u32 %v597, %v600
      %v602 = vrot.slane %v601, 4
      %v604 = vshll.u32 %v505, 16
      %v606 = vrot.slane %v604, 5
      %v607 = vsel %vm509, %v602, %v606
      %v609 = vshrl.u32 %v496, 16
      %v611 = vrot.slane %v609, 4
      %v612 = vshll.u32 %v496, 16
      %v614 = vrot.slane %v612, 5
      %v615 = vor.u32 %v611, %v614
      %v616 = vrot.slane %v615, 4
      %v618 = vshll.u32 %v506, 16
      %v620 = vrot.slane %v618, 5
      %v621 = vsel %vm509, %v616, %v620
      %s622 = scalar_lea.vmem %s3, 8
      %v623 = vld [vmem:[%s622] sm:$0xf]
      %v624 = vld [vmem:[%s622 + $0x4] sm:$0xf]
      %v625 = vunpack.c.l.b16 %v523
      %v626 = vunpack.c.l.b16 %v537
      %v627 = vunpack.c.l.b16 %v551
      %v628 = vunpack.c.l.b16 %v565
      %v629 = vunpack.c.l.b16 %v579
      %v630 = vunpack.c.l.b16 %v593
      %v631 = vunpack.c.l.b16 %v607
      %v632 = vunpack.c.l.b16 %v621
      %v633 = vpack.c.b16 %v626, %v625
      %v634 = vpack.c.b16 %v628, %v627
      %v635 = vpack.c.b16 %v630, %v629
      %v636 = vpack.c.b16 %v632, %v631
      %v639 = vunpack.c.l.b16 %v623
      %v640 = vunpack.c.l.b16 %v624
      %v641 = vpack.c.b16 %v640, %v639
      %vm643 = vcmask 130048
      %v645 = vsel %vm643, %v633, 0
      %v648 = vsel %vm643, %v634, 0
      %v651 = vsel %vm643, %v635, 0
      %v654 = vsel %vm643, %v636, 0
      %656 = vmatprep.subr.bf16.mxu0 0
      %657 = vmatpush1.bf16.msra.mxu0 %v641
      %658 = vmatprep.subr.bf16.mxu0 0
      %659 = vmatpush1.bf16.msra.mxu0 0
      %660 = vmatprep.subr.bf16.mxu0 0
      %661 = vmatpush1.bf16.msra.mxu0 0
      %662 = vmatprep.subr.bf16.mxu0 0
      %663 = vmatpush1.bf16.msra.mxu0 0
      %664 = vmatprep.subr.bf16.mxu0 0
      %665 = vmatpush1.bf16.msra.mxu0 0
      %666 = vmatprep.subr.bf16.mxu0 0
      %667 = vmatpush1.bf16.msra.mxu0 0
      %668 = vmatprep.subr.bf16.mxu0 0
      %669 = vmatpush1.bf16.msra.mxu0 0
      %670 = vmatprep.subr.bf16.mxu0 0
      %671 = vmatpush1.bf16.msra.mxu0 0
      %672 = vmatprep.subr.bf16.mxu0 0
      %673 = vmatpush1.bf16.msra.mxu0 0
      %674 = vmatprep.subr.bf16.mxu0 0
      %675 = vmatpush1.bf16.msra.mxu0 0
      %676 = vmatprep.subr.bf16.mxu0 0
      %677 = vmatpush1.bf16.msra.mxu0 0
      %678 = vmatprep.subr.bf16.mxu0 0
      %679 = vmatpush1.bf16.msra.mxu0 0
      %680 = vmatprep.subr.bf16.mxu0 0
      %681 = vmatpush1.bf16.msra.mxu0 0
      %682 = vmatprep.subr.bf16.mxu0 0
      %683 = vmatpush1.bf16.msra.mxu0 0
      %684 = vmatprep.subr.bf16.mxu0 0
      %685 = vmatpush1.bf16.msra.mxu0 0
      %686 = vmatprep.subr.bf16.mxu0 0
      %687 = vmatpush1.bf16.msra.mxu0 0
      %688 = vmatprep.mubr.bf16.mxu0 0
      %689 = vmatmul.mubr.bf16.gmra.mrb[0].mxu0 %v645
      %v690 = vpop.f32.mrb[0].mxu0
      %v691 = vadd.f32 0.0, %v690
      %v692 = vpop.f32.mrb[0].mxu0
      %v693 = vpop.f32.mrb[0].mxu0
      %v694 = vadd.f32 0.0, %v693
      %v695 = vpop.f32.mrb[0].mxu0
      %696 = vmatprep.mubr.bf16.mxu0 0
      %697 = vmatmul.mubr.bf16.gmra.mrb[0].mxu0 %v648
      %v698 = vpop.f32.mrb[0].mxu0
      %v699 = vadd.f32 0.0, %v698
      %v700 = vpop.f32.mrb[0].mxu0
      %v701 = vpop.f32.mrb[0].mxu0
      %v702 = vadd.f32 0.0, %v701
      %v703 = vpop.f32.mrb[0].mxu0
      %704 = vmatprep.mubr.bf16.mxu0 0
      %705 = vmatmul.mubr.bf16.gmra.mrb[0].mxu0 %v651
      %v706 = vpop.f32.mrb[0].mxu0
      %v707 = vadd.f32 0.0, %v706
      %v708 = vpop.f32.mrb[0].mxu0
      %v709 = vpop.f32.mrb[0].mxu0
      %v710 = vadd.f32 0.0, %v709
      %v711 = vpop.f32.mrb[0].mxu0
      %712 = vmatprep.mubr.bf16.mxu0 0
      %713 = vmatmul.mubr.bf16.gmra.mrb[0].mxu0 %v654
      %v714 = vpop.f32.mrb[0].mxu0
      %v715 = vadd.f32 0.0, %v714
      %v716 = vpop.f32.mrb[0].mxu0
      %v717 = vpop.f32.mrb[0].mxu0
      %v718 = vadd.f32 0.0, %v717
      %v719 = vpop.f32.mrb[0].mxu0
      %720 = vdwg.mxu0
      %v729 = vunpack.c.l.b16 %v489
      %v730 = vunpack.c.l.b16 %v490
      %v731 = vunpack.c.l.b16 %v491
      %v732 = vunpack.c.l.b16 %v492
      %v733 = vunpack.c.l.b16 %v493
      %v734 = vunpack.c.l.b16 %v494
      %v735 = vunpack.c.l.b16 %v495
      %v736 = vunpack.c.l.b16 %v496
      %v737 = vpack.c.b16 %v730, %v729
      %v738 = vpack.c.b16 %v732, %v731
      %v739 = vpack.c.b16 %v734, %v733
      %v740 = vpack.c.b16 %v736, %v735
      %v743 = vunpack.c.l.b16 %v497
      %v744 = vunpack.c.l.b16 %v498
      %v745 = vpack.c.b16 %v744, %v743
      %v748 = vsel %vm643, %v737, 0
      %v751 = vsel %vm643, %v738, 0
      %v754 = vsel %vm643, %v739, 0
      %v757 = vsel %vm643, %v740, 0
      %759 = vmatprep.subr.bf16.mxu0 0
      %760 = vmatpush1.bf16.msra.mxu0 %v745
      %761 = vmatprep.subr.bf16.mxu0 0
      %762 = vmatpush1.bf16.msra.mxu0 0
      %763 = vmatprep.subr.bf16.mxu0 0
      %764 = vmatpush1.bf16.msra.mxu0 0
      %765 = vmatprep.subr.bf16.mxu0 0
      %766 = vmatpush1.bf16.msra.mxu0 0
      %767 = vmatprep.subr.bf16.mxu0 0
      %768 = vmatpush1.bf16.msra.mxu0 0
      %769 = vmatprep.subr.bf16.mxu0 0
      %770 = vmatpush1.bf16.msra.mxu0 0
      %771 = vmatprep.subr.bf16.mxu0 0
      %772 = vmatpush1.bf16.msra.mxu0 0
      %773 = vmatprep.subr.bf16.mxu0 0
      %774 = vmatpush1.bf16.msra.mxu0 0
      %775 = vmatprep.subr.bf16.mxu0 0
      %776 = vmatpush1.bf16.msra.mxu0 0
      %777 = vmatprep.subr.bf16.mxu0 0
      %778 = vmatpush1.bf16.msra.mxu0 0
      %779 = vmatprep.subr.bf16.mxu0 0
      %780 = vmatpush1.bf16.msra.mxu0 0
      %781 = vmatprep.subr.bf16.mxu0 0
      %782 = vmatpush1.bf16.msra.mxu0 0
      %783 = vmatprep.subr.bf16.mxu0 0
      %784 = vmatpush1.bf16.msra.mxu0 0
      %785 = vmatprep.subr.bf16.mxu0 0
      %786 = vmatpush1.bf16.msra.mxu0 0
      %787 = vmatprep.subr.bf16.mxu0 0
      %788 = vmatpush1.bf16.msra.mxu0 0
      %789 = vmatprep.subr.bf16.mxu0 0
      %790 = vmatpush1.bf16.msra.mxu0 0
      %791 = vmatprep.mubr.bf16.mxu0 0
      %792 = vmatmul.mubr.bf16.gmra.mrb[0].mxu0 %v748
      %v793 = vpop.f32.mrb[0].mxu0
      %v794 = vadd.f32 %v691, %v793
      %v795 = vpop.f32.mrb[0].mxu0
      %v796 = vpop.f32.mrb[0].mxu0
      %v797 = vadd.f32 %v694, %v796
      %v798 = vpop.f32.mrb[0].mxu0
      %799 = vmatprep.mubr.bf16.mxu0 0
      %800 = vmatmul.mubr.bf16.gmra.mrb[0].mxu0 %v751
      %v801 = vpop.f32.mrb[0].mxu0
      %v802 = vadd.f32 %v699, %v801
      %v803 = vpop.f32.mrb[0].mxu0
      %v804 = vpop.f32.mrb[0].mxu0
      %v805 = vadd.f32 %v702, %v804
      %v806 = vpop.f32.mrb[0].mxu0
      %807 = vmatprep.mubr.bf16.mxu0 0
      %808 = vmatmul.mubr.bf16.gmra.mrb[0].mxu0 %v754
      %v809 = vpop.f32.mrb[0].mxu0
      %v810 = vadd.f32 %v707, %v809
      %v811 = vpop.f32.mrb[0].mxu0
      %v812 = vpop.f32.mrb[0].mxu0
      %v813 = vadd.f32 %v710, %v812
      %v814 = vpop.f32.mrb[0].mxu0
      %815 = vmatprep.mubr.bf16.mxu0 0
      %816 = vmatmul.mubr.bf16.gmra.mrb[0].mxu0 %v757
      %v817 = vpop.f32.mrb[0].mxu0
      %v818 = vadd.f32 %v715, %v817
      %v819 = vpop.f32.mrb[0].mxu0
      %v820 = vpop.f32.mrb[0].mxu0
      %v821 = vadd.f32 %v718, %v820
      %v822 = vpop.f32.mrb[0].mxu0
      %823 = vdwg.mxu0
      %v824 = vld [vmem:[#allocation2] sm:$0xe]
      %v825 = vld [vmem:[#allocation2 + $0x8] sm:$0xe]
      %v826 = vld [vmem:[#allocation2 + $0x10] sm:$0xe]
      %v827 = vld [vmem:[#allocation2 + $0x18] sm:$0xe]
      %v828 = vld [vmem:[#allocation2 + $0x20] sm:$0xe]
      %v829 = vld [vmem:[#allocation2 + $0x28] sm:$0xe]
      %v830 = vld [vmem:[#allocation2 + $0x30] sm:$0xe]
      %v831 = vld [vmem:[#allocation2 + $0x38] sm:$0xe]
      %vm848 = vcmask 1042432
      %vm849 = vcmask 1046532
      %vm850 = vmor %vm848, %vm849
      %v851 = vrot.slane %v824, 5
      %v852 = vrot.slane %v851, 4
      %v853 = vrot.slane %v499, 5
      %v854 = vsel %vm850, %v852, %v853
      %v855 = vrot.slane %v825, 5
      %v856 = vrot.slane %v855, 4
      %v857 = vrot.slane %v500, 5
      %v858 = vsel %vm850, %v856, %v857
      %v859 = vrot.slane %v826, 5
      %v860 = vrot.slane %v859, 4
      %v861 = vrot.slane %v501, 5
      %v862 = vsel %vm850, %v860, %v861
      %v863 = vrot.slane %v827, 5
      %v864 = vrot.slane %v863, 4
      %v865 = vrot.slane %v502, 5
      %v866 = vsel %vm850, %v864, %v865
      %v867 = vrot.slane %v828, 5
      %v868 = vrot.slane %v867, 4
      %v869 = vrot.slane %v503, 5
      %v870 = vsel %vm850, %v868, %v869
      %v871 = vrot.slane %v829, 5
      %v872 = vrot.slane %v871, 4
      %v873 = vrot.slane %v504, 5
      %v874 = vsel %vm850, %v872, %v873
      %v875 = vrot.slane %v830, 5
      %v876 = vrot.slane %v875, 4
      %v877 = vrot.slane %v505, 5
      %v878 = vsel %vm850, %v876, %v877
      %v879 = vrot.slane %v831, 5
      %v880 = vrot.slane %v879, 4
      %v881 = vrot.slane %v506, 5
      %v882 = vsel %vm850, %v880, %v881
      %s883 = scalar_lea.vmem %s3, 16
      %v884 = vld [vmem:[%s883] sm:$0xf]
      %v885 = vld [vmem:[%s883 + $0x4] sm:$0xf]
      %v886 = vunpack.c.l.b16 %v854
      %v887 = vunpack.c.l.b16 %v858
      %v888 = vunpack.c.l.b16 %v862
      %v889 = vunpack.c.l.b16 %v866
      %v890 = vunpack.c.l.b16 %v870
      %v891 = vunpack.c.l.b16 %v874
      %v892 = vunpack.c.l.b16 %v878
      %v893 = vunpack.c.l.b16 %v882
      %v894 = vpack.c.b16 %v887, %v886
      %v895 = vpack.c.b16 %v889, %v888
      %v896 = vpack.c.b16 %v891, %v890
      %v897 = vpack.c.b16 %v893, %v892
      %v900 = vunpack.c.l.b16 %v884
      %v901 = vunpack.c.l.b16 %v885
      %v902 = vpack.c.b16 %v901, %v900
      %v905 = vsel %vm643, %v894, 0
      %v908 = vsel %vm643, %v895, 0
      %v911 = vsel %vm643, %v896, 0
      %v914 = vsel %vm643, %v897, 0
      %916 = vmatprep.subr.bf16.mxu0 0
      %917 = vmatpush1.bf16.msra.mxu0 %v902
      %918 = vmatprep.subr.bf16.mxu0 0
      %919 = vmatpush1.bf16.msra.mxu0 0
      %920 = vmatprep.subr.bf16.mxu0 0
      %921 = vmatpush1.bf16.msra.mxu0 0
      %922 = vmatprep.subr.bf16.mxu0 0
      %923 = vmatpush1.bf16.msra.mxu0 0
      %924 = vmatprep.subr.bf16.mxu0 0
      %925 = vmatpush1.bf16.msra.mxu0 0
      %926 = vmatprep.subr.bf16.mxu0 0
      %927 = vmatpush1.bf16.msra.mxu0 0
      %928 = vmatprep.subr.bf16.mxu0 0
      %929 = vmatpush1.bf16.msra.mxu0 0
      %930 = vmatprep.subr.bf16.mxu0 0
      %931 = vmatpush1.bf16.msra.mxu0 0
      %932 = vmatprep.subr.bf16.mxu0 0
      %933 = vmatpush1.bf16.msra.mxu0 0
      %934 = vmatprep.subr.bf16.mxu0 0
      %935 = vmatpush1.bf16.msra.mxu0 0
      %936 = vmatprep.subr.bf16.mxu0 0
      %937 = vmatpush1.bf16.msra.mxu0 0
      %938 = vmatprep.subr.bf16.mxu0 0
      %939 = vmatpush1.bf16.msra.mxu0 0
      %940 = vmatprep.subr.bf16.mxu0 0
      %941 = vmatpush1.bf16.msra.mxu0 0
      %942 = vmatprep.subr.bf16.mxu0 0
      %943 = vmatpush1.bf16.msra.mxu0 0
      %944 = vmatprep.subr.bf16.mxu0 0
      %945 = vmatpush1.bf16.msra.mxu0 0
      %946 = vmatprep.subr.bf16.mxu0 0
      %947 = vmatpush1.bf16.msra.mxu0 0
      %948 = vmatprep.mubr.bf16.mxu0 0
      %949 = vmatmul.mubr.bf16.gmra.mrb[0].mxu0 %v905
      %v950 = vpop.f32.mrb[0].mxu0
      %v951 = vadd.f32 0.0, %v950
      %v952 = vpop.f32.mrb[0].mxu0
      %v953 = vpop.f32.mrb[0].mxu0
      %v954 = vadd.f32 0.0, %v953
      %v955 = vpop.f32.mrb[0].mxu0
      %956 = vmatprep.mubr.bf16.mxu0 0
      %957 = vmatmul.mubr.bf16.gmra.mrb[0].mxu0 %v908
      %v958 = vpop.f32.mrb[0].mxu0
      %v959 = vadd.f32 0.0, %v958
      %v960 = vpop.f32.mrb[0].mxu0
      %v961 = vpop.f32.mrb[0].mxu0
      %v962 = vadd.f32 0.0, %v961
      %v963 = vpop.f32.mrb[0].mxu0
      %964 = vmatprep.mubr.bf16.mxu0 0
      %965 = vmatmul.mubr.bf16.gmra.mrb[0].mxu0 %v911
      %v966 = vpop.f32.mrb[0].mxu0
      %v967 = vadd.f32 0.0, %v966
      %v968 = vpop.f32.mrb[0].mxu0
      %v969 = vpop.f32.mrb[0].mxu0
      %v970 = vadd.f32 0.0, %v969
      %v971 = vpop.f32.mrb[0].mxu0
      %972 = vmatprep.mubr.bf16.mxu0 0
      %973 = vmatmul.mubr.bf16.gmra.mrb[0].mxu0 %v914
      %v974 = vpop.f32.mrb[0].mxu0
      %v975 = vadd.f32 0.0, %v974
      %v976 = vpop.f32.mrb[0].mxu0
      %v977 = vpop.f32.mrb[0].mxu0
      %v978 = vadd.f32 0.0, %v977
      %v979 = vpop.f32.mrb[0].mxu0
      %980 = vdwg.mxu0
      %v981 = vadd.f32 %v794, %v951
      %v982 = vadd.f32 %v797, %v954
      %v983 = vadd.f32 %v802, %v959
      %v984 = vadd.f32 %v805, %v962
      %v985 = vadd.f32 %v810, %v967
      %v986 = vadd.f32 %v813, %v970
      %v987 = vadd.f32 %v818, %v975
      %v988 = vadd.f32 %v821, %v978
      %v989 = vld [vmem:[%s434] sm:$0xf]
      %v990 = vld [vmem:[%s434 + $0x8] sm:$0xf]
      %v991 = vld [vmem:[%s434 + $0x10] sm:$0xf]
      %v992 = vld [vmem:[%s434 + $0x18] sm:$0xf]
      %v993 = vld [vmem:[%s434 + $0x20] sm:$0xf]
      %v994 = vld [vmem:[%s434 + $0x28] sm:$0xf]
      %v995 = vld [vmem:[%s434 + $0x30] sm:$0xf]
      %v996 = vld [vmem:[%s434 + $0x38] sm:$0xf]
      %s997 = scalar_lea.vmem %s3, 24
      %v998 = vld [vmem:[%s997] sm:$0xf]
      %v999 = vld [vmem:[%s997 + $0x4] sm:$0xf]
      %v1008 = vunpack.c.l.b16 %v989
      %v1009 = vunpack.c.l.b16 %v990
      %v1010 = vunpack.c.l.b16 %v991
      %v1011 = vunpack.c.l.b16 %v992
      %v1012 = vunpack.c.l.b16 %v993
      %v1013 = vunpack.c.l.b16 %v994
      %v1014 = vunpack.c.l.b16 %v995
      %v1015 = vunpack.c.l.b16 %v996
      %v1016 = vpack.c.b16 %v1009, %v1008
      %v1017 = vpack.c.b16 %v1011, %v1010
      %v1018 = vpack.c.b16 %v1013, %v1012
      %v1019 = vpack.c.b16 %v1015, %v1014
      %v1022 = vunpack.c.l.b16 %v998
      %v1023 = vunpack.c.l.b16 %v999
      %v1024 = vpack.c.b16 %v1023, %v1022
      %v1027 = vsel %vm643, %v1016, 0
      %v1030 = vsel %vm643, %v1017, 0
      %v1033 = vsel %vm643, %v1018, 0
      %v1036 = vsel %vm643, %v1019, 0
      %1038 = vmatprep.subr.bf16.mxu0 0
      %1039 = vmatpush1.bf16.msra.mxu0 %v1024
      %1040 = vmatprep.subr.bf16.mxu0 0
      %1041 = vmatpush1.bf16.msra.mxu0 0
      %1042 = vmatprep.subr.bf16.mxu0 0
      %1043 = vmatpush1.bf16.msra.mxu0 0
      %1044 = vmatprep.subr.bf16.mxu0 0
      %1045 = vmatpush1.bf16.msra.mxu0 0
      %1046 = vmatprep.subr.bf16.mxu0 0
      %1047 = vmatpush1.bf16.msra.mxu0 0
      %1048 = vmatprep.subr.bf16.mxu0 0
      %1049 = vmatpush1.bf16.msra.mxu0 0
      %1050 = vmatprep.subr.bf16.mxu0 0
      %1051 = vmatpush1.bf16.msra.mxu0 0
      %1052 = vmatprep.subr.bf16.mxu0 0
      %1053 = vmatpush1.bf16.msra.mxu0 0
      %1054 = vmatprep.subr.bf16.mxu0 0
      %1055 = vmatpush1.bf16.msra.mxu0 0
      %1056 = vmatprep.subr.bf16.mxu0 0
      %1057 = vmatpush1.bf16.msra.mxu0 0
      %1058 = vmatprep.subr.bf16.mxu0 0
      %1059 = vmatpush1.bf16.msra.mxu0 0
      %1060 = vmatprep.subr.bf16.mxu0 0
      %1061 = vmatpush1.bf16.msra.mxu0 0
      %1062 = vmatprep.subr.bf16.mxu0 0
      %1063 = vmatpush1.bf16.msra.mxu0 0
      %1064 = vmatprep.subr.bf16.mxu0 0
      %1065 = vmatpush1.bf16.msra.mxu0 0
      %1066 = vmatprep.subr.bf16.mxu0 0
      %1067 = vmatpush1.bf16.msra.mxu0 0
      %1068 = vmatprep.subr.bf16.mxu0 0
      %1069 = vmatpush1.bf16.msra.mxu0 0
      %1070 = vmatprep.mubr.bf16.mxu0 0
      %1071 = vmatmul.mubr.bf16.gmra.mrb[0].mxu0 %v1027
      %v1072 = vpop.f32.mrb[0].mxu0
      %v1073 = vadd.f32 0.0, %v1072
      %v1074 = vpop.f32.mrb[0].mxu0
      %v1075 = vpop.f32.mrb[0].mxu0
      %v1076 = vadd.f32 0.0, %v1075
      %v1077 = vpop.f32.mrb[0].mxu0
      %1078 = vmatprep.mubr.bf16.mxu0 0
      %1079 = vmatmul.mubr.bf16.gmra.mrb[0].mxu0 %v1030
      %v1080 = vpop.f32.mrb[0].mxu0
      %v1081 = vadd.f32 0.0, %v1080
      %v1082 = vpop.f32.mrb[0].mxu0
      %v1083 = vpop.f32.mrb[0].mxu0
      %v1084 = vadd.f32 0.0, %v1083
      %v1085 = vpop.f32.mrb[0].mxu0
      %1086 = vmatprep.mubr.bf16.mxu0 0
      %1087 = vmatmul.mubr.bf16.gmra.mrb[0].mxu0 %v1033
      %v1088 = vpop.f32.mrb[0].mxu0
      %v1089 = vadd.f32 0.0, %v1088
      %v1090 = vpop.f32.mrb[0].mxu0
      %v1091 = vpop.f32.mrb[0].mxu0
      %v1092 = vadd.f32 0.0, %v1091
      %v1093 = vpop.f32.mrb[0].mxu0
      %1094 = vmatprep.mubr.bf16.mxu0 0
      %1095 = vmatmul.mubr.bf16.gmra.mrb[0].mxu0 %v1036
      %v1096 = vpop.f32.mrb[0].mxu0
      %v1097 = vadd.f32 0.0, %v1096
      %v1098 = vpop.f32.mrb[0].mxu0
      %v1099 = vpop.f32.mrb[0].mxu0
      %v1100 = vadd.f32 0.0, %v1099
      %v1101 = vpop.f32.mrb[0].mxu0
      %1102 = vdwg.mxu0
      %v1103 = vadd.f32 %v981, %v1073
      %v1104 = vadd.f32 %v982, %v1076
      %v1105 = vadd.f32 %v983, %v1081
      %v1106 = vadd.f32 %v984, %v1084
      %v1107 = vadd.f32 %v985, %v1089
      %v1108 = vadd.f32 %v986, %v1092
      %v1109 = vadd.f32 %v987, %v1097
      %v1110 = vadd.f32 %v988, %v1100
      %v1111 = vld [vmem:[%s434] sm:$0xf]
      %v1112 = vld [vmem:[%s434 + $0x4] sm:$0x1]
      %v1113 = vld [vmem:[%s434 + $0x8] sm:$0xf]
      %v1114 = vld [vmem:[%s434 + $0xc] sm:$0x1]
      %v1115 = vld [vmem:[%s434 + $0x10] sm:$0xf]
      %v1116 = vld [vmem:[%s434 + $0x14] sm:$0x1]
      %v1117 = vld [vmem:[%s434 + $0x18] sm:$0xf]
      %v1118 = vld [vmem:[%s434 + $0x1c] sm:$0x1]
      %v1119 = vld [vmem:[%s434 + $0x20] sm:$0xf]
      %v1120 = vld [vmem:[%s434 + $0x24] sm:$0x1]
      %v1121 = vld [vmem:[%s434 + $0x28] sm:$0xf]
      %v1122 = vld [vmem:[%s434 + $0x2c] sm:$0x1]
      %v1123 = vld [vmem:[%s434 + $0x30] sm:$0xf]
      %v1124 = vld [vmem:[%s434 + $0x34] sm:$0x1]
      %v1125 = vld [vmem:[%s434 + $0x38] sm:$0xf]
      %v1126 = vld [vmem:[%s434 + $0x3c] sm:$0x1]
      %v1128 = vshrl.u32 %v1111, 16
      %v1130 = vrot.slane %v1128, 4
      %v1131 = vshll.u32 %v1111, 16
      %v1133 = vrot.slane %v1131, 5
      %v1134 = vor.u32 %v1130, %v1133
      %v1135 = vrot.slane %v1134, 4
      %v1137 = vshll.u32 %v1112, 16
      %v1139 = vrot.slane %v1137, 5
      %v1140 = vsel %vm509, %v1135, %v1139
      %v1142 = vshrl.u32 %v1113, 16
      %v1144 = vrot.slane %v1142, 4
      %v1145 = vshll.u32 %v1113, 16
      %v1147 = vrot.slane %v1145, 5
      %v1148 = vor.u32 %v1144, %v1147
      %v1149 = vrot.slane %v1148, 4
      %v1151 = vshll.u32 %v1114, 16
      %v1153 = vrot.slane %v1151, 5
      %v1154 = vsel %vm509, %v1149, %v1153
      %v1156 = vshrl.u32 %v1115, 16
      %v1158 = vrot.slane %v1156, 4
      %v1159 = vshll.u32 %v1115, 16
      %v1161 = vrot.slane %v1159, 5
      %v1162 = vor.u32 %v1158, %v1161
      %v1163 = vrot.slane %v1162, 4
      %v1165 = vshll.u32 %v1116, 16
      %v1167 = vrot.slane %v1165, 5
      %v1168 = vsel %vm509, %v1163, %v1167
      %v1170 = vshrl.u32 %v1117, 16
      %v1172 = vrot.slane %v1170, 4
      %v1173 = vshll.u32 %v1117, 16
      %v1175 = vrot.slane %v1173, 5
      %v1176 = vor.u32 %v1172, %v1175
      %v1177 = vrot.slane %v1176, 4
      %v1179 = vshll.u32 %v1118, 16
      %v1181 = vrot.slane %v1179, 5
      %v1182 = vsel %vm509, %v1177, %v1181
      %v1184 = vshrl.u32 %v1119, 16
      %v1186 = vrot.slane %v1184, 4
      %v1187 = vshll.u32 %v1119, 16
      %v1189 = vrot.slane %v1187, 5
      %v1190 = vor.u32 %v1186, %v1189
      %v1191 = vrot.slane %v1190, 4
      %v1193 = vshll.u32 %v1120, 16
      %v1195 = vrot.slane %v1193, 5
      %v1196 = vsel %vm509, %v1191, %v1195
      %v1198 = vshrl.u32 %v1121, 16
      %v1200 = vrot.slane %v1198, 4
      %v1201 = vshll.u32 %v1121, 16
      %v1203 = vrot.slane %v1201, 5
      %v1204 = vor.u32 %v1200, %v1203
      %v1205 = vrot.slane %v1204, 4
      %v1207 = vshll.u32 %v1122, 16
      %v1209 = vrot.slane %v1207, 5
      %v1210 = vsel %vm509, %v1205, %v1209
      %v1212 = vshrl.u32 %v1123, 16
      %v1214 = vrot.slane %v1212, 4
      %v1215 = vshll.u32 %v1123, 16
      %v1217 = vrot.slane %v1215, 5
      %v1218 = vor.u32 %v1214, %v1217
      %v1219 = vrot.slane %v1218, 4
      %v1221 = vshll.u32 %v1124, 16
      %v1223 = vrot.slane %v1221, 5
      %v1224 = vsel %vm509, %v1219, %v1223
      %v1226 = vshrl.u32 %v1125, 16
      %v1228 = vrot.slane %v1226, 4
      %v1229 = vshll.u32 %v1125, 16
      %v1231 = vrot.slane %v1229, 5
      %v1232 = vor.u32 %v1228, %v1231
      %v1233 = vrot.slane %v1232, 4
      %v1235 = vshll.u32 %v1126, 16
      %v1237 = vrot.slane %v1235, 5
      %v1238 = vsel %vm509, %v1233, %v1237
      %s1239 = scalar_lea.vmem %s3, 32
      %v1240 = vld [vmem:[%s1239] sm:$0xf]
      %v1241 = vld [vmem:[%s1239 + $0x4] sm:$0xf]
      %v1242 = vunpack.c.l.b16 %v1140
      %v1243 = vunpack.c.l.b16 %v1154
      %v1244 = vunpack.c.l.b16 %v1168
      %v1245 = vunpack.c.l.b16 %v1182
      %v1246 = vunpack.c.l.b16 %v1196
      %v1247 = vunpack.c.l.b16 %v1210
      %v1248 = vunpack.c.l.b16 %v1224
      %v1249 = vunpack.c.l.b16 %v1238
      %v1250 = vpack.c.b16 %v1243, %v1242
      %v1251 = vpack.c.b16 %v1245, %v1244
      %v1252 = vpack.c.b16 %v1247, %v1246
      %v1253 = vpack.c.b16 %v1249, %v1248
      %v1256 = vunpack.c.l.b16 %v1240
      %v1257 = vunpack.c.l.b16 %v1241
      %v1258 = vpack.c.b16 %v1257, %v1256
      %v1261 = vsel %vm643, %v1250, 0
      %v1264 = vsel %vm643, %v1251, 0
      %v1267 = vsel %vm643, %v1252, 0
      %v1270 = vsel %vm643, %v1253, 0
      %1272 = vmatprep.subr.bf16.mxu0 0
      %1273 = vmatpush1.bf16.msra.mxu0 %v1258
      %1274 = vmatprep.subr.bf16.mxu0 0
      %1275 = vmatpush1.bf16.msra.mxu0 0
      %1276 = vmatprep.subr.bf16.mxu0 0
      %1277 = vmatpush1.bf16.msra.mxu0 0
      %1278 = vmatprep.subr.bf16.mxu0 0
      %1279 = vmatpush1.bf16.msra.mxu0 0
      %1280 = vmatprep.subr.bf16.mxu0 0
      %1281 = vmatpush1.bf16.msra.mxu0 0
      %1282 = vmatprep.subr.bf16.mxu0 0
      %1283 = vmatpush1.bf16.msra.mxu0 0
      %1284 = vmatprep.subr.bf16.mxu0 0
      %1285 = vmatpush1.bf16.msra.mxu0 0
      %1286 = vmatprep.subr.bf16.mxu0 0
      %1287 = vmatpush1.bf16.msra.mxu0 0
      %1288 = vmatprep.subr.bf16.mxu0 0
      %1289 = vmatpush1.bf16.msra.mxu0 0
      %1290 = vmatprep.subr.bf16.mxu0 0
      %1291 = vmatpush1.bf16.msra.mxu0 0
      %1292 = vmatprep.subr.bf16.mxu0 0
      %1293 = vmatpush1.bf16.msra.mxu0 0
      %1294 = vmatprep.subr.bf16.mxu0 0
      %1295 = vmatpush1.bf16.msra.mxu0 0
      %1296 = vmatprep.subr.bf16.mxu0 0
      %1297 = vmatpush1.bf16.msra.mxu0 0
      %1298 = vmatprep.subr.bf16.mxu0 0
      %1299 = vmatpush1.bf16.msra.mxu0 0
      %1300 = vmatprep.subr.bf16.mxu0 0
      %1301 = vmatpush1.bf16.msra.mxu0 0
      %1302 = vmatprep.subr.bf16.mxu0 0
      %1303 = vmatpush1.bf16.msra.mxu0 0
      %1304 = vmatprep.mubr.bf16.mxu0 0
      %1305 = vmatmul.mubr.bf16.gmra.mrb[0].mxu0 %v1261
      %v1306 = vpop.f32.mrb[0].mxu0
      %v1307 = vadd.f32 0.0, %v1306
      %v1308 = vpop.f32.mrb[0].mxu0
      %v1309 = vpop.f32.mrb[0].mxu0
      %v1310 = vadd.f32 0.0, %v1309
      %v1311 = vpop.f32.mrb[0].mxu0
      %1312 = vmatprep.mubr.bf16.mxu0 0
      %1313 = vmatmul.mubr.bf16.gmra.mrb[0].mxu0 %v1264
      %v1314 = vpop.f32.mrb[0].mxu0
      %v1315 = vadd.f32 0.0, %v1314
      %v1316 = vpop.f32.mrb[0].mxu0
      %v1317 = vpop.f32.mrb[0].mxu0
      %v1318 = vadd.f32 0.0, %v1317
      %v1319 = vpop.f32.mrb[0].mxu0
      %1320 = vmatprep.mubr.bf16.mxu0 0
      %1321 = vmatmul.mubr.bf16.gmra.mrb[0].mxu0 %v1267
      %v1322 = vpop.f32.mrb[0].mxu0
      %v1323 = vadd.f32 0.0, %v1322
      %v1324 = vpop.f32.mrb[0].mxu0
      %v1325 = vpop.f32.mrb[0].mxu0
      %v1326 = vadd.f32 0.0, %v1325
      %v1327 = vpop.f32.mrb[0].mxu0
      %1328 = vmatprep.mubr.bf16.mxu0 0
      %1329 = vmatmul.mubr.bf16.gmra.mrb[0].mxu0 %v1270
      %v1330 = vpop.f32.mrb[0].mxu0
      %v1331 = vadd.f32 0.0, %v1330
      %v1332 = vpop.f32.mrb[0].mxu0
      %v1333 = vpop.f32.mrb[0].mxu0
      %v1334 = vadd.f32 0.0, %v1333
      %v1335 = vpop.f32.mrb[0].mxu0
      %1336 = vdwg.mxu0
      %v1337 = vadd.f32 %v1103, %v1307
      %v1338 = vadd.f32 %v1104, %v1310
      %v1339 = vadd.f32 %v1105, %v1315
      %v1340 = vadd.f32 %v1106, %v1318
      %v1341 = vadd.f32 %v1107, %v1323
      %v1342 = vadd.f32 %v1108, %v1326
      %v1343 = vadd.f32 %v1109, %v1331
      %v1344 = vadd.f32 %v1110, %v1334
      %v1345 = vld [vmem:[%s434] sm:$0xe]
      %v1346 = vld [vmem:[%s434 + $0x8] sm:$0xe]
      %v1347 = vld [vmem:[%s434 + $0x10] sm:$0xe]
      %v1348 = vld [vmem:[%s434 + $0x18] sm:$0xe]
      %v1349 = vld [vmem:[%s434 + $0x20] sm:$0xe]
      %v1350 = vld [vmem:[%s434 + $0x28] sm:$0xe]
      %v1351 = vld [vmem:[%s434 + $0x30] sm:$0xe]
      %v1352 = vld [vmem:[%s434 + $0x38] sm:$0xe]
      %v1369 = vrot.slane %v1345, 5
      %v1370 = vrot.slane %v1369, 4
      %v1371 = vrot.slane %v1112, 5
      %v1372 = vsel %vm850, %v1370, %v1371
      %v1373 = vrot.slane %v1346, 5
      %v1374 = vrot.slane %v1373, 4
      %v1375 = vrot.slane %v1114, 5
      %v1376 = vsel %vm850, %v1374, %v1375
      %v1377 = vrot.slane %v1347, 5
      %v1378 = vrot.slane %v1377, 4
      %v1379 = vrot.slane %v1116, 5
      %v1380 = vsel %vm850, %v1378, %v1379
      %v1381 = vrot.slane %v1348, 5
      %v1382 = vrot.slane %v1381, 4
      %v1383 = vrot.slane %v1118, 5
      %v1384 = vsel %vm850, %v1382, %v1383
      %v1385 = vrot.slane %v1349, 5
      %v1386 = vrot.slane %v1385, 4
      %v1387 = vrot.slane %v1120, 5
      %v1388 = vsel %vm850, %v1386, %v1387
      %v1389 = vrot.slane %v1350, 5
      %v1390 = vrot.slane %v1389, 4
      %v1391 = vrot.slane %v1122, 5
      %v1392 = vsel %vm850, %v1390, %v1391
      %v1393 = vrot.slane %v1351, 5
      %v1394 = vrot.slane %v1393, 4
      %v1395 = vrot.slane %v1124, 5
      %v1396 = vsel %vm850, %v1394, %v1395
      %v1397 = vrot.slane %v1352, 5
      %v1398 = vrot.slane %v1397, 4
      %v1399 = vrot.slane %v1126, 5
      %v1400 = vsel %vm850, %v1398, %v1399
      %s1401 = scalar_lea.vmem %s3, 40
      %v1402 = vld [vmem:[%s1401] sm:$0xf]
      %v1403 = vld [vmem:[%s1401 + $0x4] sm:$0xf]
      %v1404 = vunpack.c.l.b16 %v1372
      %v1405 = vunpack.c.l.b16 %v1376
      %v1406 = vunpack.c.l.b16 %v1380
      %v1407 = vunpack.c.l.b16 %v1384
      %v1408 = vunpack.c.l.b16 %v1388
      %v1409 = vunpack.c.l.b16 %v1392
      %v1410 = vunpack.c.l.b16 %v1396
      %v1411 = vunpack.c.l.b16 %v1400
      %v1412 = vpack.c.b16 %v1405, %v1404
      %v1413 = vpack.c.b16 %v1407, %v1406
      %v1414 = vpack.c.b16 %v1409, %v1408
      %v1415 = vpack.c.b16 %v1411, %v1410
      %v1418 = vunpack.c.l.b16 %v1402
      %v1419 = vunpack.c.l.b16 %v1403
      %v1420 = vpack.c.b16 %v1419, %v1418
      %v1423 = vsel %vm643, %v1412, 0
      %v1426 = vsel %vm643, %v1413, 0
      %v1429 = vsel %vm643, %v1414, 0
      %v1432 = vsel %vm643, %v1415, 0
      %1434 = vmatprep.subr.bf16.mxu0 0
      %1435 = vmatpush1.bf16.msra.mxu0 %v1420
      %1436 = vmatprep.subr.bf16.mxu0 0
      %1437 = vmatpush1.bf16.msra.mxu0 0
      %1438 = vmatprep.subr.bf16.mxu0 0
      %1439 = vmatpush1.bf16.msra.mxu0 0
      %1440 = vmatprep.subr.bf16.mxu0 0
      %1441 = vmatpush1.bf16.msra.mxu0 0
      %1442 = vmatprep.subr.bf16.mxu0 0
      %1443 = vmatpush1.bf16.msra.mxu0 0
      %1444 = vmatprep.subr.bf16.mxu0 0
      %1445 = vmatpush1.bf16.msra.mxu0 0
      %1446 = vmatprep.subr.bf16.mxu0 0
      %1447 = vmatpush1.bf16.msra.mxu0 0
      %1448 = vmatprep.subr.bf16.mxu0 0
      %1449 = vmatpush1.bf16.msra.mxu0 0
      %1450 = vmatprep.subr.bf16.mxu0 0
      %1451 = vmatpush1.bf16.msra.mxu0 0
      %1452 = vmatprep.subr.bf16.mxu0 0
      %1453 = vmatpush1.bf16.msra.mxu0 0
      %1454 = vmatprep.subr.bf16.mxu0 0
      %1455 = vmatpush1.bf16.msra.mxu0 0
      %1456 = vmatprep.subr.bf16.mxu0 0
      %1457 = vmatpush1.bf16.msra.mxu0 0
      %1458 = vmatprep.subr.bf16.mxu0 0
      %1459 = vmatpush1.bf16.msra.mxu0 0
      %1460 = vmatprep.subr.bf16.mxu0 0
      %1461 = vmatpush1.bf16.msra.mxu0 0
      %1462 = vmatprep.subr.bf16.mxu0 0
      %1463 = vmatpush1.bf16.msra.mxu0 0
      %1464 = vmatprep.subr.bf16.mxu0 0
      %1465 = vmatpush1.bf16.msra.mxu0 0
      %1466 = vmatprep.mubr.bf16.mxu0 0
      %1467 = vmatmul.mubr.bf16.gmra.mrb[0].mxu0 %v1423
      %v1468 = vpop.f32.mrb[0].mxu0
      %v1469 = vadd.f32 0.0, %v1468
      %v1470 = vpop.f32.mrb[0].mxu0
      %v1471 = vpop.f32.mrb[0].mxu0
      %v1472 = vadd.f32 0.0, %v1471
      %v1473 = vpop.f32.mrb[0].mxu0
      %1474 = vmatprep.mubr.bf16.mxu0 0
      %1475 = vmatmul.mubr.bf16.gmra.mrb[0].mxu0 %v1426
      %v1476 = vpop.f32.mrb[0].mxu0
      %v1477 = vadd.f32 0.0, %v1476
      %v1478 = vpop.f32.mrb[0].mxu0
      %v1479 = vpop.f32.mrb[0].mxu0
      %v1480 = vadd.f32 0.0, %v1479
      %v1481 = vpop.f32.mrb[0].mxu0
      %1482 = vmatprep.mubr.bf16.mxu0 0
      %1483 = vmatmul.mubr.bf16.gmra.mrb[0].mxu0 %v1429
      %v1484 = vpop.f32.mrb[0].mxu0
      %v1485 = vadd.f32 0.0, %v1484
      %v1486 = vpop.f32.mrb[0].mxu0
      %v1487 = vpop.f32.mrb[0].mxu0
      %v1488 = vadd.f32 0.0, %v1487
      %v1489 = vpop.f32.mrb[0].mxu0
      %1490 = vmatprep.mubr.bf16.mxu0 0
      %1491 = vmatmul.mubr.bf16.gmra.mrb[0].mxu0 %v1432
      %v1492 = vpop.f32.mrb[0].mxu0
      %v1493 = vadd.f32 0.0, %v1492
      %v1494 = vpop.f32.mrb[0].mxu0
      %v1495 = vpop.f32.mrb[0].mxu0
      %v1496 = vadd.f32 0.0, %v1495
      %v1497 = vpop.f32.mrb[0].mxu0
      %1498 = vdwg.mxu0
      %v1499 = vadd.f32 %v1337, %v1469
      %v1500 = vadd.f32 %v1338, %v1472
      %v1501 = vadd.f32 %v1339, %v1477
      %v1502 = vadd.f32 %v1340, %v1480
      %v1503 = vadd.f32 %v1341, %v1485
      %v1504 = vadd.f32 %v1342, %v1488
      %v1505 = vadd.f32 %v1343, %v1493
      %v1506 = vadd.f32 %v1344, %v1496
      %s1507 = scalar_lea.vmem [#allocation2], 16
      %v1508 = vld [vmem:[%s1507] sm:$0xf]
      %v1509 = vld [vmem:[%s1507 + $0x8] sm:$0xf]
      %v1510 = vld [vmem:[%s1507 + $0x10] sm:$0xf]
      %v1511 = vld [vmem:[%s1507 + $0x18] sm:$0xf]
      %v1512 = vld [vmem:[%s1507 + $0x20] sm:$0xf]
      %v1513 = vld [vmem:[%s1507 + $0x28] sm:$0xf]
      %v1514 = vld [vmem:[%s1507 + $0x30] sm:$0xf]
      %v1515 = vld [vmem:[%s1507 + $0x38] sm:$0xf]
      %s1516 = scalar_lea.vmem %s3, 48
      %v1517 = vld [vmem:[%s1516] sm:$0xf]
      %v1518 = vld [vmem:[%s1516 + $0x4] sm:$0xf]
      %v1527 = vunpack.c.l.b16 %v1508
      %v1528 = vunpack.c.l.b16 %v1509
      %v1529 = vunpack.c.l.b16 %v1510
      %v1530 = vunpack.c.l.b16 %v1511
      %v1531 = vunpack.c.l.b16 %v1512
      %v1532 = vunpack.c.l.b16 %v1513
      %v1533 = vunpack.c.l.b16 %v1514
      %v1534 = vunpack.c.l.b16 %v1515
      %v1535 = vpack.c.b16 %v1528, %v1527
      %v1536 = vpack.c.b16 %v1530, %v1529
      %v1537 = vpack.c.b16 %v1532, %v1531
      %v1538 = vpack.c.b16 %v1534, %v1533
      %v1541 = vunpack.c.l.b16 %v1517
      %v1542 = vunpack.c.l.b16 %v1518
      %v1543 = vpack.c.b16 %v1542, %v1541
      %v1546 = vsel %vm643, %v1535, 0
      %v1549 = vsel %vm643, %v1536, 0
      %v1552 = vsel %vm643, %v1537, 0
      %v1555 = vsel %vm643, %v1538, 0
      %1557 = vmatprep.subr.bf16.mxu0 0
      %1558 = vmatpush1.bf16.msra.mxu0 %v1543
      %1559 = vmatprep.subr.bf16.mxu0 0
      %1560 = vmatpush1.bf16.msra.mxu0 0
      %1561 = vmatprep.subr.bf16.mxu0 0
      %1562 = vmatpush1.bf16.msra.mxu0 0
      %1563 = vmatprep.subr.bf16.mxu0 0
      %1564 = vmatpush1.bf16.msra.mxu0 0
      %1565 = vmatprep.subr.bf16.mxu0 0
      %1566 = vmatpush1.bf16.msra.mxu0 0
      %1567 = vmatprep.subr.bf16.mxu0 0
      %1568 = vmatpush1.bf16.msra.mxu0 0
      %1569 = vmatprep.subr.bf16.mxu0 0
      %1570 = vmatpush1.bf16.msra.mxu0 0
      %1571 = vmatprep.subr.bf16.mxu0 0
      %1572 = vmatpush1.bf16.msra.mxu0 0
      %1573 = vmatprep.subr.bf16.mxu0 0
      %1574 = vmatpush1.bf16.msra.mxu0 0
      %1575 = vmatprep.subr.bf16.mxu0 0
      %1576 = vmatpush1.bf16.msra.mxu0 0
      %1577 = vmatprep.subr.bf16.mxu0 0
      %1578 = vmatpush1.bf16.msra.mxu0 0
      %1579 = vmatprep.subr.bf16.mxu0 0
      %1580 = vmatpush1.bf16.msra.mxu0 0
      %1581 = vmatprep.subr.bf16.mxu0 0
      %1582 = vmatpush1.bf16.msra.mxu0 0
      %1583 = vmatprep.subr.bf16.mxu0 0
      %1584 = vmatpush1.bf16.msra.mxu0 0
      %1585 = vmatprep.subr.bf16.mxu0 0
      %1586 = vmatpush1.bf16.msra.mxu0 0
      %1587 = vmatprep.subr.bf16.mxu0 0
      %1588 = vmatpush1.bf16.msra.mxu0 0
      %1589 = vmatprep.mubr.bf16.mxu0 0
      %1590 = vmatmul.mubr.bf16.gmra.mrb[0].mxu0 %v1546
      %v1591 = vpop.f32.mrb[0].mxu0
      %v1592 = vadd.f32 0.0, %v1591
      %v1593 = vpop.f32.mrb[0].mxu0
      %v1594 = vpop.f32.mrb[0].mxu0
      %v1595 = vadd.f32 0.0, %v1594
      %v1596 = vpop.f32.mrb[0].mxu0
      %1597 = vmatprep.mubr.bf16.mxu0 0
      %1598 = vmatmul.mubr.bf16.gmra.mrb[0].mxu0 %v1549
      %v1599 = vpop.f32.mrb[0].mxu0
      %v1600 = vadd.f32 0.0, %v1599
      %v1601 = vpop.f32.mrb[0].mxu0
      %v1602 = vpop.f32.mrb[0].mxu0
      %v1603 = vadd.f32 0.0, %v1602
      %v1604 = vpop.f32.mrb[0].mxu0
      %1605 = vmatprep.mubr.bf16.mxu0 0
      %1606 = vmatmul.mubr.bf16.gmra.mrb[0].mxu0 %v1552
      %v1607 = vpop.f32.mrb[0].mxu0
      %v1608 = vadd.f32 0.0, %v1607
      %v1609 = vpop.f32.mrb[0].mxu0
      %v1610 = vpop.f32.mrb[0].mxu0
      %v1611 = vadd.f32 0.0, %v1610
      %v1612 = vpop.f32.mrb[0].mxu0
      %1613 = vmatprep.mubr.bf16.mxu0 0
      %1614 = vmatmul.mubr.bf16.gmra.mrb[0].mxu0 %v1555
      %v1615 = vpop.f32.mrb[0].mxu0
      %v1616 = vadd.f32 0.0, %v1615
      %v1617 = vpop.f32.mrb[0].mxu0
      %v1618 = vpop.f32.mrb[0].mxu0
      %v1619 = vadd.f32 0.0, %v1618
      %v1620 = vpop.f32.mrb[0].mxu0
      %1621 = vdwg.mxu0
      %v1622 = vadd.f32 %v1499, %v1592
      %v1623 = vadd.f32 %v1500, %v1595
      %v1624 = vadd.f32 %v1501, %v1600
      %v1625 = vadd.f32 %v1502, %v1603
      %v1626 = vadd.f32 %v1503, %v1608
      %v1627 = vadd.f32 %v1504, %v1611
      %v1628 = vadd.f32 %v1505, %v1616
      %v1629 = vadd.f32 %v1506, %v1619
      %v1630 = vld [vmem:[%s1507] sm:$0xf]
      %v1631 = vld [vmem:[%s1507 + $0x4] sm:$0x1]
      %v1632 = vld [vmem:[%s1507 + $0x8] sm:$0xf]
      %v1633 = vld [vmem:[%s1507 + $0xc] sm:$0x1]
      %v1634 = vld [vmem:[%s1507 + $0x10] sm:$0xf]
      %v1635 = vld [vmem:[%s1507 + $0x14] sm:$0x1]
      %v1636 = vld [vmem:[%s1507 + $0x18] sm:$0xf]
      %v1637 = vld [vmem:[%s1507 + $0x1c] sm:$0x1]
      %v1638 = vld [vmem:[%s1507 + $0x20] sm:$0xf]
      %v1639 = vld [vmem:[%s1507 + $0x24] sm:$0x1]
      %v1640 = vld [vmem:[%s1507 + $0x28] sm:$0xf]
      %v1641 = vld [vmem:[%s1507 + $0x2c] sm:$0x1]
      %v1642 = vld [vmem:[%s1507 + $0x30] sm:$0xf]
      %v1643 = vld [vmem:[%s1507 + $0x34] sm:$0x1]
      %v1644 = vld [vmem:[%s1507 + $0x38] sm:$0xf]
      %v1645 = vld [vmem:[%s1507 + $0x3c] sm:$0x1]
      %v1647 = vshrl.u32 %v1630, 16
      %v1649 = vrot.slane %v1647, 4
      %v1650 = vshll.u32 %v1630, 16
      %v1652 = vrot.slane %v1650, 5
      %v1653 = vor.u32 %v1649, %v1652
      %v1654 = vrot.slane %v1653, 4
      %v1656 = vshll.u32 %v1631, 16
      %v1658 = vrot.slane %v1656, 5
      %v1659 = vsel %vm509, %v1654, %v1658
      %v1661 = vshrl.u32 %v1632, 16
      %v1663 = vrot.slane %v1661, 4
      %v1664 = vshll.u32 %v1632, 16
      %v1666 = vrot.slane %v1664, 5
      %v1667 = vor.u32 %v1663, %v1666
      %v1668 = vrot.slane %v1667, 4
      %v1670 = vshll.u32 %v1633, 16
      %v1672 = vrot.slane %v1670, 5
      %v1673 = vsel %vm509, %v1668, %v1672
      %v1675 = vshrl.u32 %v1634, 16
      %v1677 = vrot.slane %v1675, 4
      %v1678 = vshll.u32 %v1634, 16
      %v1680 = vrot.slane %v1678, 5
      %v1681 = vor.u32 %v1677, %v1680
      %v1682 = vrot.slane %v1681, 4
      %v1684 = vshll.u32 %v1635, 16
      %v1686 = vrot.slane %v1684, 5
      %v1687 = vsel %vm509, %v1682, %v1686
      %v1689 = vshrl.u32 %v1636, 16
      %v1691 = vrot.slane %v1689, 4
      %v1692 = vshll.u32 %v1636, 16
      %v1694 = vrot.slane %v1692, 5
      %v1695 = vor.u32 %v1691, %v1694
      %v1696 = vrot.slane %v1695, 4
      %v1698 = vshll.u32 %v1637, 16
      %v1700 = vrot.slane %v1698, 5
      %v1701 = vsel %vm509, %v1696, %v1700
      %v1703 = vshrl.u32 %v1638, 16
      %v1705 = vrot.slane %v1703, 4
      %v1706 = vshll.u32 %v1638, 16
      %v1708 = vrot.slane %v1706, 5
      %v1709 = vor.u32 %v1705, %v1708
      %v1710 = vrot.slane %v1709, 4
      %v1712 = vshll.u32 %v1639, 16
      %v1714 = vrot.slane %v1712, 5
      %v1715 = vsel %vm509, %v1710, %v1714
      %v1717 = vshrl.u32 %v1640, 16
      %v1719 = vrot.slane %v1717, 4
      %v1720 = vshll.u32 %v1640, 16
      %v1722 = vrot.slane %v1720, 5
      %v1723 = vor.u32 %v1719, %v1722
      %v1724 = vrot.slane %v1723, 4
      %v1726 = vshll.u32 %v1641, 16
      %v1728 = vrot.slane %v1726, 5
      %v1729 = vsel %vm509, %v1724, %v1728
      %v1731 = vshrl.u32 %v1642, 16
      %v1733 = vrot.slane %v1731, 4
      %v1734 = vshll.u32 %v1642, 16
      %v1736 = vrot.slane %v1734, 5
      %v1737 = vor.u32 %v1733, %v1736
      %v1738 = vrot.slane %v1737, 4
      %v1740 = vshll.u32 %v1643, 16
      %v1742 = vrot.slane %v1740, 5
      %v1743 = vsel %vm509, %v1738, %v1742
      %v1745 = vshrl.u32 %v1644, 16
      %v1747 = vrot.slane %v1745, 4
      %v1748 = vshll.u32 %v1644, 16
      %v1750 = vrot.slane %v1748, 5
      %v1751 = vor.u32 %v1747, %v1750
      %v1752 = vrot.slane %v1751, 4
      %v1754 = vshll.u32 %v1645, 16
      %v1756 = vrot.slane %v1754, 5
      %v1757 = vsel %vm509, %v1752, %v1756
      %s1758 = scalar_lea.vmem %s3, 56
      %v1759 = vld [vmem:[%s1758] sm:$0xf]
      %v1760 = vld [vmem:[%s1758 + $0x4] sm:$0xf]
      %v1761 = vunpack.c.l.b16 %v1659
      %v1762 = vunpack.c.l.b16 %v1673
      %v1763 = vunpack.c.l.b16 %v1687
      %v1764 = vunpack.c.l.b16 %v1701
      %v1765 = vunpack.c.l.b16 %v1715
      %v1766 = vunpack.c.l.b16 %v1729
      %v1767 = vunpack.c.l.b16 %v1743
      %v1768 = vunpack.c.l.b16 %v1757
      %v1769 = vpack.c.b16 %v1762, %v1761
      %v1770 = vpack.c.b16 %v1764, %v1763
      %v1771 = vpack.c.b16 %v1766, %v1765
      %v1772 = vpack.c.b16 %v1768, %v1767
      %v1775 = vunpack.c.l.b16 %v1759
      %v1776 = vunpack.c.l.b16 %v1760
      %v1777 = vpack.c.b16 %v1776, %v1775
      %v1780 = vsel %vm643, %v1769, 0
      %v1783 = vsel %vm643, %v1770, 0
      %v1786 = vsel %vm643, %v1771, 0
      %v1789 = vsel %vm643, %v1772, 0
      %1791 = vmatprep.subr.bf16.mxu0 0
      %1792 = vmatpush1.bf16.msra.mxu0 %v1777
      %1793 = vmatprep.subr.bf16.mxu0 0
      %1794 = vmatpush1.bf16.msra.mxu0 0
      %1795 = vmatprep.subr.bf16.mxu0 0
      %1796 = vmatpush1.bf16.msra.mxu0 0
      %1797 = vmatprep.subr.bf16.mxu0 0
      %1798 = vmatpush1.bf16.msra.mxu0 0
      %1799 = vmatprep.subr.bf16.mxu0 0
      %1800 = vmatpush1.bf16.msra.mxu0 0
      %1801 = vmatprep.subr.bf16.mxu0 0
      %1802 = vmatpush1.bf16.msra.mxu0 0
      %1803 = vmatprep.subr.bf16.mxu0 0
      %1804 = vmatpush1.bf16.msra.mxu0 0
      %1805 = vmatprep.subr.bf16.mxu0 0
      %1806 = vmatpush1.bf16.msra.mxu0 0
      %1807 = vmatprep.subr.bf16.mxu0 0
      %1808 = vmatpush1.bf16.msra.mxu0 0
      %1809 = vmatprep.subr.bf16.mxu0 0
      %1810 = vmatpush1.bf16.msra.mxu0 0
      %1811 = vmatprep.subr.bf16.mxu0 0
      %1812 = vmatpush1.bf16.msra.mxu0 0
      %1813 = vmatprep.subr.bf16.mxu0 0
      %1814 = vmatpush1.bf16.msra.mxu0 0
      %1815 = vmatprep.subr.bf16.mxu0 0
      %1816 = vmatpush1.bf16.msra.mxu0 0
      %1817 = vmatprep.subr.bf16.mxu0 0
      %1818 = vmatpush1.bf16.msra.mxu0 0
      %1819 = vmatprep.subr.bf16.mxu0 0
      %1820 = vmatpush1.bf16.msra.mxu0 0
      %1821 = vmatprep.subr.bf16.mxu0 0
      %1822 = vmatpush1.bf16.msra.mxu0 0
      %1823 = vmatprep.mubr.bf16.mxu0 0
      %1824 = vmatmul.mubr.bf16.gmra.mrb[0].mxu0 %v1780
      %v1825 = vpop.f32.mrb[0].mxu0
      %v1826 = vadd.f32 0.0, %v1825
      %v1827 = vpop.f32.mrb[0].mxu0
      %v1828 = vpop.f32.mrb[0].mxu0
      %v1829 = vadd.f32 0.0, %v1828
      %v1830 = vpop.f32.mrb[0].mxu0
      %1831 = vmatprep.mubr.bf16.mxu0 0
      %1832 = vmatmul.mubr.bf16.gmra.mrb[0].mxu0 %v1783
      %v1833 = vpop.f32.mrb[0].mxu0
      %v1834 = vadd.f32 0.0, %v1833
      %v1835 = vpop.f32.mrb[0].mxu0
      %v1836 = vpop.f32.mrb[0].mxu0
      %v1837 = vadd.f32 0.0, %v1836
      %v1838 = vpop.f32.mrb[0].mxu0
      %1839 = vmatprep.mubr.bf16.mxu0 0
      %1840 = vmatmul.mubr.bf16.gmra.mrb[0].mxu0 %v1786
      %v1841 = vpop.f32.mrb[0].mxu0
      %v1842 = vadd.f32 0.0, %v1841
      %v1843 = vpop.f32.mrb[0].mxu0
      %v1844 = vpop.f32.mrb[0].mxu0
      %v1845 = vadd.f32 0.0, %v1844
      %v1846 = vpop.f32.mrb[0].mxu0
      %1847 = vmatprep.mubr.bf16.mxu0 0
      %1848 = vmatmul.mubr.bf16.gmra.mrb[0].mxu0 %v1789
      %v1849 = vpop.f32.mrb[0].mxu0
      %v1850 = vadd.f32 0.0, %v1849
      %v1851 = vpop.f32.mrb[0].mxu0
      %v1852 = vpop.f32.mrb[0].mxu0
      %v1853 = vadd.f32 0.0, %v1852
      %v1854 = vpop.f32.mrb[0].mxu0
      %1855 = vdwg.mxu0
      %v1856 = vadd.f32 %v1622, %v1826
      %v1857 = vadd.f32 %v1623, %v1829
      %v1858 = vadd.f32 %v1624, %v1834
      %v1859 = vadd.f32 %v1625, %v1837
      %v1860 = vadd.f32 %v1626, %v1842
      %v1861 = vadd.f32 %v1627, %v1845
      %v1862 = vadd.f32 %v1628, %v1850
      %v1863 = vadd.f32 %v1629, %v1853
      %v1864 = vld [vmem:[%s1507] sm:$0xe]
      %v1865 = vld [vmem:[%s1507 + $0x8] sm:$0xe]
      %v1866 = vld [vmem:[%s1507 + $0x10] sm:$0xe]
      %v1867 = vld [vmem:[%s1507 + $0x18] sm:$0xe]
      %v1868 = vld [vmem:[%s1507 + $0x20] sm:$0xe]
      %v1869 = vld [vmem:[%s1507 + $0x28] sm:$0xe]
      %v1870 = vld [vmem:[%s1507 + $0x30] sm:$0xe]
      %v1871 = vld [vmem:[%s1507 + $0x38] sm:$0xe]
      %v1888 = vrot.slane %v1864, 5
      %v1889 = vrot.slane %v1888, 4
      %v1890 = vrot.slane %v1631, 5
      %v1891 = vsel %vm850, %v1889, %v1890
      %v1892 = vrot.slane %v1865, 5
      %v1893 = vrot.slane %v1892, 4
      %v1894 = vrot.slane %v1633, 5
      %v1895 = vsel %vm850, %v1893, %v1894
      %v1896 = vrot.slane %v1866, 5
      %v1897 = vrot.slane %v1896, 4
      %v1898 = vrot.slane %v1635, 5
      %v1899 = vsel %vm850, %v1897, %v1898
      %v1900 = vrot.slane %v1867, 5
      %v1901 = vrot.slane %v1900, 4
      %v1902 = vrot.slane %v1637, 5
      %v1903 = vsel %vm850, %v1901, %v1902
      %v1904 = vrot.slane %v1868, 5
      %v1905 = vrot.slane %v1904, 4
      %v1906 = vrot.slane %v1639, 5
      %v1907 = vsel %vm850, %v1905, %v1906
      %v1908 = vrot.slane %v1869, 5
      %v1909 = vrot.slane %v1908, 4
      %v1910 = vrot.slane %v1641, 5
      %v1911 = vsel %vm850, %v1909, %v1910
      %v1912 = vrot.slane %v1870, 5
      %v1913 = vrot.slane %v1912, 4
      %v1914 = vrot.slane %v1643, 5
      %v1915 = vsel %vm850, %v1913, %v1914
      %v1916 = vrot.slane %v1871, 5
      %v1917 = vrot.slane %v1916, 4
      %v1918 = vrot.slane %v1645, 5
      %v1919 = vsel %vm850, %v1917, %v1918
      %s1920 = scalar_lea.vmem %s3, 64
      %v1921 = vld [vmem:[%s1920] sm:$0xf]
      %v1922 = vld [vmem:[%s1920 + $0x4] sm:$0xf]
      %v1923 = vunpack.c.l.b16 %v1891
      %v1924 = vunpack.c.l.b16 %v1895
      %v1925 = vunpack.c.l.b16 %v1899
      %v1926 = vunpack.c.l.b16 %v1903
      %v1927 = vunpack.c.l.b16 %v1907
      %v1928 = vunpack.c.l.b16 %v1911
      %v1929 = vunpack.c.l.b16 %v1915
      %v1930 = vunpack.c.l.b16 %v1919
      %v1931 = vpack.c.b16 %v1924, %v1923
      %v1932 = vpack.c.b16 %v1926, %v1925
      %v1933 = vpack.c.b16 %v1928, %v1927
      %v1934 = vpack.c.b16 %v1930, %v1929
      %v1937 = vunpack.c.l.b16 %v1921
      %v1938 = vunpack.c.l.b16 %v1922
      %v1939 = vpack.c.b16 %v1938, %v1937
      %v1942 = vsel %vm643, %v1931, 0
      %v1945 = vsel %vm643, %v1932, 0
      %v1948 = vsel %vm643, %v1933, 0
      %v1951 = vsel %vm643, %v1934, 0
      %1953 = vmatprep.subr.bf16.mxu0 0
      %1954 = vmatpush1.bf16.msra.mxu0 %v1939
      %1955 = vmatprep.subr.bf16.mxu0 0
      %1956 = vmatpush1.bf16.msra.mxu0 0
      %1957 = vmatprep.subr.bf16.mxu0 0
      %1958 = vmatpush1.bf16.msra.mxu0 0
      %1959 = vmatprep.subr.bf16.mxu0 0
      %1960 = vmatpush1.bf16.msra.mxu0 0
      %1961 = vmatprep.subr.bf16.mxu0 0
      %1962 = vmatpush1.bf16.msra.mxu0 0
      %1963 = vmatprep.subr.bf16.mxu0 0
      %1964 = vmatpush1.bf16.msra.mxu0 0
      %1965 = vmatprep.subr.bf16.mxu0 0
      %1966 = vmatpush1.bf16.msra.mxu0 0
      %1967 = vmatprep.subr.bf16.mxu0 0
      %1968 = vmatpush1.bf16.msra.mxu0 0
      %1969 = vmatprep.subr.bf16.mxu0 0
      %1970 = vmatpush1.bf16.msra.mxu0 0
      %1971 = vmatprep.subr.bf16.mxu0 0
      %1972 = vmatpush1.bf16.msra.mxu0 0
      %1973 = vmatprep.subr.bf16.mxu0 0
      %1974 = vmatpush1.bf16.msra.mxu0 0
      %1975 = vmatprep.subr.bf16.mxu0 0
      %1976 = vmatpush1.bf16.msra.mxu0 0
      %1977 = vmatprep.subr.bf16.mxu0 0
      %1978 = vmatpush1.bf16.msra.mxu0 0
      %1979 = vmatprep.subr.bf16.mxu0 0
      %1980 = vmatpush1.bf16.msra.mxu0 0
      %1981 = vmatprep.subr.bf16.mxu0 0
      %1982 = vmatpush1.bf16.msra.mxu0 0
      %1983 = vmatprep.subr.bf16.mxu0 0
      %1984 = vmatpush1.bf16.msra.mxu0 0
      %1985 = vmatprep.mubr.bf16.mxu0 0
      %1986 = vmatmul.mubr.bf16.gmra.mrb[0].mxu0 %v1942
      %v1987 = vpop.f32.mrb[0].mxu0
      %v1988 = vadd.f32 0.0, %v1987
      %v1989 = vpop.f32.mrb[0].mxu0
      %v1990 = vpop.f32.mrb[0].mxu0
      %v1991 = vadd.f32 0.0, %v1990
      %v1992 = vpop.f32.mrb[0].mxu0
      %1993 = vmatprep.mubr.bf16.mxu0 0
      %1994 = vmatmul.mubr.bf16.gmra.mrb[0].mxu0 %v1945
      %v1995 = vpop.f32.mrb[0].mxu0
      %v1996 = vadd.f32 0.0, %v1995
      %v1997 = vpop.f32.mrb[0].mxu0
      %v1998 = vpop.f32.mrb[0].mxu0
      %v1999 = vadd.f32 0.0, %v1998
      %v2000 = vpop.f32.mrb[0].mxu0
      %2001 = vmatprep.mubr.bf16.mxu0 0
      %2002 = vmatmul.mubr.bf16.gmra.mrb[0].mxu0 %v1948
      %v2003 = vpop.f32.mrb[0].mxu0
      %v2004 = vadd.f32 0.0, %v2003
      %v2005 = vpop.f32.mrb[0].mxu0
      %v2006 = vpop.f32.mrb[0].mxu0
      %v2007 = vadd.f32 0.0, %v2006
      %v2008 = vpop.f32.mrb[0].mxu0
      %2009 = vmatprep.mubr.bf16.mxu0 0
      %2010 = vmatmul.mubr.bf16.gmra.mrb[0].mxu0 %v1951
      %v2011 = vpop.f32.mrb[0].mxu0
      %v2012 = vadd.f32 0.0, %v2011
      %v2013 = vpop.f32.mrb[0].mxu0
      %v2014 = vpop.f32.mrb[0].mxu0
      %v2015 = vadd.f32 0.0, %v2014
      %v2016 = vpop.f32.mrb[0].mxu0
      %2017 = vdwg.mxu0
      %v2018 = vadd.f32 %v1856, %v1988
      %v2019 = vadd.f32 %v1857, %v1991
      %v2020 = vadd.f32 %v1858, %v1996
      %v2021 = vadd.f32 %v1859, %v1999
      %v2022 = vadd.f32 %v1860, %v2004
      %v2023 = vadd.f32 %v1861, %v2007
      %v2024 = vadd.f32 %v1862, %v2012
      %v2025 = vadd.f32 %v1863, %v2015
      %v2026 = vpack.c.bf16 %v2019, %v2018
      %v2027 = vpack.c.bf16 %v2021, %v2020
      %v2028 = vpack.c.bf16 %v2023, %v2022
      %v2029 = vpack.c.bf16 %v2025, %v2024
      %v2034 = vunpack.c.l.b16 %v2026
      %v2035 = vunpack.c.h.b16 %v2026
      %v2036 = vunpack.c.l.b16 %v2027
      %v2037 = vunpack.c.h.b16 %v2027
      %v2038 = vunpack.c.l.b16 %v2028
      %v2039 = vunpack.c.h.b16 %v2028
      %v2040 = vunpack.c.l.b16 %v2029
      %v2041 = vunpack.c.h.b16 %v2029
      %v2042 = vpack.c.b16 %v2034, %v2034
      %v2043 = vpack.c.b16 %v2035, %v2035
      %v2044 = vpack.c.b16 %v2036, %v2036
      %v2045 = vpack.c.b16 %v2037, %v2037
      %v2046 = vpack.c.b16 %v2038, %v2038
      %v2047 = vpack.c.b16 %v2039, %v2039
      %v2048 = vpack.c.b16 %v2040, %v2040
      %v2049 = vpack.c.b16 %v2041, %v2041
      %2058 = vst [vmem:[%s246] sm:$0xf] %v2042
      %2059 = vst [vmem:[%s246 + $0x4] sm:$0xf] %v2043
      %2060 = vst [vmem:[%s246 + $0x8] sm:$0xf] %v2044
      %2061 = vst [vmem:[%s246 + $0xc] sm:$0xf] %v2045
      %2062 = vst [vmem:[%s246 + $0x10] sm:$0xf] %v2046
      %2063 = vst [vmem:[%s246 + $0x14] sm:$0xf] %v2047
      %2064 = vst [vmem:[%s246 + $0x18] sm:$0xf] %v2048
      %2065 = vst [vmem:[%s246 + $0x1c] sm:$0xf] %v2049
      %v2066 = vld [vmem:[%s5] sm:$0x1]
      %v2067 = vadd.f32 %v2018, %v2019
      %v2068 = vadd.f32 %v2067, %v2020
      %v2069 = vadd.f32 %v2068, %v2021
      %v2070 = vadd.f32 %v2069, %v2022
      %v2071 = vadd.f32 %v2070, %v2023
      %v2072 = vadd.f32 %v2071, %v2024
      %v2073 = vadd.f32 %v2072, %v2025
      %v2074 = vrot.slane %v2073, 4
      %v2075 = vadd.f32 %v2073, %v2074
      %v2076 = vrot.slane %v2075, 2
      %v2077 = vadd.f32 %v2075, %v2076
      %v2078 = vrot.slane %v2077, 1
      %v2079 = vadd.f32 %v2077, %v2078
      %v2080 = vadd.f32 %v2066, %v2079
      %2081 = vst [vmem:[%s5] sm:$0x1] %v2080
      %v2082 = vld [vmem:[%s6] sm:$0x1]
      %v2083 = vmul.f32 %v2018, %v2018
      %v2084 = vmul.f32 %v2019, %v2019
      %v2085 = vmul.f32 %v2020, %v2020
      %v2086 = vmul.f32 %v2021, %v2021
      %v2087 = vmul.f32 %v2022, %v2022
      %v2088 = vmul.f32 %v2023, %v2023
      %v2089 = vmul.f32 %v2024, %v2024
      %v2090 = vmul.f32 %v2025, %v2025
      %v2091 = vadd.f32 %v2083, %v2084
      %v2092 = vadd.f32 %v2091, %v2085
      %v2093 = vadd.f32 %v2092, %v2086
      %v2094 = vadd.f32 %v2093, %v2087
      %v2095 = vadd.f32 %v2094, %v2088
      %v2096 = vadd.f32 %v2095, %v2089
      %v2097 = vadd.f32 %v2096, %v2090
      %v2098 = vrot.slane %v2097, 4
      %v2099 = vadd.f32 %v2097, %v2098
      %v2100 = vrot.slane %v2099, 2
      %v2101 = vadd.f32 %v2099, %v2100
      %v2102 = vrot.slane %v2101, 1
      %v2103 = vadd.f32 %v2101, %v2102
      %v2104 = vadd.f32 %v2082, %v2103
      %2105 = vst [vmem:[%s6] sm:$0x1] %v2104
      %p2106 = scmp.lt.s32.totalorder %s18, 1
      %s2107 = scalar_select %p2106, %s18, 1
      %s2108 = smul.addr %s2107, 8
      %s2109 = smul.addr %s2108, 4
      %s2110 = scalar_lea.vmem %s4, %s2109
      // Predicated region
      $region41: #{basic_block_forward.4} parent=35 // pred_check
        %p2111 = pneg %p125
      $region42: #{basic_block_forward.4} parent=35 // pred_check_branch
        %2113 = sbr.rel (%p2111) target = $region44
      $region43: #{basic_block_forward.4} parent=35 // pred_region
        _
      $region44: #{basic_block_forward.4} parent=35 // pred_fallthru
        _
      // Predicated region
      $region45: #{basic_block_forward.4} parent=35 // pred_check
        %p2114 = pneg %p146
      $region46: #{basic_block_forward.4} parent=35 // pred_check_branch
        %2116 = sbr.rel (%p2114) target = $region48
      $region47: #{basic_block_forward.4} parent=35 // pred_region
        _
      $region48: #{basic_block_forward.4} parent=35 // pred_fallthru
        _
      // Predicated region
      $region49: #{basic_block_forward.4} parent=35 // pred_check
        %p2117 = pneg %p167
      $region50: #{basic_block_forward.4} parent=35 // pred_check_branch
        %2119 = sbr.rel (%p2117) target = $region52
      $region51: #{basic_block_forward.4} parent=35 // pred_region
        _
      $region52: #{basic_block_forward.4} parent=35 // pred_fallthru
        _
      // Predicated region
      $region53: #{basic_block_forward.4} parent=35 // pred_check
        %p2120 = pneg %p146
      $region54: #{basic_block_forward.4} parent=35 // pred_check_branch
        %2122 = sbr.rel (%p2120) target = $region56
      $region55: #{basic_block_forward.4} parent=35 // pred_region
        _
      $region56: #{basic_block_forward.4} parent=35 // pred_fallthru
        _
      // Predicated region
      $region57: #{basic_block_forward.4} parent=35 // pred_check
        %p2123 = pneg %p167
      $region58: #{basic_block_forward.4} parent=35 // pred_check_branch
        %2125 = sbr.rel (%p2123) target = $region60
      $region59: #{basic_block_forward.4} parent=35 // pred_region
        _
      $region60: #{basic_block_forward.4} parent=35 // pred_fallthru
        _
    $region36: #{basic_block_forward.4} parent=5 // pred_fallthru
      _
    %p2126 = scmp.le.s32.totalorder 2, %s13
    // Predicated region
    $region61: #{basic_block_forward.4} parent=5 // pred_check
      %p2127 = pneg %p2126
    $region62: #{basic_block_forward.4} parent=5 // pred_check_branch
      %2129 = sbr.rel (%p2127) target = $region64
    $region63: #{basic_block_forward.4} parent=5 // pred_region
      %s2130 = ssub.s32 %s13, 2
      // Predicated region
      $region65: #{basic_block_forward.4} parent=63 // pred_check
        %p2131 = pneg %p131
      $region66: #{basic_block_forward.4} parent=63 // pred_check_branch
        %2133 = sbr.rel (%p2131) target = $region68
      $region67: #{basic_block_forward.4} parent=63 // pred_region
        %p2134 = scmp.lt.s32.totalorder %s19, 1
        %s2135 = scalar_select %p2134, %s19, 1
        %s2136 = smul.addr %s2135, 8
        %s2137 = smul.addr %s2136, 4
        %s2138 = scalar_lea.vmem %s4, %s2137
      $region68: #{basic_block_forward.4} parent=63 // pred_fallthru
        _
    $region64: #{basic_block_forward.4} parent=5 // pred_fallthru
      _
  $region6: #{basic_block_forward.4} parent=0 // loop_footer
    %s17 = sadd.s32 1, %s13
  $region7: #{basic_block_forward.4} parent=0 // loop_footer_branch
    %12 = sbr.rel target = $region3
  $region8: #{basic_block_forward.4} parent=0 // loop_exit
    _

</llo_original>
